<compile_context>
chip_gen: v7x
topology: tpu7x:2x2x1
jax: 0.10.0
libtpu: 0.0.40
codegen_flags: <defaults>
</compile_context>

<pallas_src>
import math
import jax
import jax.numpy as jnp
from jax import lax
from jax.experimental import pallas as pl
from jax.experimental.pallas import tpu as pltpu

# ---- model constants (match the PyTorch module) ----
BLOCK = 64                                   # context length (T)
EMBEDIMS = 120                               # n_embed (E)
EPSILON = 1e-12
FFWD_HIDDEN = 4
HEAD_NUMBER = 6
SINGLE_HEAD_SIZE = EMBEDIMS // HEAD_NUMBER   # 20
FFWD = FFWD_HIDDEN * EMBEDIMS                # 480

# ---- padded, lane-dense dims (multiples of 128 lanes) ----
EP = 128                                     # 120 -> 128
FFP = 512                                    # 480 -> 512
QKVP = 3 * EP                                # 384

MXU_DTYPE = jnp.bfloat16                     # MXU operands; all softmax/LN/GELU math is f32
NEG_BIG = jnp.float32(-1e30)


def _layernorm(x, g, b, lane_mask):
    """LayerNorm over the 120 real lanes of a 128-lane-padded tensor.

    Input pad lanes are exactly zero, so sum/120 gives the true mean; the pad
    lanes of (x - mu) are masked before the variance.  gamma/beta pad lanes are
    zero, so the output pad lanes stay zero."""
    inv_n = jnp.float32(1.0 / EMBEDIMS)
    mu = jnp.sum(x, axis=-1, keepdims=True) * inv_n
    xc = (x - mu) * lane_mask
    var = jnp.sum(xc * xc, axis=-1, keepdims=True) * inv_n
    return xc * lax.rsqrt(var + EPSILON) * g + b


def _gelu_tanh(x):
    c = math.sqrt(2.0 / math.pi)
    return 0.5 * x * (1.0 + jnp.tanh(c * (x + 0.044715 * x * x * x)))


def _block_kernel(x_ref, mask_ref, ln1g_ref, ln1b_ref, wqkv_ref, wproj_ref,
                  bproj_ref, ln2g_ref, ln2b_ref, w1_ref, b1_ref, w2_ref,
                  b2_ref, out_ref):
    """Full transformer Block for Bblk batch elements."""
    bblk, t, ep = x_ref.shape
    rows = bblk * t
    sh = SINGLE_HEAD_SIZE

    x = x_ref[...].reshape(rows, ep)                         # (R, EP) f32, pad lanes = 0

    # lane-validity mask (1 for the 120 real lanes); built once, used by both LNs
    lane = lax.broadcasted_iota(jnp.int32, (1, ep), 1)
    lane_mask = (lane < EMBEDIMS).astype(jnp.float32)

    # ---------------- LayerNorm 1 + fused QKV ----------------
    xn1 = _layernorm(x, ln1g_ref[...], ln1b_ref[...], lane_mask)
    qkv = jnp.dot(xn1.astype(MXU_DTYPE), wqkv_ref[...],
                  preferred_element_type=jnp.float32)        # (R, 3*EP) f32
    qkv = qkv.astype(MXU_DTYPE).reshape(bblk, t, QKVP)       # one wide cast + split

    amask = mask_ref[...]                                    # (T, T) additive mask

    # ---------------- Multi-head causal self-attention ----------------
    # Per-head: batched scores/softmax/PV over Bblk; output projection folded per
    # head into a lane-dense (R, EP) f32 accumulator (no 20-lane concat stores).
    sa = jnp.zeros((rows, ep), jnp.float32)
    for h in range(HEAD_NUMBER):                             # static unroll (H=6)
        lo = h * sh
        hi = lo + sh
        q = qkv[:, :, lo:hi]                                 # (Bblk, T, SH) bf16
        k = qkv[:, :, EP + lo:EP + hi]
        v = qkv[:, :, 2 * EP + lo:2 * EP + hi]

        # scale 1/sqrt(SH) is folded into the Q weights at pack time
        s = jnp.einsum('btd,bsd->bts', q, k,
                       preferred_element_type=jnp.float32)   # (Bblk, T, T)
        s = s + amask

        # numerically-stable softmax in f32; denom via EUP approx reciprocal
        m = jnp.max(s, axis=-1, keepdims=True)
        p = jnp.exp(s - m)
        denom = jnp.sum(p, axis=-1, keepdims=True)
        p = p * pl.reciprocal(denom, approx=True)

        o = jnp.einsum('bts,bsd->btd', p.astype(MXU_DTYPE), v,
                       preferred_element_type=jnp.float32)   # (Bblk, T, SH)

        # fold this head's slice of the output projection: (R,SH)@(SH,EP) -> (R,EP)
        sa = sa + jnp.dot(o.reshape(rows, sh).astype(MXU_DTYPE), wproj_ref[h],
                          preferred_element_type=jnp.float32)

    sa = sa + bproj_ref[...]                                 # projection bias
    res1 = x + sa                                            # residual 1 (pad lanes 0)

    # ---------------- LayerNorm 2 + FeedForward ----------------
    xn2 = _layernorm(res1, ln2g_ref[...], ln2b_ref[...], lane_mask)
    h1 = jnp.dot(xn2.astype(MXU_DTYPE), w1_ref[...],
                 preferred_element_type=jnp.float32) + b1_ref[...]   # (R, FFP)
    h1 = _gelu_tanh(h1)
    ff = jnp.dot(h1.astype(MXU_DTYPE), w2_ref[...],
                 preferred_element_type=jnp.float32) + b2_ref[...]   # (R, EP)

    out_ref[...] = (res1 + ff).reshape(bblk, t, ep).astype(out_ref.dtype)


def pack_params(ln1_g, ln1_b, wq, wk, wv, w_proj_t, b_proj,
                ln2_g, ln2_b, w1_t, b1, w2_t, b2):
    """One-time host-side packing: transpose/concat, zero-pad to lane-dense dims,
    fold the attention scale into Q, cast matmul weights to bf16.
    Call ONCE; reuse the returned dict across steps."""
    E, H, SH, FF = EMBEDIMS, HEAD_NUMBER, SINGLE_HEAD_SIZE, FFWD
    scale = 1.0 / math.sqrt(SH)

    def stack(w):                                    # (H,E,SH) -> (E, H*SH)
        return jnp.transpose(w, (1, 0, 2)).reshape(E, H * SH)

    def pad2(a, r, c):
        return jnp.pad(a, ((0, r - a.shape[0]), (0, c - a.shape[1])))

    def padrow(v, n):
        return jnp.pad(v, (0, n - v.shape[0])).reshape(1, n).astype(jnp.float32)

    # Q|K|V packed into one (EP, 3*EP) weight; each 128-lane section holds head h
    # at columns [h*SH, (h+1)*SH), lanes 120..127 zero.  Scale folded into Q.
    wqkv = jnp.concatenate([pad2(stack(wq) * scale, EP, EP),
                            pad2(stack(wk), EP, EP),
                            pad2(stack(wv), EP, EP)], axis=1).astype(MXU_DTYPE)

    # Output projection, per-head slices of proj.weight^T, padded to 128 lanes.
    wproj = jnp.pad(w_proj_t.reshape(H, SH, E),
                    ((0, 0), (0, 0), (0, EP - E))).astype(MXU_DTYPE)   # (H, SH, EP)

    w1 = pad2(w1_t, EP, FFP).astype(MXU_DTYPE)        # (EP, FFP)
    w2 = pad2(w2_t, FFP, EP).astype(MXU_DTYPE)        # (FFP, EP)

    # Additive causal mask (0 keep / -1e30 drop), fetched once per pipeline.
    row = lax.broadcasted_iota(jnp.int32, (BLOCK, BLOCK), 0)
    col = lax.broadcasted_iota(jnp.int32, (BLOCK, BLOCK), 1)
    amask = jnp.where(col <= row, jnp.float32(0.0), NEG_BIG)

    return dict(
        amask=amask,
        ln1g=padrow(ln1_g, EP), ln1b=padrow(ln1_b, EP),
        wqkv=wqkv, wproj=wproj, bproj=padrow(b_proj, EP),
        ln2g=padrow(ln2_g, EP), ln2b=padrow(ln2_b, EP),
        w1=w1, b1=padrow(b1, FFP), w2=w2, b2=padrow(b2, EP),
    )


def _choose_bblk(batch, max_bblk=8):
    """Batch elements per grid step: fill the MXU M dim but keep >=2 parallel grid
    steps so both v7x TensorCores get work.  VMEM stays <1 MiB/step at Bblk=8,
    far below even v5e's 16 MiB default scoped limit."""
    target = batch // 2 if batch >= 2 else batch
    bblk = max(1, min(max_bblk, target))
    while batch % bblk:
        bblk -= 1
    return bblk


def transformer_block(x, params):
    """x: (B, T=64, E=120) f32; params: output of pack_params()."""
    B, T, E = x.shape
    assert T == BLOCK and E == EMBEDIMS, (T, E)
    bblk = _choose_bblk(B)
    grid = (B // bblk,)
    H, SH = HEAD_NUMBER, SINGLE_HEAD_SIZE

    xp = jnp.pad(x, ((0, 0), (0, 0), (0, EP - E)))           # lane-dense input

    rep2 = lambda b: (0, 0)
    out = pl.pallas_call(
        _block_kernel,
        out_shape=jax.ShapeDtypeStruct((B, T, EP), jnp.float32),
        grid_spec=pltpu.PrefetchScalarGridSpec(
            num_scalar_prefetch=0,
            grid=grid,
            in_specs=[
                pl.BlockSpec((bblk, T, EP), lambda b: (b, 0, 0)),   # x
                pl.BlockSpec((T, T), rep2),                         # additive causal mask
                pl.BlockSpec((1, EP), rep2),                        # ln1 gamma
                pl.BlockSpec((1, EP), rep2),                        # ln1 beta
                pl.BlockSpec((EP, QKVP), rep2),                     # wqkv (bf16)
                pl.BlockSpec((H, SH, EP), lambda b: (0, 0, 0)),     # wproj (bf16)
                pl.BlockSpec((1, EP), rep2),                        # bproj
                pl.BlockSpec((1, EP), rep2),                        # ln2 gamma
                pl.BlockSpec((1, EP), rep2),                        # ln2 beta
                pl.BlockSpec((EP, FFP), rep2),                      # w1 (bf16)
                pl.BlockSpec((1, FFP), rep2),                       # b1
                pl.BlockSpec((FFP, EP), rep2),                      # w2 (bf16)
                pl.BlockSpec((1, EP), rep2),                        # b2
            ],
            out_specs=pl.BlockSpec((bblk, T, EP), lambda b: (b, 0, 0)),
        ),
        compiler_params=pltpu.CompilerParams(
            dimension_semantics=("parallel",)),
    )(xp, params["amask"], params["ln1g"], params["ln1b"], params["wqkv"],
      params["wproj"], params["bproj"], params["ln2g"], params["ln2b"],
      params["w1"], params["b1"], params["w2"], params["b2"])

    return out[:, :, :E]                                     # drop the 8 pad lanes


if __name__ == "__main__":
    B, T, E = 2, BLOCK, EMBEDIMS
    H, SH, FF = HEAD_NUMBER, SINGLE_HEAD_SIZE, FFWD

    key = jax.random.PRNGKey(0)
    ks = jax.random.split(key, 10)

    x = jax.random.normal(ks[0], (B, T, E), dtype=jnp.float32)

    # nn.Linear(E, SH, bias=False) per head; weight (SH,E) stored transposed (E,SH),
    # stacked over heads -> (H, E, SH).
    s_e = 1.0 / math.sqrt(E)
    wq = jax.random.uniform(ks[1], (H, E, SH), jnp.float32, -s_e, s_e)
    wk = jax.random.uniform(ks[2], (H, E, SH), jnp.float32, -s_e, s_e)
    wv = jax.random.uniform(ks[3], (H, E, SH), jnp.float32, -s_e, s_e)

    # nn.Linear(H*SH, E): weight^T -> (H*SH, E) == (120, 120)
    w_proj_t = jax.random.uniform(ks[4], (E, E), jnp.float32, -s_e, s_e)
    b_proj = jax.random.uniform(ks[5], (E,), jnp.float32, -s_e, s_e)

    # FeedForward: Linear(E, 4E) and Linear(4E, E), weights stored transposed.
    w1_t = jax.random.uniform(ks[6], (E, FF), jnp.float32, -s_e, s_e)
    b1 = jax.random.uniform(ks[7], (FF,), jnp.float32, -s_e, s_e)
    s_f = 1.0 / math.sqrt(FF)
    w2_t = jax.random.uniform(ks[8], (FF, E), jnp.float32, -s_f, s_f)
    b2 = jax.random.uniform(ks[9], (E,), jnp.float32, -s_f, s_f)

    # LayerNorm default init (gamma=1, beta=0), eps=1e-12.
    ln1_g = jnp.ones((E,), jnp.float32)
    ln1_b = jnp.zeros((E,), jnp.float32)
    ln2_g = jnp.ones((E,), jnp.float32)
    ln2_b = jnp.zeros((E,), jnp.float32)

    # Pack / pad / bf16-cast weights ONCE, outside the per-step call.
    params = pack_params(ln1_g, ln1_b, wq, wk, wv, w_proj_t, b_proj,
                         ln2_g, ln2_b, w1_t, b1, w2_t, b2)

    block_fn = jax.jit(transformer_block)
    out = jax.block_until_ready(block_fn(x, params))
    assert out.shape == (B, T, E), out.shape
    assert bool(jnp.all(jnp.isfinite(out)))
    print("KERNEL_OK")
</pallas_src>

<mosaic_0001>
module attributes {stable_mosaic.version = 11 : i64} {
  func.func @_block_kernel(%arg0: i32, %arg1: memref<1x64x128xf32, #tpu.memory_space<vmem>>, %arg2: memref<64x64xf32, #tpu.memory_space<vmem>>, %arg3: memref<1x128xf32, #tpu.memory_space<vmem>>, %arg4: memref<1x128xf32, #tpu.memory_space<vmem>>, %arg5: memref<128x384xbf16, #tpu.memory_space<vmem>>, %arg6: memref<6x20x128xbf16, #tpu.memory_space<vmem>>, %arg7: memref<1x128xf32, #tpu.memory_space<vmem>>, %arg8: memref<1x128xf32, #tpu.memory_space<vmem>>, %arg9: memref<1x128xf32, #tpu.memory_space<vmem>>, %arg10: memref<128x512xbf16, #tpu.memory_space<vmem>>, %arg11: memref<1x512xf32, #tpu.memory_space<vmem>>, %arg12: memref<512x128xbf16, #tpu.memory_space<vmem>>, %arg13: memref<1x128xf32, #tpu.memory_space<vmem>>, %arg14: memref<1x64x128xf32, #tpu.memory_space<vmem>>) attributes {dimension_semantics = [#tpu.dimension_semantics<parallel>], iteration_bounds = array<i64: 2>, scalar_prefetch = 0 : i64, scratch_operands = 0 : i64, tpu.core_type = #tpu.core_type<tc>, window_params = [{transform_indices = @transform_0, window_bounds = array<i64: 1, 64, 128>}, {pipeline_mode = #tpu.pipeline_mode<synchronous>, transform_indices = @transform_1, window_bounds = array<i64: 64, 64>}, {pipeline_mode = #tpu.pipeline_mode<synchronous>, transform_indices = @transform_2, window_bounds = array<i64: 1, 128>}, {pipeline_mode = #tpu.pipeline_mode<synchronous>, transform_indices = @transform_3, window_bounds = array<i64: 1, 128>}, {pipeline_mode = #tpu.pipeline_mode<synchronous>, transform_indices = @transform_4, window_bounds = array<i64: 128, 384>}, {pipeline_mode = #tpu.pipeline_mode<synchronous>, transform_indices = @transform_5, window_bounds = array<i64: 6, 20, 128>}, {pipeline_mode = #tpu.pipeline_mode<synchronous>, transform_indices = @transform_6, window_bounds = array<i64: 1, 128>}, {pipeline_mode = #tpu.pipeline_mode<synchronous>, transform_indices = @transform_7, window_bounds = array<i64: 1, 128>}, {pipeline_mode = #tpu.pipeline_mode<synchronous>, transform_indices = @transform_8, window_bounds = array<i64: 1, 128>}, {pipeline_mode = #tpu.pipeline_mode<synchronous>, transform_indices = @transform_9, window_bounds = array<i64: 128, 512>}, {pipeline_mode = #tpu.pipeline_mode<synchronous>, transform_indices = @transform_10, window_bounds = array<i64: 1, 512>}, {pipeline_mode = #tpu.pipeline_mode<synchronous>, transform_indices = @transform_11, window_bounds = array<i64: 512, 128>}, {pipeline_mode = #tpu.pipeline_mode<synchronous>, transform_indices = @transform_12, window_bounds = array<i64: 1, 128>}, {transform_indices = @transform_13, window_bounds = array<i64: 1, 64, 128>}]} {
    %c0 = arith.constant 0 : index
    %c0_0 = arith.constant 0 : index
    %c0_1 = arith.constant 0 : index
    %0 = vector.load %arg1[%c0, %c0_0, %c0_1] : memref<1x64x128xf32, #tpu.memory_space<vmem>>, vector<1x64x128xf32>
    %1 = vector.shape_cast %0 : vector<1x64x128xf32> to vector<64x128xf32>
    %2 = tpu.iota {dimensions = array<i32: 1>} : vector<1x128xi32>
    %c120_i32 = arith.constant 120 : i32
    %3 = vector.broadcast %c120_i32 : i32 to vector<1x128xi32>
    %4 = arith.cmpi slt, %2, %3 : vector<1x128xi32>
    %5 = arith.extui %4 : vector<1x128xi1> to vector<1x128xi32>
    %6 = arith.sitofp %5 : vector<1x128xi32> to vector<1x128xf32>
    %c0_2 = arith.constant 0 : index
    %c0_3 = arith.constant 0 : index
    %7 = vector.load %arg3[%c0_2, %c0_3] : memref<1x128xf32, #tpu.memory_space<vmem>>, vector<1x128xf32>
    %c0_4 = arith.constant 0 : index
    %c0_5 = arith.constant 0 : index
    %8 = vector.load %arg4[%c0_4, %c0_5] : memref<1x128xf32, #tpu.memory_space<vmem>>, vector<1x128xf32>
    %cst = arith.constant dense<0.000000e+00> : vector<64xf32>
    %9 = vector.multi_reduction <add>, %1, %cst [1] : vector<64x128xf32> to vector<64xf32>
    %10 = vector.shape_cast %9 : vector<64xf32> to vector<64x1xf32>
    %cst_6 = arith.constant 0.00833333377 : f32
    %11 = vector.broadcast %cst_6 : f32 to vector<64x1xf32>
    %12 = arith.mulf %10, %11 : vector<64x1xf32>
    %13 = vector.broadcast %12 : vector<64x1xf32> to vector<64x128xf32>
    %14 = arith.subf %1, %13 : vector<64x128xf32>
    %15 = vector.broadcast %6 : vector<1x128xf32> to vector<64x128xf32>
    %16 = arith.mulf %14, %15 : vector<64x128xf32>
    %17 = arith.mulf %16, %16 : vector<64x128xf32>
    %cst_7 = arith.constant dense<0.000000e+00> : vector<64xf32>
    %18 = vector.multi_reduction <add>, %17, %cst_7 [1] : vector<64x128xf32> to vector<64xf32>
    %19 = vector.shape_cast %18 : vector<64xf32> to vector<64x1xf32>
    %cst_8 = arith.constant 0.00833333377 : f32
    %20 = vector.broadcast %cst_8 : f32 to vector<64x1xf32>
    %21 = arith.mulf %19, %20 : vector<64x1xf32>
    %cst_9 = arith.constant 9.99999996E-13 : f32
    %22 = vector.broadcast %cst_9 : f32 to vector<64x1xf32>
    %23 = arith.addf %21, %22 : vector<64x1xf32>
    %24 = math.rsqrt %23 : vector<64x1xf32>
    %25 = vector.broadcast %24 : vector<64x1xf32> to vector<64x128xf32>
    %26 = arith.mulf %16, %25 : vector<64x128xf32>
    %27 = vector.broadcast %7 : vector<1x128xf32> to vector<64x128xf32>
    %28 = arith.mulf %26, %27 : vector<64x128xf32>
    %29 = vector.broadcast %8 : vector<1x128xf32> to vector<64x128xf32>
    %30 = arith.addf %28, %29 : vector<64x128xf32>
    %31 = arith.truncf %30 : vector<64x128xf32> to vector<64x128xbf16>
    %c0_10 = arith.constant 0 : index
    %c0_11 = arith.constant 0 : index
    %32 = vector.load %arg5[%c0_10, %c0_11] : memref<128x384xbf16, #tpu.memory_space<vmem>>, vector<128x384xbf16>
    %cst_12 = arith.constant dense<0.000000e+00> : vector<64x384xf32>
    %33 = tpu.matmul %31, %32, %cst_12 {dimension_numbers = #tpu.dot_dimension_numbers<[1], [0], [0], [1], [0, 0, 1, 1], [], []>} : vector<64x128xbf16>, vector<128x384xbf16>, vector<64x384xf32> -> vector<64x384xf32>
    %34 = arith.truncf %33 : vector<64x384xf32> to vector<64x384xbf16>
    %35 = vector.shape_cast %34 : vector<64x384xbf16> to vector<1x64x384xbf16>
    %c0_13 = arith.constant 0 : index
    %c0_14 = arith.constant 0 : index
    %36 = vector.load %arg2[%c0_13, %c0_14] : memref<64x64xf32, #tpu.memory_space<vmem>>, vector<64x64xf32>
    %cst_15 = arith.constant 0.000000e+00 : f32
    %37 = vector.broadcast %cst_15 : f32 to vector<64x128xf32>
    %38 = vector.extract_strided_slice %35 {offsets = [0, 0, 0], sizes = [1, 64, 20], strides = [1, 1, 1]} : vector<1x64x384xbf16> to vector<1x64x20xbf16>
    %39 = vector.extract_strided_slice %35 {offsets = [0, 0, 128], sizes = [1, 64, 20], strides = [1, 1, 1]} : vector<1x64x384xbf16> to vector<1x64x20xbf16>
    %40 = vector.extract_strided_slice %35 {offsets = [0, 0, 256], sizes = [1, 64, 20], strides = [1, 1, 1]} : vector<1x64x384xbf16> to vector<1x64x20xbf16>
    "tpu.trace_start"() <{level = 10 : i32, message = "btd,bsd->bts"}> : () -> ()
    %cst_16 = arith.constant dense<0.000000e+00> : vector<1x64x64xf32>
    %41 = tpu.matmul %38, %39, %cst_16 {dimension_numbers = #tpu.dot_dimension_numbers<[2], [2], [1], [1], [0, 0, 0, 1, 1, 1], [0], [0]>} : vector<1x64x20xbf16>, vector<1x64x20xbf16>, vector<1x64x64xf32> -> vector<1x64x64xf32>
    "tpu.trace_stop"() : () -> ()
    %42 = vector.shape_cast %36 : vector<64x64xf32> to vector<1x64x64xf32>
    %43 = arith.addf %41, %42 : vector<1x64x64xf32>
    %cst_17 = arith.constant dense<0xFF800000> : vector<1x64xf32>
    %44 = vector.multi_reduction <maximumf>, %43, %cst_17 [2] : vector<1x64x64xf32> to vector<1x64xf32>
    %45 = vector.shape_cast %44 : vector<1x64xf32> to vector<1x64x1xf32>
    %46 = vector.broadcast %45 : vector<1x64x1xf32> to vector<1x64x64xf32>
    %47 = arith.subf %43, %46 : vector<1x64x64xf32>
    %48 = math.exp %47 : vector<1x64x64xf32>
    %cst_18 = arith.constant dense<0.000000e+00> : vector<1x64xf32>
    %49 = vector.multi_reduction <add>, %48, %cst_18 [2] : vector<1x64x64xf32> to vector<1x64xf32>
    %50 = vector.shape_cast %49 : vector<1x64xf32> to vector<1x64x1xf32>
    %51 = tpu.reciprocal %50 {approx = true} : vector<1x64x1xf32> -> vector<1x64x1xf32>
    %52 = vector.broadcast %51 : vector<1x64x1xf32> to vector<1x64x64xf32>
    %53 = arith.mulf %48, %52 : vector<1x64x64xf32>
    %54 = arith.truncf %53 : vector<1x64x64xf32> to vector<1x64x64xbf16>
    "tpu.trace_start"() <{level = 10 : i32, message = "bts,bsd->btd"}> : () -> ()
    %cst_19 = arith.constant dense<0.000000e+00> : vector<1x64x20xf32>
    %55 = tpu.matmul %54, %40, %cst_19 {dimension_numbers = #tpu.dot_dimension_numbers<[2], [1], [1], [2], [0, 0, 0, 1, 1, 2], [0], [0]>} : vector<1x64x64xbf16>, vector<1x64x20xbf16>, vector<1x64x20xf32> -> vector<1x64x20xf32>
    "tpu.trace_stop"() : () -> ()
    %56 = vector.shape_cast %55 : vector<1x64x20xf32> to vector<64x20xf32>
    %57 = arith.truncf %56 : vector<64x20xf32> to vector<64x20xbf16>
    %c0_20 = arith.constant 0 : index
    %c0_21 = arith.constant 0 : index
    %c0_22 = arith.constant 0 : index
    %58 = vector.load %arg6[%c0_20, %c0_21, %c0_22] : memref<6x20x128xbf16, #tpu.memory_space<vmem>>, vector<1x20x128xbf16>
    %59 = vector.shape_cast %58 : vector<1x20x128xbf16> to vector<20x128xbf16>
    %cst_23 = arith.constant dense<0.000000e+00> : vector<64x128xf32>
    %60 = tpu.matmul %57, %59, %cst_23 {dimension_numbers = #tpu.dot_dimension_numbers<[1], [0], [0], [1], [0, 0, 1, 1], [], []>} : vector<64x20xbf16>, vector<20x128xbf16>, vector<64x128xf32> -> vector<64x128xf32>
    %61 = arith.addf %37, %60 : vector<64x128xf32>
    %62 = vector.extract_strided_slice %35 {offsets = [0, 0, 20], sizes = [1, 64, 20], strides = [1, 1, 1]} : vector<1x64x384xbf16> to vector<1x64x20xbf16>
    %63 = vector.extract_strided_slice %35 {offsets = [0, 0, 148], sizes = [1, 64, 20], strides = [1, 1, 1]} : vector<1x64x384xbf16> to vector<1x64x20xbf16>
    %64 = vector.extract_strided_slice %35 {offsets = [0, 0, 276], sizes = [1, 64, 20], strides = [1, 1, 1]} : vector<1x64x384xbf16> to vector<1x64x20xbf16>
    "tpu.trace_start"() <{level = 10 : i32, message = "btd,bsd->bts"}> : () -> ()
    %cst_24 = arith.constant dense<0.000000e+00> : vector<1x64x64xf32>
    %65 = tpu.matmul %62, %63, %cst_24 {dimension_numbers = #tpu.dot_dimension_numbers<[2], [2], [1], [1], [0, 0, 0, 1, 1, 1], [0], [0]>} : vector<1x64x20xbf16>, vector<1x64x20xbf16>, vector<1x64x64xf32> -> vector<1x64x64xf32>
    "tpu.trace_stop"() : () -> ()
    %66 = vector.shape_cast %36 : vector<64x64xf32> to vector<1x64x64xf32>
    %67 = arith.addf %65, %66 : vector<1x64x64xf32>
    %cst_25 = arith.constant dense<0xFF800000> : vector<1x64xf32>
    %68 = vector.multi_reduction <maximumf>, %67, %cst_25 [2] : vector<1x64x64xf32> to vector<1x64xf32>
    %69 = vector.shape_cast %68 : vector<1x64xf32> to vector<1x64x1xf32>
    %70 = vector.broadcast %69 : vector<1x64x1xf32> to vector<1x64x64xf32>
    %71 = arith.subf %67, %70 : vector<1x64x64xf32>
    %72 = math.exp %71 : vector<1x64x64xf32>
    %cst_26 = arith.constant dense<0.000000e+00> : vector<1x64xf32>
    %73 = vector.multi_reduction <add>, %72, %cst_26 [2] : vector<1x64x64xf32> to vector<1x64xf32>
    %74 = vector.shape_cast %73 : vector<1x64xf32> to vector<1x64x1xf32>
    %75 = tpu.reciprocal %74 {approx = true} : vector<1x64x1xf32> -> vector<1x64x1xf32>
    %76 = vector.broadcast %75 : vector<1x64x1xf32> to vector<1x64x64xf32>
    %77 = arith.mulf %72, %76 : vector<1x64x64xf32>
    %78 = arith.truncf %77 : vector<1x64x64xf32> to vector<1x64x64xbf16>
    "tpu.trace_start"() <{level = 10 : i32, message = "bts,bsd->btd"}> : () -> ()
    %cst_27 = arith.constant dense<0.000000e+00> : vector<1x64x20xf32>
    %79 = tpu.matmul %78, %64, %cst_27 {dimension_numbers = #tpu.dot_dimension_numbers<[2], [1], [1], [2], [0, 0, 0, 1, 1, 2], [0], [0]>} : vector<1x64x64xbf16>, vector<1x64x20xbf16>, vector<1x64x20xf32> -> vector<1x64x20xf32>
    "tpu.trace_stop"() : () -> ()
    %80 = vector.shape_cast %79 : vector<1x64x20xf32> to vector<64x20xf32>
    %81 = arith.truncf %80 : vector<64x20xf32> to vector<64x20xbf16>
    %c1 = arith.constant 1 : index
    %c0_28 = arith.constant 0 : index
    %c0_29 = arith.constant 0 : index
    %82 = vector.load %arg6[%c1, %c0_28, %c0_29] : memref<6x20x128xbf16, #tpu.memory_space<vmem>>, vector<1x20x128xbf16>
    %83 = vector.shape_cast %82 : vector<1x20x128xbf16> to vector<20x128xbf16>
    %cst_30 = arith.constant dense<0.000000e+00> : vector<64x128xf32>
    %84 = tpu.matmul %81, %83, %cst_30 {dimension_numbers = #tpu.dot_dimension_numbers<[1], [0], [0], [1], [0, 0, 1, 1], [], []>} : vector<64x20xbf16>, vector<20x128xbf16>, vector<64x128xf32> -> vector<64x128xf32>
    %85 = arith.addf %61, %84 : vector<64x128xf32>
    %86 = vector.extract_strided_slice %35 {offsets = [0, 0, 40], sizes = [1, 64, 20], strides = [1, 1, 1]} : vector<1x64x384xbf16> to vector<1x64x20xbf16>
    %87 = vector.extract_strided_slice %35 {offsets = [0, 0, 168], sizes = [1, 64, 20], strides = [1, 1, 1]} : vector<1x64x384xbf16> to vector<1x64x20xbf16>
    %88 = vector.extract_strided_slice %35 {offsets = [0, 0, 296], sizes = [1, 64, 20], strides = [1, 1, 1]} : vector<1x64x384xbf16> to vector<1x64x20xbf16>
    "tpu.trace_start"() <{level = 10 : i32, message = "btd,bsd->bts"}> : () -> ()
    %cst_31 = arith.constant dense<0.000000e+00> : vector<1x64x64xf32>
    %89 = tpu.matmul %86, %87, %cst_31 {dimension_numbers = #tpu.dot_dimension_numbers<[2], [2], [1], [1], [0, 0, 0, 1, 1, 1], [0], [0]>} : vector<1x64x20xbf16>, vector<1x64x20xbf16>, vector<1x64x64xf32> -> vector<1x64x64xf32>
    "tpu.trace_stop"() : () -> ()
    %90 = vector.shape_cast %36 : vector<64x64xf32> to vector<1x64x64xf32>
    %91 = arith.addf %89, %90 : vector<1x64x64xf32>
    %cst_32 = arith.constant dense<0xFF800000> : vector<1x64xf32>
    %92 = vector.multi_reduction <maximumf>, %91, %cst_32 [2] : vector<1x64x64xf32> to vector<1x64xf32>
    %93 = vector.shape_cast %92 : vector<1x64xf32> to vector<1x64x1xf32>
    %94 = vector.broadcast %93 : vector<1x64x1xf32> to vector<1x64x64xf32>
    %95 = arith.subf %91, %94 : vector<1x64x64xf32>
    %96 = math.exp %95 : vector<1x64x64xf32>
    %cst_33 = arith.constant dense<0.000000e+00> : vector<1x64xf32>
    %97 = vector.multi_reduction <add>, %96, %cst_33 [2] : vector<1x64x64xf32> to vector<1x64xf32>
    %98 = vector.shape_cast %97 : vector<1x64xf32> to vector<1x64x1xf32>
    %99 = tpu.reciprocal %98 {approx = true} : vector<1x64x1xf32> -> vector<1x64x1xf32>
    %100 = vector.broadcast %99 : vector<1x64x1xf32> to vector<1x64x64xf32>
    %101 = arith.mulf %96, %100 : vector<1x64x64xf32>
    %102 = arith.truncf %101 : vector<1x64x64xf32> to vector<1x64x64xbf16>
    "tpu.trace_start"() <{level = 10 : i32, message = "bts,bsd->btd"}> : () -> ()
    %cst_34 = arith.constant dense<0.000000e+00> : vector<1x64x20xf32>
    %103 = tpu.matmul %102, %88, %cst_34 {dimension_numbers = #tpu.dot_dimension_numbers<[2], [1], [1], [2], [0, 0, 0, 1, 1, 2], [0], [0]>} : vector<1x64x64xbf16>, vector<1x64x20xbf16>, vector<1x64x20xf32> -> vector<1x64x20xf32>
    "tpu.trace_stop"() : () -> ()
    %104 = vector.shape_cast %103 : vector<1x64x20xf32> to vector<64x20xf32>
    %105 = arith.truncf %104 : vector<64x20xf32> to vector<64x20xbf16>
    %c2 = arith.constant 2 : index
    %c0_35 = arith.constant 0 : index
    %c0_36 = arith.constant 0 : index
    %106 = vector.load %arg6[%c2, %c0_35, %c0_36] : memref<6x20x128xbf16, #tpu.memory_space<vmem>>, vector<1x20x128xbf16>
    %107 = vector.shape_cast %106 : vector<1x20x128xbf16> to vector<20x128xbf16>
    %cst_37 = arith.constant dense<0.000000e+00> : vector<64x128xf32>
    %108 = tpu.matmul %105, %107, %cst_37 {dimension_numbers = #tpu.dot_dimension_numbers<[1], [0], [0], [1], [0, 0, 1, 1], [], []>} : vector<64x20xbf16>, vector<20x128xbf16>, vector<64x128xf32> -> vector<64x128xf32>
    %109 = arith.addf %85, %108 : vector<64x128xf32>
    %110 = vector.extract_strided_slice %35 {offsets = [0, 0, 60], sizes = [1, 64, 20], strides = [1, 1, 1]} : vector<1x64x384xbf16> to vector<1x64x20xbf16>
    %111 = vector.extract_strided_slice %35 {offsets = [0, 0, 188], sizes = [1, 64, 20], strides = [1, 1, 1]} : vector<1x64x384xbf16> to vector<1x64x20xbf16>
    %112 = vector.extract_strided_slice %35 {offsets = [0, 0, 316], sizes = [1, 64, 20], strides = [1, 1, 1]} : vector<1x64x384xbf16> to vector<1x64x20xbf16>
    "tpu.trace_start"() <{level = 10 : i32, message = "btd,bsd->bts"}> : () -> ()
    %cst_38 = arith.constant dense<0.000000e+00> : vector<1x64x64xf32>
    %113 = tpu.matmul %110, %111, %cst_38 {dimension_numbers = #tpu.dot_dimension_numbers<[2], [2], [1], [1], [0, 0, 0, 1, 1, 1], [0], [0]>} : vector<1x64x20xbf16>, vector<1x64x20xbf16>, vector<1x64x64xf32> -> vector<1x64x64xf32>
    "tpu.trace_stop"() : () -> ()
    %114 = vector.shape_cast %36 : vector<64x64xf32> to vector<1x64x64xf32>
    %115 = arith.addf %113, %114 : vector<1x64x64xf32>
    %cst_39 = arith.constant dense<0xFF800000> : vector<1x64xf32>
    %116 = vector.multi_reduction <maximumf>, %115, %cst_39 [2] : vector<1x64x64xf32> to vector<1x64xf32>
    %117 = vector.shape_cast %116 : vector<1x64xf32> to vector<1x64x1xf32>
    %118 = vector.broadcast %117 : vector<1x64x1xf32> to vector<1x64x64xf32>
    %119 = arith.subf %115, %118 : vector<1x64x64xf32>
    %120 = math.exp %119 : vector<1x64x64xf32>
    %cst_40 = arith.constant dense<0.000000e+00> : vector<1x64xf32>
    %121 = vector.multi_reduction <add>, %120, %cst_40 [2] : vector<1x64x64xf32> to vector<1x64xf32>
    %122 = vector.shape_cast %121 : vector<1x64xf32> to vector<1x64x1xf32>
    %123 = tpu.reciprocal %122 {approx = true} : vector<1x64x1xf32> -> vector<1x64x1xf32>
    %124 = vector.broadcast %123 : vector<1x64x1xf32> to vector<1x64x64xf32>
    %125 = arith.mulf %120, %124 : vector<1x64x64xf32>
    %126 = arith.truncf %125 : vector<1x64x64xf32> to vector<1x64x64xbf16>
    "tpu.trace_start"() <{level = 10 : i32, message = "bts,bsd->btd"}> : () -> ()
    %cst_41 = arith.constant dense<0.000000e+00> : vector<1x64x20xf32>
    %127 = tpu.matmul %126, %112, %cst_41 {dimension_numbers = #tpu.dot_dimension_numbers<[2], [1], [1], [2], [0, 0, 0, 1, 1, 2], [0], [0]>} : vector<1x64x64xbf16>, vector<1x64x20xbf16>, vector<1x64x20xf32> -> vector<1x64x20xf32>
    "tpu.trace_stop"() : () -> ()
    %128 = vector.shape_cast %127 : vector<1x64x20xf32> to vector<64x20xf32>
    %129 = arith.truncf %128 : vector<64x20xf32> to vector<64x20xbf16>
    %c3 = arith.constant 3 : index
    %c0_42 = arith.constant 0 : index
    %c0_43 = arith.constant 0 : index
    %130 = vector.load %arg6[%c3, %c0_42, %c0_43] : memref<6x20x128xbf16, #tpu.memory_space<vmem>>, vector<1x20x128xbf16>
    %131 = vector.shape_cast %130 : vector<1x20x128xbf16> to vector<20x128xbf16>
    %cst_44 = arith.constant dense<0.000000e+00> : vector<64x128xf32>
    %132 = tpu.matmul %129, %131, %cst_44 {dimension_numbers = #tpu.dot_dimension_numbers<[1], [0], [0], [1], [0, 0, 1, 1], [], []>} : vector<64x20xbf16>, vector<20x128xbf16>, vector<64x128xf32> -> vector<64x128xf32>
    %133 = arith.addf %109, %132 : vector<64x128xf32>
    %134 = vector.extract_strided_slice %35 {offsets = [0, 0, 80], sizes = [1, 64, 20], strides = [1, 1, 1]} : vector<1x64x384xbf16> to vector<1x64x20xbf16>
    %135 = vector.extract_strided_slice %35 {offsets = [0, 0, 208], sizes = [1, 64, 20], strides = [1, 1, 1]} : vector<1x64x384xbf16> to vector<1x64x20xbf16>
    %136 = vector.extract_strided_slice %35 {offsets = [0, 0, 336], sizes = [1, 64, 20], strides = [1, 1, 1]} : vector<1x64x384xbf16> to vector<1x64x20xbf16>
    "tpu.trace_start"() <{level = 10 : i32, message = "btd,bsd->bts"}> : () -> ()
    %cst_45 = arith.constant dense<0.000000e+00> : vector<1x64x64xf32>
    %137 = tpu.matmul %134, %135, %cst_45 {dimension_numbers = #tpu.dot_dimension_numbers<[2], [2], [1], [1], [0, 0, 0, 1, 1, 1], [0], [0]>} : vector<1x64x20xbf16>, vector<1x64x20xbf16>, vector<1x64x64xf32> -> vector<1x64x64xf32>
    "tpu.trace_stop"() : () -> ()
    %138 = vector.shape_cast %36 : vector<64x64xf32> to vector<1x64x64xf32>
    %139 = arith.addf %137, %138 : vector<1x64x64xf32>
    %cst_46 = arith.constant dense<0xFF800000> : vector<1x64xf32>
    %140 = vector.multi_reduction <maximumf>, %139, %cst_46 [2] : vector<1x64x64xf32> to vector<1x64xf32>
    %141 = vector.shape_cast %140 : vector<1x64xf32> to vector<1x64x1xf32>
    %142 = vector.broadcast %141 : vector<1x64x1xf32> to vector<1x64x64xf32>
    %143 = arith.subf %139, %142 : vector<1x64x64xf32>
    %144 = math.exp %143 : vector<1x64x64xf32>
    %cst_47 = arith.constant dense<0.000000e+00> : vector<1x64xf32>
    %145 = vector.multi_reduction <add>, %144, %cst_47 [2] : vector<1x64x64xf32> to vector<1x64xf32>
    %146 = vector.shape_cast %145 : vector<1x64xf32> to vector<1x64x1xf32>
    %147 = tpu.reciprocal %146 {approx = true} : vector<1x64x1xf32> -> vector<1x64x1xf32>
    %148 = vector.broadcast %147 : vector<1x64x1xf32> to vector<1x64x64xf32>
    %149 = arith.mulf %144, %148 : vector<1x64x64xf32>
    %150 = arith.truncf %149 : vector<1x64x64xf32> to vector<1x64x64xbf16>
    "tpu.trace_start"() <{level = 10 : i32, message = "bts,bsd->btd"}> : () -> ()
    %cst_48 = arith.constant dense<0.000000e+00> : vector<1x64x20xf32>
    %151 = tpu.matmul %150, %136, %cst_48 {dimension_numbers = #tpu.dot_dimension_numbers<[2], [1], [1], [2], [0, 0, 0, 1, 1, 2], [0], [0]>} : vector<1x64x64xbf16>, vector<1x64x20xbf16>, vector<1x64x20xf32> -> vector<1x64x20xf32>
    "tpu.trace_stop"() : () -> ()
    %152 = vector.shape_cast %151 : vector<1x64x20xf32> to vector<64x20xf32>
    %153 = arith.truncf %152 : vector<64x20xf32> to vector<64x20xbf16>
    %c4 = arith.constant 4 : index
    %c0_49 = arith.constant 0 : index
    %c0_50 = arith.constant 0 : index
    %154 = vector.load %arg6[%c4, %c0_49, %c0_50] : memref<6x20x128xbf16, #tpu.memory_space<vmem>>, vector<1x20x128xbf16>
    %155 = vector.shape_cast %154 : vector<1x20x128xbf16> to vector<20x128xbf16>
    %cst_51 = arith.constant dense<0.000000e+00> : vector<64x128xf32>
    %156 = tpu.matmul %153, %155, %cst_51 {dimension_numbers = #tpu.dot_dimension_numbers<[1], [0], [0], [1], [0, 0, 1, 1], [], []>} : vector<64x20xbf16>, vector<20x128xbf16>, vector<64x128xf32> -> vector<64x128xf32>
    %157 = arith.addf %133, %156 : vector<64x128xf32>
    %158 = vector.extract_strided_slice %35 {offsets = [0, 0, 100], sizes = [1, 64, 20], strides = [1, 1, 1]} : vector<1x64x384xbf16> to vector<1x64x20xbf16>
    %159 = vector.extract_strided_slice %35 {offsets = [0, 0, 228], sizes = [1, 64, 20], strides = [1, 1, 1]} : vector<1x64x384xbf16> to vector<1x64x20xbf16>
    %160 = vector.extract_strided_slice %35 {offsets = [0, 0, 356], sizes = [1, 64, 20], strides = [1, 1, 1]} : vector<1x64x384xbf16> to vector<1x64x20xbf16>
    "tpu.trace_start"() <{level = 10 : i32, message = "btd,bsd->bts"}> : () -> ()
    %cst_52 = arith.constant dense<0.000000e+00> : vector<1x64x64xf32>
    %161 = tpu.matmul %158, %159, %cst_52 {dimension_numbers = #tpu.dot_dimension_numbers<[2], [2], [1], [1], [0, 0, 0, 1, 1, 1], [0], [0]>} : vector<1x64x20xbf16>, vector<1x64x20xbf16>, vector<1x64x64xf32> -> vector<1x64x64xf32>
    "tpu.trace_stop"() : () -> ()
    %162 = vector.shape_cast %36 : vector<64x64xf32> to vector<1x64x64xf32>
    %163 = arith.addf %161, %162 : vector<1x64x64xf32>
    %cst_53 = arith.constant dense<0xFF800000> : vector<1x64xf32>
    %164 = vector.multi_reduction <maximumf>, %163, %cst_53 [2] : vector<1x64x64xf32> to vector<1x64xf32>
    %165 = vector.shape_cast %164 : vector<1x64xf32> to vector<1x64x1xf32>
    %166 = vector.broadcast %165 : vector<1x64x1xf32> to vector<1x64x64xf32>
    %167 = arith.subf %163, %166 : vector<1x64x64xf32>
    %168 = math.exp %167 : vector<1x64x64xf32>
    %cst_54 = arith.constant dense<0.000000e+00> : vector<1x64xf32>
    %169 = vector.multi_reduction <add>, %168, %cst_54 [2] : vector<1x64x64xf32> to vector<1x64xf32>
    %170 = vector.shape_cast %169 : vector<1x64xf32> to vector<1x64x1xf32>
    %171 = tpu.reciprocal %170 {approx = true} : vector<1x64x1xf32> -> vector<1x64x1xf32>
    %172 = vector.broadcast %171 : vector<1x64x1xf32> to vector<1x64x64xf32>
    %173 = arith.mulf %168, %172 : vector<1x64x64xf32>
    %174 = arith.truncf %173 : vector<1x64x64xf32> to vector<1x64x64xbf16>
    "tpu.trace_start"() <{level = 10 : i32, message = "bts,bsd->btd"}> : () -> ()
    %cst_55 = arith.constant dense<0.000000e+00> : vector<1x64x20xf32>
    %175 = tpu.matmul %174, %160, %cst_55 {dimension_numbers = #tpu.dot_dimension_numbers<[2], [1], [1], [2], [0, 0, 0, 1, 1, 2], [0], [0]>} : vector<1x64x64xbf16>, vector<1x64x20xbf16>, vector<1x64x20xf32> -> vector<1x64x20xf32>
    "tpu.trace_stop"() : () -> ()
    %176 = vector.shape_cast %175 : vector<1x64x20xf32> to vector<64x20xf32>
    %177 = arith.truncf %176 : vector<64x20xf32> to vector<64x20xbf16>
    %c5 = arith.constant 5 : index
    %c0_56 = arith.constant 0 : index
    %c0_57 = arith.constant 0 : index
    %178 = vector.load %arg6[%c5, %c0_56, %c0_57] : memref<6x20x128xbf16, #tpu.memory_space<vmem>>, vector<1x20x128xbf16>
    %179 = vector.shape_cast %178 : vector<1x20x128xbf16> to vector<20x128xbf16>
    %cst_58 = arith.constant dense<0.000000e+00> : vector<64x128xf32>
    %180 = tpu.matmul %177, %179, %cst_58 {dimension_numbers = #tpu.dot_dimension_numbers<[1], [0], [0], [1], [0, 0, 1, 1], [], []>} : vector<64x20xbf16>, vector<20x128xbf16>, vector<64x128xf32> -> vector<64x128xf32>
    %181 = arith.addf %157, %180 : vector<64x128xf32>
    %c0_59 = arith.constant 0 : index
    %c0_60 = arith.constant 0 : index
    %182 = vector.load %arg7[%c0_59, %c0_60] : memref<1x128xf32, #tpu.memory_space<vmem>>, vector<1x128xf32>
    %183 = vector.broadcast %182 : vector<1x128xf32> to vector<64x128xf32>
    %184 = arith.addf %181, %183 : vector<64x128xf32>
    %185 = arith.addf %1, %184 : vector<64x128xf32>
    %c0_61 = arith.constant 0 : index
    %c0_62 = arith.constant 0 : index
    %186 = vector.load %arg8[%c0_61, %c0_62] : memref<1x128xf32, #tpu.memory_space<vmem>>, vector<1x128xf32>
    %c0_63 = arith.constant 0 : index
    %c0_64 = arith.constant 0 : index
    %187 = vector.load %arg9[%c0_63, %c0_64] : memref<1x128xf32, #tpu.memory_space<vmem>>, vector<1x128xf32>
    %cst_65 = arith.constant dense<0.000000e+00> : vector<64xf32>
    %188 = vector.multi_reduction <add>, %185, %cst_65 [1] : vector<64x128xf32> to vector<64xf32>
    %189 = vector.shape_cast %188 : vector<64xf32> to vector<64x1xf32>
    %cst_66 = arith.constant 0.00833333377 : f32
    %190 = vector.broadcast %cst_66 : f32 to vector<64x1xf32>
    %191 = arith.mulf %189, %190 : vector<64x1xf32>
    %192 = vector.broadcast %191 : vector<64x1xf32> to vector<64x128xf32>
    %193 = arith.subf %185, %192 : vector<64x128xf32>
    %194 = vector.broadcast %6 : vector<1x128xf32> to vector<64x128xf32>
    %195 = arith.mulf %193, %194 : vector<64x128xf32>
    %196 = arith.mulf %195, %195 : vector<64x128xf32>
    %cst_67 = arith.constant dense<0.000000e+00> : vector<64xf32>
    %197 = vector.multi_reduction <add>, %196, %cst_67 [1] : vector<64x128xf32> to vector<64xf32>
    %198 = vector.shape_cast %197 : vector<64xf32> to vector<64x1xf32>
    %cst_68 = arith.constant 0.00833333377 : f32
    %199 = vector.broadcast %cst_68 : f32 to vector<64x1xf32>
    %200 = arith.mulf %198, %199 : vector<64x1xf32>
    %cst_69 = arith.constant 9.99999996E-13 : f32
    %201 = vector.broadcast %cst_69 : f32 to vector<64x1xf32>
    %202 = arith.addf %200, %201 : vector<64x1xf32>
    %203 = math.rsqrt %202 : vector<64x1xf32>
    %204 = vector.broadcast %203 : vector<64x1xf32> to vector<64x128xf32>
    %205 = arith.mulf %195, %204 : vector<64x128xf32>
    %206 = vector.broadcast %186 : vector<1x128xf32> to vector<64x128xf32>
    %207 = arith.mulf %205, %206 : vector<64x128xf32>
    %208 = vector.broadcast %187 : vector<1x128xf32> to vector<64x128xf32>
    %209 = arith.addf %207, %208 : vector<64x128xf32>
    %210 = arith.truncf %209 : vector<64x128xf32> to vector<64x128xbf16>
    %c0_70 = arith.constant 0 : index
    %c0_71 = arith.constant 0 : index
    %211 = vector.load %arg10[%c0_70, %c0_71] : memref<128x512xbf16, #tpu.memory_space<vmem>>, vector<128x512xbf16>
    %cst_72 = arith.constant dense<0.000000e+00> : vector<64x512xf32>
    %212 = tpu.matmul %210, %211, %cst_72 {dimension_numbers = #tpu.dot_dimension_numbers<[1], [0], [0], [1], [0, 0, 1, 1], [], []>} : vector<64x128xbf16>, vector<128x512xbf16>, vector<64x512xf32> -> vector<64x512xf32>
    %c0_73 = arith.constant 0 : index
    %c0_74 = arith.constant 0 : index
    %213 = vector.load %arg11[%c0_73, %c0_74] : memref<1x512xf32, #tpu.memory_space<vmem>>, vector<1x512xf32>
    %214 = vector.broadcast %213 : vector<1x512xf32> to vector<64x512xf32>
    %215 = arith.addf %212, %214 : vector<64x512xf32>
    %cst_75 = arith.constant 5.000000e-01 : f32
    %216 = vector.broadcast %cst_75 : f32 to vector<64x512xf32>
    %217 = arith.mulf %216, %215 : vector<64x512xf32>
    %cst_76 = arith.constant 4.471500e-02 : f32
    %218 = vector.broadcast %cst_76 : f32 to vector<64x512xf32>
    %219 = arith.mulf %218, %215 : vector<64x512xf32>
    %220 = arith.mulf %219, %215 : vector<64x512xf32>
    %221 = arith.mulf %220, %215 : vector<64x512xf32>
    %222 = arith.addf %215, %221 : vector<64x512xf32>
    %cst_77 = arith.constant 0.797884583 : f32
    %223 = vector.broadcast %cst_77 : f32 to vector<64x512xf32>
    %224 = arith.mulf %223, %222 : vector<64x512xf32>
    %225 = math.tanh %224 : vector<64x512xf32>
    %cst_78 = arith.constant 1.000000e+00 : f32
    %226 = vector.broadcast %cst_78 : f32 to vector<64x512xf32>
    %227 = arith.addf %226, %225 : vector<64x512xf32>
    %228 = arith.mulf %217, %227 : vector<64x512xf32>
    %229 = arith.truncf %228 : vector<64x512xf32> to vector<64x512xbf16>
    %c0_79 = arith.constant 0 : index
    %c0_80 = arith.constant 0 : index
    %230 = vector.load %arg12[%c0_79, %c0_80] : memref<512x128xbf16, #tpu.memory_space<vmem>>, vector<512x128xbf16>
    %cst_81 = arith.constant dense<0.000000e+00> : vector<64x128xf32>
    %231 = tpu.matmul %229, %230, %cst_81 {dimension_numbers = #tpu.dot_dimension_numbers<[1], [0], [0], [1], [0, 0, 1, 1], [], []>} : vector<64x512xbf16>, vector<512x128xbf16>, vector<64x128xf32> -> vector<64x128xf32>
    %c0_82 = arith.constant 0 : index
    %c0_83 = arith.constant 0 : index
    %232 = vector.load %arg13[%c0_82, %c0_83] : memref<1x128xf32, #tpu.memory_space<vmem>>, vector<1x128xf32>
    %233 = vector.broadcast %232 : vector<1x128xf32> to vector<64x128xf32>
    %234 = arith.addf %231, %233 : vector<64x128xf32>
    %235 = arith.addf %185, %234 : vector<64x128xf32>
    %236 = vector.shape_cast %235 : vector<64x128xf32> to vector<1x64x128xf32>
    %c0_84 = arith.constant 0 : index
    %c0_85 = arith.constant 0 : index
    %c0_86 = arith.constant 0 : index
    %237 = vector.load %arg14[%c0_84, %c0_85, %c0_86] : memref<1x64x128xf32, #tpu.memory_space<vmem>>, vector<1x64x128xf32>
    tpu.vector_store %arg14[%c0_84, %c0_85, %c0_86], %236 {strides = array<i32>} : memref<1x64x128xf32, #tpu.memory_space<vmem>>, vector<1x64x128xf32>,
    return
  }
  func.func @transform_0(%arg0: i32) -> (i32, i32, i32) {
    %c0_i32 = arith.constant 0 : i32
    %c0_i32_0 = arith.constant 0 : i32
    %c0_i32_1 = arith.constant 0 : i32
    return %arg0, %c0_i32, %c0_i32_0 : i32, i32, i32
  }
  func.func @transform_1(%arg0: i32) -> (i32, i32) {
    %c0_i32 = arith.constant 0 : i32
    %c0_i32_0 = arith.constant 0 : i32
    %c0_i32_1 = arith.constant 0 : i32
    return %c0_i32, %c0_i32_0 : i32, i32
  }
  func.func @transform_2(%arg0: i32) -> (i32, i32) {
    %c0_i32 = arith.constant 0 : i32
    %c0_i32_0 = arith.constant 0 : i32
    %c0_i32_1 = arith.constant 0 : i32
    return %c0_i32, %c0_i32_0 : i32, i32
  }
  func.func @transform_3(%arg0: i32) -> (i32, i32) {
    %c0_i32 = arith.constant 0 : i32
    %c0_i32_0 = arith.constant 0 : i32
    %c0_i32_1 = arith.constant 0 : i32
    return %c0_i32, %c0_i32_0 : i32, i32
  }
  func.func @transform_4(%arg0: i32) -> (i32, i32) {
    %c0_i32 = arith.constant 0 : i32
    %c0_i32_0 = arith.constant 0 : i32
    %c0_i32_1 = arith.constant 0 : i32
    return %c0_i32, %c0_i32_0 : i32, i32
  }
  func.func @transform_5(%arg0: i32) -> (i32, i32, i32) {
    %c0_i32 = arith.constant 0 : i32
    %c0_i32_0 = arith.constant 0 : i32
    %c0_i32_1 = arith.constant 0 : i32
    %c0_i32_2 = arith.constant 0 : i32
    return %c0_i32, %c0_i32_0, %c0_i32_1 : i32, i32, i32
  }
  func.func @transform_6(%arg0: i32) -> (i32, i32) {
    %c0_i32 = arith.constant 0 : i32
    %c0_i32_0 = arith.constant 0 : i32
    %c0_i32_1 = arith.constant 0 : i32
    return %c0_i32, %c0_i32_0 : i32, i32
  }
  func.func @transform_7(%arg0: i32) -> (i32, i32) {
    %c0_i32 = arith.constant 0 : i32
    %c0_i32_0 = arith.constant 0 : i32
    %c0_i32_1 = arith.constant 0 : i32
    return %c0_i32, %c0_i32_0 : i32, i32
  }
  func.func @transform_8(%arg0: i32) -> (i32, i32) {
    %c0_i32 = arith.constant 0 : i32
    %c0_i32_0 = arith.constant 0 : i32
    %c0_i32_1 = arith.constant 0 : i32
    return %c0_i32, %c0_i32_0 : i32, i32
  }
  func.func @transform_9(%arg0: i32) -> (i32, i32) {
    %c0_i32 = arith.constant 0 : i32
    %c0_i32_0 = arith.constant 0 : i32
    %c0_i32_1 = arith.constant 0 : i32
    return %c0_i32, %c0_i32_0 : i32, i32
  }
  func.func @transform_10(%arg0: i32) -> (i32, i32) {
    %c0_i32 = arith.constant 0 : i32
    %c0_i32_0 = arith.constant 0 : i32
    %c0_i32_1 = arith.constant 0 : i32
    return %c0_i32, %c0_i32_0 : i32, i32
  }
  func.func @transform_11(%arg0: i32) -> (i32, i32) {
    %c0_i32 = arith.constant 0 : i32
    %c0_i32_0 = arith.constant 0 : i32
    %c0_i32_1 = arith.constant 0 : i32
    return %c0_i32, %c0_i32_0 : i32, i32
  }
  func.func @transform_12(%arg0: i32) -> (i32, i32) {
    %c0_i32 = arith.constant 0 : i32
    %c0_i32_0 = arith.constant 0 : i32
    %c0_i32_1 = arith.constant 0 : i32
    return %c0_i32, %c0_i32_0 : i32, i32
  }
  func.func @transform_13(%arg0: i32) -> (i32, i32, i32) {
    %c0_i32 = arith.constant 0 : i32
    %c0_i32_0 = arith.constant 0 : i32
    %c0_i32_1 = arith.constant 0 : i32
    return %arg0, %c0_i32, %c0_i32_0 : i32, i32, i32
  }
}

</mosaic_0001>

<llo_original>
// kernel: transformer_block.1
$region0: #{transformer_block.1}
  #allocation0 [shape = 'u32[]', space=smem, size = 0x4, offset = 0x4, fixed_abs, tag = 'smem constant byte address 0x4 - core index']
  #allocation1 [shape = 'u32[144,128]{1,0:T(1,128)}', space=vmem, size = 0x12000, scoped, tag = 'internal scratch']
  %s0 = inlined_call_operand.vmem [shape: f32[2,64,128], index: 0, kind: input, shape index: {}]
  %s1 = inlined_call_operand.hbm [shape: f32[64,64], index: 1, kind: input, shape index: {}]
  %s2 = inlined_call_operand.vmem [shape: f32[1,128], index: 2, kind: input, shape index: {}]
  %s3 = inlined_call_operand.vmem [shape: f32[1,128], index: 3, kind: input, shape index: {}]
  %s4 = inlined_call_operand.hbm [shape: bf16[128,384], index: 4, kind: input, shape index: {}]
  %s5 = inlined_call_operand.hbm [shape: bf16[6,20,128], index: 5, kind: input, shape index: {}]
  %s6 = inlined_call_operand.vmem [shape: f32[1,128], index: 6, kind: input, shape index: {}]
  %s7 = inlined_call_operand.vmem [shape: f32[1,128], index: 7, kind: input, shape index: {}]
  %s8 = inlined_call_operand.vmem [shape: f32[1,128], index: 8, kind: input, shape index: {}]
  %s9 = inlined_call_operand.vmem [shape: bf16[128,512], index: 9, kind: input, shape index: {}]
  %s10 = inlined_call_operand.vmem [shape: f32[1,512], index: 10, kind: input, shape index: {}]
  %s11 = inlined_call_operand.hbm [shape: bf16[512,128], index: 11, kind: input, shape index: {}]
  %s12 = inlined_call_operand.vmem [shape: f32[1,128], index: 12, kind: input, shape index: {}]
  %s13 = inlined_call_operand.hbm [shape: f32[2,64,128], index: 13, kind: output, shape index: {}]
  %s14 = sld [smem:[#allocation0]]
  $region101: #{transformer_block.1} parent=0
    _
  %s16 = ssub.s32 1, %s14
  %s17 = scalar_select 0, %s16, %s14
  $region1: #{transformer_block.1} parent=0
    #allocation2 [shape = 'u8[32768]{0}', space=vmem, size = 0x8000, scoped, tag = 'input window, operand 1, single buffered']
    #allocation3 [shape = 's32[2]{0}', space=sflag, size = 0x8, scoped, tag = 'scoped memory for transformer_block.1']
    #allocation4 [shape = 's32[2]{0}', space=sflag, size = 0x8, scoped, tag = 'scoped memory for transformer_block.1']
    #allocation5 [shape = 'u8[98304]{0}', space=vmem, size = 0x18000, scoped, tag = 'input window, operand 4, single buffered']
    #allocation6 [shape = 's32[1]{0}', space=sflag, size = 0x4, scoped, tag = 'scoped memory for transformer_block.1']
    #allocation7 [shape = 'u8[36864]{0}', space=vmem, size = 0x9000, scoped, tag = 'input window, operand 5, single buffered']
    #allocation8 [shape = 'u8[131072]{0}', space=vmem, size = 0x20000, scoped, tag = 'input window, operand 11, single buffered']
    #allocation9 [shape = 's32[1]{0}', space=sflag, size = 0x4, scoped, tag = 'scoped memory for transformer_block.1']
    #allocation10 [shape = 'u8[65536]{0}', space=vmem, size = 0x10000, scoped, tag = 'output window, operand 0']
    %18 = vsyncpa [#allocation3], 0
    %19 = vsyncpa [#allocation6], 0
    %20 = vsyncpa [#allocation9], 0
    %21 = vsyncpa [#allocation4], 0
    %s22 = scalar_lea.sflag [#allocation4], 1
    %23 = vsyncpa %s22, 0
    loop: start=0, step=1, limit=4
    $region2: #{transformer_block.1} parent=1 // loop_pre_header
      _
    $region3: #{transformer_block.1} parent=1 // loop_header
      %s25 = sphi 0, %s29
      %p26 = scmp.ge.s32.totalorder %s25, 4
      %s35 = sphi 0, %s37
      %s38 = sphi 0, %s35
      %s39 = sphi 0, %s38
      %s55 = sphi 0, %s39
      %s59 = sphi 0, %s59
      %s61 = sphi 0, %s59
      %s62 = sphi 0, %s61
      %s76 = sphi 0, %s62
      %s80 = sphi 0, %s80
      %s82 = sphi 0, %s80
      %s83 = sphi 0, %s82
      %s97 = sphi 0, %s83
      %s101 = sphi 0, %s101
      %s103 = sphi 0, %s101
      %s104 = sphi 0, %s103
      %s118 = sphi 0, %s104
      %s122 = sphi 0, %s122
      %s124 = sphi 0, %s122
      %s125 = sphi 0, %s124
      %s139 = sphi 0, %s125
      %s143 = sphi 0, %s143
      %s145 = sphi 0, %s143
      %s146 = sphi 0, %s145
      %s160 = sphi 0, %s146
      %s164 = sphi 0, %s164
      %s166 = sphi 0, %s164
      %s167 = sphi 0, %s166
      %s181 = sphi 0, %s167
      %s185 = sphi 0, %s185
      %s187 = sphi 0, %s185
      %s188 = sphi 0, %s187
      %s202 = sphi 0, %s188
      %s206 = sphi 0, %s206
      %s208 = sphi 0, %s206
      %s209 = sphi 0, %s208
      %s223 = sphi 0, %s209
      %s227 = sphi 0, %s227
      %s229 = sphi 0, %s227
      %s230 = sphi 0, %s229
      %s244 = sphi 0, %s230
      %s248 = sphi 0, %s248
      %s250 = sphi 0, %s248
      %s251 = sphi 0, %s250
      %s265 = sphi 0, %s251
      %s269 = sphi 0, %s269
      %s271 = sphi 0, %s269
      %s272 = sphi 0, %s271
      %s286 = sphi 0, %s272
      %s290 = sphi 0, %s290
      %s292 = sphi 0, %s290
      %s293 = sphi 0, %s292
      %s307 = sphi 0, %s293
      %s313 = sphi 0, %s315
      %s316 = sphi 0, %s313
      %s317 = sphi 0, %s316
      %s333 = sphi 0, %s317
    $region4: #{transformer_block.1} parent=1 // loop_header_branch
      %28 = sbr.rel (%p26) target = $region8
    $region5: #{transformer_block.1} parent=1 // loop_body
      %s30 = ssub.s32 %s25, 1
      %s31 = ssub.s32 %s25, 2
      %s32 = sadd.s32 %s25, 1
      %s33 = ssub.s32 %s25, %s32
      %p34 = scmp.eq.s32.totalorder %s33, 0
      %s36 = sadd.s32 %s35, 1
      %s37 = scalar_select %p34, %s35, %s36
      %p40 = pneg %p34
      %p41 = scmp.eq.s32.totalorder %s25, 1
      %p42 = por %p40, %p41
      %p43 = scmp.ne.s32.totalorder %s35, %s38
      %p44 = scmp.eq.s32.totalorder %s25, 0
      %p45 = por %p43, %p44
      %p46 = scmp.ne.s32.totalorder %s35, %s38
      %p47 = scmp.eq.s32.totalorder %s30, 1
      %p48 = por %p46, %p47
      %p49 = scmp.ne.s32.totalorder %s38, %s39
      %p50 = scmp.eq.s32.totalorder %s30, 0
      %p51 = por %p49, %p50
      %p52 = scmp.ne.s32.totalorder %s38, %s39
      %p53 = scmp.eq.s32.totalorder %s31, 1
      %p54 = por %p52, %p53
      %p56 = scmp.ne.s32.totalorder %s39, %s55
      %p57 = scmp.eq.s32.totalorder %s31, 0
      %p58 = por %p56, %p57
      %s60 = sadd.s32 %s59, 1
      %p63 = scmp.eq.s32.totalorder %s25, 1
      %p64 = scmp.ne.s32.totalorder %s59, %s61
      %p65 = scmp.eq.s32.totalorder %s25, 0
      %p66 = por %p64, %p65
      %p67 = scmp.ne.s32.totalorder %s59, %s61
      %p68 = scmp.eq.s32.totalorder %s30, 1
      %p69 = por %p67, %p68
      %p70 = scmp.ne.s32.totalorder %s61, %s62
      %p71 = scmp.eq.s32.totalorder %s30, 0
      %p72 = por %p70, %p71
      %p73 = scmp.ne.s32.totalorder %s61, %s62
      %p74 = scmp.eq.s32.totalorder %s31, 1
      %p75 = por %p73, %p74
      %p77 = scmp.ne.s32.totalorder %s62, %s76
      %p78 = scmp.eq.s32.totalorder %s31, 0
      %p79 = por %p77, %p78
      %s81 = sadd.s32 %s80, 1
      %p84 = scmp.eq.s32.totalorder %s25, 1
      %p85 = scmp.ne.s32.totalorder %s80, %s82
      %p86 = scmp.eq.s32.totalorder %s25, 0
      %p87 = por %p85, %p86
      %p88 = scmp.ne.s32.totalorder %s80, %s82
      %p89 = scmp.eq.s32.totalorder %s30, 1
      %p90 = por %p88, %p89
      %p91 = scmp.ne.s32.totalorder %s82, %s83
      %p92 = scmp.eq.s32.totalorder %s30, 0
      %p93 = por %p91, %p92
      %p94 = scmp.ne.s32.totalorder %s82, %s83
      %p95 = scmp.eq.s32.totalorder %s31, 1
      %p96 = por %p94, %p95
      %p98 = scmp.ne.s32.totalorder %s83, %s97
      %p99 = scmp.eq.s32.totalorder %s31, 0
      %p100 = por %p98, %p99
      %s102 = sadd.s32 %s101, 1
      %p105 = scmp.eq.s32.totalorder %s25, 1
      %p106 = scmp.ne.s32.totalorder %s101, %s103
      %p107 = scmp.eq.s32.totalorder %s25, 0
      %p108 = por %p106, %p107
      %p109 = scmp.ne.s32.totalorder %s101, %s103
      %p110 = scmp.eq.s32.totalorder %s30, 1
      %p111 = por %p109, %p110
      %p112 = scmp.ne.s32.totalorder %s103, %s104
      %p113 = scmp.eq.s32.totalorder %s30, 0
      %p114 = por %p112, %p113
      %p115 = scmp.ne.s32.totalorder %s103, %s104
      %p116 = scmp.eq.s32.totalorder %s31, 1
      %p117 = por %p115, %p116
      %p119 = scmp.ne.s32.totalorder %s104, %s118
      %p120 = scmp.eq.s32.totalorder %s31, 0
      %p121 = por %p119, %p120
      %s123 = sadd.s32 %s122, 1
      %p126 = scmp.eq.s32.totalorder %s25, 1
      %p127 = scmp.ne.s32.totalorder %s122, %s124
      %p128 = scmp.eq.s32.totalorder %s25, 0
      %p129 = por %p127, %p128
      %p130 = scmp.ne.s32.totalorder %s122, %s124
      %p131 = scmp.eq.s32.totalorder %s30, 1
      %p132 = por %p130, %p131
      %p133 = scmp.ne.s32.totalorder %s124, %s125
      %p134 = scmp.eq.s32.totalorder %s30, 0
      %p135 = por %p133, %p134
      %p136 = scmp.ne.s32.totalorder %s124, %s125
      %p137 = scmp.eq.s32.totalorder %s31, 1
      %p138 = por %p136, %p137
      %p140 = scmp.ne.s32.totalorder %s125, %s139
      %p141 = scmp.eq.s32.totalorder %s31, 0
      %p142 = por %p140, %p141
      %s144 = sadd.s32 %s143, 1
      %p147 = scmp.eq.s32.totalorder %s25, 1
      %p148 = scmp.ne.s32.totalorder %s143, %s145
      %p149 = scmp.eq.s32.totalorder %s25, 0
      %p150 = por %p148, %p149
      %p151 = scmp.ne.s32.totalorder %s143, %s145
      %p152 = scmp.eq.s32.totalorder %s30, 1
      %p153 = por %p151, %p152
      %p154 = scmp.ne.s32.totalorder %s145, %s146
      %p155 = scmp.eq.s32.totalorder %s30, 0
      %p156 = por %p154, %p155
      %p157 = scmp.ne.s32.totalorder %s145, %s146
      %p158 = scmp.eq.s32.totalorder %s31, 1
      %p159 = por %p157, %p158
      %p161 = scmp.ne.s32.totalorder %s146, %s160
      %p162 = scmp.eq.s32.totalorder %s31, 0
      %p163 = por %p161, %p162
      %s165 = sadd.s32 %s164, 1
      %p168 = scmp.eq.s32.totalorder %s25, 1
      %p169 = scmp.ne.s32.totalorder %s164, %s166
      %p170 = scmp.eq.s32.totalorder %s25, 0
      %p171 = por %p169, %p170
      %p172 = scmp.ne.s32.totalorder %s164, %s166
      %p173 = scmp.eq.s32.totalorder %s30, 1
      %p174 = por %p172, %p173
      %p175 = scmp.ne.s32.totalorder %s166, %s167
      %p176 = scmp.eq.s32.totalorder %s30, 0
      %p177 = por %p175, %p176
      %p178 = scmp.ne.s32.totalorder %s166, %s167
      %p179 = scmp.eq.s32.totalorder %s31, 1
      %p180 = por %p178, %p179
      %p182 = scmp.ne.s32.totalorder %s167, %s181
      %p183 = scmp.eq.s32.totalorder %s31, 0
      %p184 = por %p182, %p183
      %s186 = sadd.s32 %s185, 1
      %p189 = scmp.eq.s32.totalorder %s25, 1
      %p190 = scmp.ne.s32.totalorder %s185, %s187
      %p191 = scmp.eq.s32.totalorder %s25, 0
      %p192 = por %p190, %p191
      %p193 = scmp.ne.s32.totalorder %s185, %s187
      %p194 = scmp.eq.s32.totalorder %s30, 1
      %p195 = por %p193, %p194
      %p196 = scmp.ne.s32.totalorder %s187, %s188
      %p197 = scmp.eq.s32.totalorder %s30, 0
      %p198 = por %p196, %p197
      %p199 = scmp.ne.s32.totalorder %s187, %s188
      %p200 = scmp.eq.s32.totalorder %s31, 1
      %p201 = por %p199, %p200
      %p203 = scmp.ne.s32.totalorder %s188, %s202
      %p204 = scmp.eq.s32.totalorder %s31, 0
      %p205 = por %p203, %p204
      %s207 = sadd.s32 %s206, 1
      %p210 = scmp.eq.s32.totalorder %s25, 1
      %p211 = scmp.ne.s32.totalorder %s206, %s208
      %p212 = scmp.eq.s32.totalorder %s25, 0
      %p213 = por %p211, %p212
      %p214 = scmp.ne.s32.totalorder %s206, %s208
      %p215 = scmp.eq.s32.totalorder %s30, 1
      %p216 = por %p214, %p215
      %p217 = scmp.ne.s32.totalorder %s208, %s209
      %p218 = scmp.eq.s32.totalorder %s30, 0
      %p219 = por %p217, %p218
      %p220 = scmp.ne.s32.totalorder %s208, %s209
      %p221 = scmp.eq.s32.totalorder %s31, 1
      %p222 = por %p220, %p221
      %p224 = scmp.ne.s32.totalorder %s209, %s223
      %p225 = scmp.eq.s32.totalorder %s31, 0
      %p226 = por %p224, %p225
      %s228 = sadd.s32 %s227, 1
      %p231 = scmp.eq.s32.totalorder %s25, 1
      %p232 = scmp.ne.s32.totalorder %s227, %s229
      %p233 = scmp.eq.s32.totalorder %s25, 0
      %p234 = por %p232, %p233
      %p235 = scmp.ne.s32.totalorder %s227, %s229
      %p236 = scmp.eq.s32.totalorder %s30, 1
      %p237 = por %p235, %p236
      %p238 = scmp.ne.s32.totalorder %s229, %s230
      %p239 = scmp.eq.s32.totalorder %s30, 0
      %p240 = por %p238, %p239
      %p241 = scmp.ne.s32.totalorder %s229, %s230
      %p242 = scmp.eq.s32.totalorder %s31, 1
      %p243 = por %p241, %p242
      %p245 = scmp.ne.s32.totalorder %s230, %s244
      %p246 = scmp.eq.s32.totalorder %s31, 0
      %p247 = por %p245, %p246
      %s249 = sadd.s32 %s248, 1
      %p252 = scmp.eq.s32.totalorder %s25, 1
      %p253 = scmp.ne.s32.totalorder %s248, %s250
      %p254 = scmp.eq.s32.totalorder %s25, 0
      %p255 = por %p253, %p254
      %p256 = scmp.ne.s32.totalorder %s248, %s250
      %p257 = scmp.eq.s32.totalorder %s30, 1
      %p258 = por %p256, %p257
      %p259 = scmp.ne.s32.totalorder %s250, %s251
      %p260 = scmp.eq.s32.totalorder %s30, 0
      %p261 = por %p259, %p260
      %p262 = scmp.ne.s32.totalorder %s250, %s251
      %p263 = scmp.eq.s32.totalorder %s31, 1
      %p264 = por %p262, %p263
      %p266 = scmp.ne.s32.totalorder %s251, %s265
      %p267 = scmp.eq.s32.totalorder %s31, 0
      %p268 = por %p266, %p267
      %s270 = sadd.s32 %s269, 1
      %p273 = scmp.eq.s32.totalorder %s25, 1
      %p274 = scmp.ne.s32.totalorder %s269, %s271
      %p275 = scmp.eq.s32.totalorder %s25, 0
      %p276 = por %p274, %p275
      %p277 = scmp.ne.s32.totalorder %s269, %s271
      %p278 = scmp.eq.s32.totalorder %s30, 1
      %p279 = por %p277, %p278
      %p280 = scmp.ne.s32.totalorder %s271, %s272
      %p281 = scmp.eq.s32.totalorder %s30, 0
      %p282 = por %p280, %p281
      %p283 = scmp.ne.s32.totalorder %s271, %s272
      %p284 = scmp.eq.s32.totalorder %s31, 1
      %p285 = por %p283, %p284
      %p287 = scmp.ne.s32.totalorder %s272, %s286
      %p288 = scmp.eq.s32.totalorder %s31, 0
      %p289 = por %p287, %p288
      %s291 = sadd.s32 %s290, 1
      %p294 = scmp.eq.s32.totalorder %s25, 1
      %p295 = scmp.ne.s32.totalorder %s290, %s292
      %p296 = scmp.eq.s32.totalorder %s25, 0
      %p297 = por %p295, %p296
      %p298 = scmp.ne.s32.totalorder %s290, %s292
      %p299 = scmp.eq.s32.totalorder %s30, 1
      %p300 = por %p298, %p299
      %p301 = scmp.ne.s32.totalorder %s292, %s293
      %p302 = scmp.eq.s32.totalorder %s30, 0
      %p303 = por %p301, %p302
      %p304 = scmp.ne.s32.totalorder %s292, %s293
      %p305 = scmp.eq.s32.totalorder %s31, 1
      %p306 = por %p304, %p305
      %p308 = scmp.ne.s32.totalorder %s293, %s307
      %p309 = scmp.eq.s32.totalorder %s31, 0
      %p310 = por %p308, %p309
      %s311 = ssub.s32 %s25, %s32
      %p312 = scmp.eq.s32.totalorder %s311, 0
      %s314 = sadd.s32 %s313, 1
      %s315 = scalar_select %p312, %s313, %s314
      %p318 = pneg %p312
      %p319 = scmp.eq.s32.totalorder %s25, 1
      %p320 = por %p318, %p319
      %p321 = scmp.ne.s32.totalorder %s313, %s316
      %p322 = scmp.eq.s32.totalorder %s25, 0
      %p323 = por %p321, %p322
      %p324 = scmp.ne.s32.totalorder %s313, %s316
      %p325 = scmp.eq.s32.totalorder %s30, 1
      %p326 = por %p324, %p325
      %p327 = scmp.ne.s32.totalorder %s316, %s317
      %p328 = scmp.eq.s32.totalorder %s30, 0
      %p329 = por %p327, %p328
      %p330 = scmp.ne.s32.totalorder %s316, %s317
      %p331 = scmp.eq.s32.totalorder %s31, 1
      %p332 = por %p330, %p331
      %p334 = scmp.ne.s32.totalorder %s317, %s333
      %p335 = scmp.eq.s32.totalorder %s31, 0
      %p336 = por %p334, %p335
      %p337 = scmp.le.s32.totalorder 1, %s25
      %p338 = scmp.lt.s32.totalorder %s25, 3
      %p339 = pnand %p337, %p338
      %p340 = pneg %p339
      // Predicated region
      $region9: #{transformer_block.1} parent=5 // pred_check
        _
      $region10: #{transformer_block.1} parent=5 // pred_check_branch
        %342 = sbr.rel (%p339) target = $region12
      $region11: #{transformer_block.1} parent=5 // pred_region
        %s343 = ssub.s32 %s25, 1
        // Predicated region
        $region13: #{transformer_block.1} parent=11 // pred_check
          %p344 = pneg %p72
        $region14: #{transformer_block.1} parent=11 // pred_check_branch
          %346 = sbr.rel (%p344) target = $region16
        $region15: #{transformer_block.1} parent=11 // pred_region
          %s348 = ssub.s32 1024, 1024
          %349 = vsyncadd [#allocation3], %s348
          %s350 = sshll.u32 [#allocation2], 4
          %s351 = int_to_ptr.vmem [resolvable:$true] %s350
          %356 = dma.hbm_to_vmem [thread:$0]  %s1, 1024, %s351, [#allocation3], 128, 128, 8
        $region16: #{transformer_block.1} parent=11 // pred_fallthru
          _
        // Predicated region
        $region17: #{transformer_block.1} parent=11 // pred_check
          %p357 = pneg %p93
        $region18: #{transformer_block.1} parent=11 // pred_check_branch
          %359 = sbr.rel (%p357) target = $region20
        $region19: #{transformer_block.1} parent=11 // pred_region
          _
        $region20: #{transformer_block.1} parent=11 // pred_fallthru
          _
        // Predicated region
        $region21: #{transformer_block.1} parent=11 // pred_check
          %p360 = pneg %p114
        $region22: #{transformer_block.1} parent=11 // pred_check_branch
          %362 = sbr.rel (%p360) target = $region24
        $region23: #{transformer_block.1} parent=11 // pred_region
          _
        $region24: #{transformer_block.1} parent=11 // pred_fallthru
          _
        // Predicated region
        $region25: #{transformer_block.1} parent=11 // pred_check
          %p363 = pneg %p135
        $region26: #{transformer_block.1} parent=11 // pred_check_branch
          %365 = sbr.rel (%p363) target = $region28
        $region27: #{transformer_block.1} parent=11 // pred_region
          %s367 = ssub.s32 3072, 3072
          %368 = vsyncadd [#allocation6], %s367
          %s369 = sshll.u32 [#allocation5], 4
          %s370 = int_to_ptr.vmem [resolvable:$true] %s369
          %375 = dma.hbm_to_vmem [thread:$0]  %s4, 3072, %s370, [#allocation6], 192, 192, 12
        $region28: #{transformer_block.1} parent=11 // pred_fallthru
          _
        // Predicated region
        $region29: #{transformer_block.1} parent=11 // pred_check
          %p376 = pneg %p156
        $region30: #{transformer_block.1} parent=11 // pred_check_branch
          %378 = sbr.rel (%p376) target = $region32
        $region31: #{transformer_block.1} parent=11 // pred_region
          %s380 = ssub.s32 1152, 1152
          %381 = vsyncadd [#allocation6], %s380
          %s382 = sshll.u32 [#allocation7], 4
          %s383 = int_to_ptr.vmem [resolvable:$true] %s382
          %388 = dma.hbm_to_vmem [thread:$0]  %s5, 1152, %s383, [#allocation6], 64, 64, 4
        $region32: #{transformer_block.1} parent=11 // pred_fallthru
          _
        // Predicated region
        $region33: #{transformer_block.1} parent=11 // pred_check
          %p389 = pneg %p177
        $region34: #{transformer_block.1} parent=11 // pred_check_branch
          %391 = sbr.rel (%p389) target = $region36
        $region35: #{transformer_block.1} parent=11 // pred_region
          _
        $region36: #{transformer_block.1} parent=11 // pred_fallthru
          _
        // Predicated region
        $region37: #{transformer_block.1} parent=11 // pred_check
          %p392 = pneg %p198
        $region38: #{transformer_block.1} parent=11 // pred_check_branch
          %394 = sbr.rel (%p392) target = $region40
        $region39: #{transformer_block.1} parent=11 // pred_region
          _
        $region40: #{transformer_block.1} parent=11 // pred_fallthru
          _
        // Predicated region
        $region41: #{transformer_block.1} parent=11 // pred_check
          %p395 = pneg %p219
        $region42: #{transformer_block.1} parent=11 // pred_check_branch
          %397 = sbr.rel (%p395) target = $region44
        $region43: #{transformer_block.1} parent=11 // pred_region
          _
        $region44: #{transformer_block.1} parent=11 // pred_fallthru
          _
        // Predicated region
        $region45: #{transformer_block.1} parent=11 // pred_check
          %p398 = pneg %p240
        $region46: #{transformer_block.1} parent=11 // pred_check_branch
          %400 = sbr.rel (%p398) target = $region48
        $region47: #{transformer_block.1} parent=11 // pred_region
          _
        $region48: #{transformer_block.1} parent=11 // pred_fallthru
          _
        // Predicated region
        $region49: #{transformer_block.1} parent=11 // pred_check
          %p401 = pneg %p261
        $region50: #{transformer_block.1} parent=11 // pred_check_branch
          %403 = sbr.rel (%p401) target = $region52
        $region51: #{transformer_block.1} parent=11 // pred_region
          _
        $region52: #{transformer_block.1} parent=11 // pred_fallthru
          _
        // Predicated region
        $region53: #{transformer_block.1} parent=11 // pred_check
          %p404 = pneg %p282
        $region54: #{transformer_block.1} parent=11 // pred_check_branch
          %406 = sbr.rel (%p404) target = $region56
        $region55: #{transformer_block.1} parent=11 // pred_region
          %s408 = ssub.s32 4096, 4096
          %409 = vsyncadd [#allocation9], %s408
          %s410 = sshll.u32 [#allocation8], 4
          %s411 = int_to_ptr.vmem [resolvable:$true] %s410
          %416 = dma.hbm_to_vmem [thread:$0]  %s11, 4096, %s411, [#allocation9], 64, 64, 4
        $region56: #{transformer_block.1} parent=11 // pred_fallthru
          _
        // Predicated region
        $region57: #{transformer_block.1} parent=11 // pred_check
          %p417 = pneg %p303
        $region58: #{transformer_block.1} parent=11 // pred_check_branch
          %419 = sbr.rel (%p417) target = $region60
        $region59: #{transformer_block.1} parent=11 // pred_region
          _
        $region60: #{transformer_block.1} parent=11 // pred_fallthru
          _
      $region12: #{transformer_block.1} parent=5 // pred_fallthru
        _
      %p420 = scmp.lt.s32.totalorder %s25, 2
      // Predicated region
      $region61: #{transformer_block.1} parent=5 // pred_check
        %p421 = pneg %p420
      $region62: #{transformer_block.1} parent=5 // pred_check_branch
        %423 = sbr.rel (%p421) target = $region64
      $region63: #{transformer_block.1} parent=5 // pred_region
        // Predicated region
        $region65: #{transformer_block.1} parent=63 // pred_check
          %p424 = pneg %p45
        $region66: #{transformer_block.1} parent=63 // pred_check_branch
          %426 = sbr.rel (%p424) target = $region68
        $region67: #{transformer_block.1} parent=63 // pred_region
          %p427 = scmp.lt.s32.totalorder %s25, 1
          %s428 = scalar_select %p427, %s25, 1
          %s429 = smul.addr %s428, 8
          %s430 = smul.addr %s429, 8
          %s431 = scalar_lea.vmem %s0, %s430
        $region68: #{transformer_block.1} parent=63 // pred_fallthru
          _
      $region64: #{transformer_block.1} parent=5 // pred_fallthru
        _
      %p432 = scmp.le.s32.totalorder 1, %s25
      %p433 = scmp.lt.s32.totalorder %s25, 3
      %p434 = pnand %p432, %p433
      %p435 = pneg %p434
      // Predicated region
      $region69: #{transformer_block.1} parent=5 // pred_check
        _
      $region70: #{transformer_block.1} parent=5 // pred_check_branch
        %437 = sbr.rel (%p434) target = $region72
      $region71: #{transformer_block.1} parent=5 // pred_region
        %s438 = ssub.s32 %s25, 1
        // Predicated region
        $region73: #{transformer_block.1} parent=71 // pred_check
          %p439 = pneg %p72
        $region74: #{transformer_block.1} parent=71 // pred_check_branch
          %441 = sbr.rel (%p439) target = $region76
        $region75: #{transformer_block.1} parent=71 // pred_region
          %442 = dma.done [#allocation3], 1024
        $region76: #{transformer_block.1} parent=71 // pred_fallthru
          _
        // Predicated region
        $region77: #{transformer_block.1} parent=71 // pred_check
          %p443 = pneg %p135
        $region78: #{transformer_block.1} parent=71 // pred_check_branch
          %445 = sbr.rel (%p443) target = $region80
        $region79: #{transformer_block.1} parent=71 // pred_region
          %446 = dma.done [#allocation6], 3072
        $region80: #{transformer_block.1} parent=71 // pred_fallthru
          _
        // Predicated region
        $region81: #{transformer_block.1} parent=71 // pred_check
          %p447 = pneg %p156
        $region82: #{transformer_block.1} parent=71 // pred_check_branch
          %449 = sbr.rel (%p447) target = $region84
        $region83: #{transformer_block.1} parent=71 // pred_region
          %450 = dma.done [#allocation6], 1152
        $region84: #{transformer_block.1} parent=71 // pred_fallthru
          _
        // Predicated region
        $region85: #{transformer_block.1} parent=71 // pred_check
          %p451 = pneg %p282
        $region86: #{transformer_block.1} parent=71 // pred_check_branch
          %453 = sbr.rel (%p451) target = $region88
        $region87: #{transformer_block.1} parent=71 // pred_region
          %454 = dma.done [#allocation9], 4096
        $region88: #{transformer_block.1} parent=71 // pred_fallthru
          _
        %p455 = scmp.lt.s32.totalorder %s30, 1
        %s456 = scalar_select %p455, %s30, 1
        %s457 = smul.addr %s456, 8
        %s458 = smul.addr %s457, 8
        %s459 = scalar_lea.vmem %s0, %s458
        %p460 = pneg %p51
        %p461 = pneg %p48
        %p462 = pneg %p72
        %p463 = pneg %p69
        %p464 = pneg %p93
        %p465 = pneg %p90
        %p466 = pneg %p114
        %p467 = pneg %p111
        %p468 = pneg %p135
        %p469 = pneg %p132
        %p470 = pneg %p156
        %p471 = pneg %p153
        %p472 = pneg %p177
        %p473 = pneg %p174
        %p474 = pneg %p198
        %p475 = pneg %p195
        %p476 = pneg %p219
        %p477 = pneg %p216
        %p478 = pneg %p240
        %p479 = pneg %p237
        %p480 = pneg %p261
        %p481 = pneg %p258
        %p482 = pneg %p282
        %p483 = pneg %p279
        %p484 = pneg %p303
        %p485 = pneg %p300
        %p486 = pneg %p329
        %p487 = pneg %p326
        %s488 = sand.u32 %s316, 1
        %s489 = scalar_lea.sflag [#allocation4], %s488
        %s490 = sand.u32 %s316, 1
        %s491 = smul.addr %s490, 64
        %s492 = scalar_lea.vmem [#allocation10], %s491
        %p493 = scmp.lt.s32.totalorder %s30, 1
        %s494 = scalar_select %p493, %s30, 1
        %s495 = smul.addr %s494, 8
        %s496 = smul.addr %s495, 8
        %s497 = scalar_lea.vmem %s0, %s496
        %v499 = vld [vmem:[%s497] sm:$0xff]
        %v500 = vld [vmem:[%s497 + $0x8] sm:$0xff]
        %v501 = vld [vmem:[%s497 + $0x10] sm:$0xff]
        %v502 = vld [vmem:[%s497 + $0x18] sm:$0xff]
        %v503 = vld [vmem:[%s497 + $0x20] sm:$0xff]
        %v504 = vld [vmem:[%s497 + $0x28] sm:$0xff]
        %v505 = vld [vmem:[%s497 + $0x30] sm:$0xff]
        %v506 = vld [vmem:[%s497 + $0x38] sm:$0xff]
        %v507 = vlaneseq
        %v508 = vand.u32 %v507, 127
        %vm509 = vcmp.lt.s32.totalorder %v508, 120
        %v510 = vsel %vm509, 1, 0
        %v511 = vcvt.s32.f32 %v510
        %v512 = vld [vmem:[%s2] sm:$0x1]
        %v513 = vld [vmem:[%s3] sm:$0x1]
        %514 = vadd.xlane.f32.xlu0 %v499
        %v515 = vpop.xlane.xlu0 %514
        %516 = vadd.xlane.f32.xlu0 %v500
        %v517 = vpop.xlane.xlu0 %516
        %518 = vadd.xlane.f32.xlu0 %v501
        %v519 = vpop.xlane.xlu0 %518
        %520 = vadd.xlane.f32.xlu0 %v502
        %v521 = vpop.xlane.xlu0 %520
        %522 = vadd.xlane.f32.xlu0 %v503
        %v523 = vpop.xlane.xlu0 %522
        %524 = vadd.xlane.f32.xlu0 %v504
        %v525 = vpop.xlane.xlu0 %524
        %526 = vadd.xlane.f32.xlu0 %v505
        %v527 = vpop.xlane.xlu0 %526
        %528 = vadd.xlane.f32.xlu0 %v506
        %v529 = vpop.xlane.xlu0 %528
        %v530 = vmul.f32 %v515, 0.008333334
        %v531 = vmul.f32 %v517, 0.008333334
        %v532 = vmul.f32 %v519, 0.008333334
        %v533 = vmul.f32 %v521, 0.008333334
        %v534 = vmul.f32 %v523, 0.008333334
        %v535 = vmul.f32 %v525, 0.008333334
        %v536 = vmul.f32 %v527, 0.008333334
        %v537 = vmul.f32 %v529, 0.008333334
        %v538 = vsub.f32 %v499, %v530
        %v539 = vsub.f32 %v500, %v531
        %v540 = vsub.f32 %v501, %v532
        %v541 = vsub.f32 %v502, %v533
        %v542 = vsub.f32 %v503, %v534
        %v543 = vsub.f32 %v504, %v535
        %v544 = vsub.f32 %v505, %v536
        %v545 = vsub.f32 %v506, %v537
        %v546 = vmul.f32 %v538, %v511
        %v547 = vmul.f32 %v539, %v511
        %v548 = vmul.f32 %v540, %v511
        %v549 = vmul.f32 %v541, %v511
        %v550 = vmul.f32 %v542, %v511
        %v551 = vmul.f32 %v543, %v511
        %v552 = vmul.f32 %v544, %v511
        %v553 = vmul.f32 %v545, %v511
        %v554 = vmul.f32 %v546, %v546
        %v555 = vmul.f32 %v547, %v547
        %v556 = vmul.f32 %v548, %v548
        %v557 = vmul.f32 %v549, %v549
        %v558 = vmul.f32 %v550, %v550
        %v559 = vmul.f32 %v551, %v551
        %v560 = vmul.f32 %v552, %v552
        %v561 = vmul.f32 %v553, %v553
        %562 = vadd.xlane.f32.xlu0 %v554
        %v563 = vpop.xlane.xlu0 %562
        %564 = vadd.xlane.f32.xlu0 %v555
        %v565 = vpop.xlane.xlu0 %564
        %566 = vadd.xlane.f32.xlu0 %v556
        %v567 = vpop.xlane.xlu0 %566
        %568 = vadd.xlane.f32.xlu0 %v557
        %v569 = vpop.xlane.xlu0 %568
        %570 = vadd.xlane.f32.xlu0 %v558
        %v571 = vpop.xlane.xlu0 %570
        %572 = vadd.xlane.f32.xlu0 %v559
        %v573 = vpop.xlane.xlu0 %572
        %574 = vadd.xlane.f32.xlu0 %v560
        %v575 = vpop.xlane.xlu0 %574
        %576 = vadd.xlane.f32.xlu0 %v561
        %v577 = vpop.xlane.xlu0 %576
        %v578 = vmul.f32 %v563, 0.008333334
        %v579 = vmul.f32 %v565, 0.008333334
        %v580 = vmul.f32 %v567, 0.008333334
        %v581 = vmul.f32 %v569, 0.008333334
        %v582 = vmul.f32 %v571, 0.008333334
        %v583 = vmul.f32 %v573, 0.008333334
        %v584 = vmul.f32 %v575, 0.008333334
        %v585 = vmul.f32 %v577, 0.008333334
        %v586 = vadd.f32 %v578, 1e-12
        %v587 = vadd.f32 %v579, 1e-12
        %v588 = vadd.f32 %v580, 1e-12
        %v589 = vadd.f32 %v581, 1e-12
        %v590 = vadd.f32 %v582, 1e-12
        %v591 = vadd.f32 %v583, 1e-12
        %v592 = vadd.f32 %v584, 1e-12
        %v593 = vadd.f32 %v585, 1e-12
        %v594 = vrsqrt.pop %v586
        %v595 = vrsqrt.pop %v587
        %v596 = vrsqrt.pop %v588
        %v597 = vrsqrt.pop %v589
        %v598 = vrsqrt.pop %v590
        %v599 = vrsqrt.pop %v591
        %v600 = vrsqrt.pop %v592
        %v601 = vrsqrt.pop %v593
        %v602 = vmul.f32 %v546, %v594
        %v603 = vmul.f32 %v547, %v595
        %v604 = vmul.f32 %v548, %v596
        %v605 = vmul.f32 %v549, %v597
        %v606 = vmul.f32 %v550, %v598
        %v607 = vmul.f32 %v551, %v599
        %v608 = vmul.f32 %v552, %v600
        %v609 = vmul.f32 %v553, %v601
        %v611 = vlaneseq
        %v612 = vshrl.u32 %v611, 7
        %v613 = vsub.s32 0, %v612
        %v614 = vrot.slane %v512, %v613
        %v616 = vmul.f32 %v602, %v614
        %v617 = vmul.f32 %v603, %v614
        %v618 = vmul.f32 %v604, %v614
        %v619 = vmul.f32 %v605, %v614
        %v620 = vmul.f32 %v606, %v614
        %v621 = vmul.f32 %v607, %v614
        %v622 = vmul.f32 %v608, %v614
        %v623 = vmul.f32 %v609, %v614
        %v625 = vlaneseq
        %v626 = vshrl.u32 %v625, 7
        %v627 = vsub.s32 0, %v626
        %v628 = vrot.slane %v513, %v627
        %v630 = vadd.f32 %v616, %v628
        %v631 = vadd.f32 %v617, %v628
        %v632 = vadd.f32 %v618, %v628
        %v633 = vadd.f32 %v619, %v628
        %v634 = vadd.f32 %v620, %v628
        %v635 = vadd.f32 %v621, %v628
        %v636 = vadd.f32 %v622, %v628
        %v637 = vadd.f32 %v623, %v628
        %v638 = vpack.c.bf16 %v631, %v630
        %v639 = vpack.c.bf16 %v633, %v632
        %v640 = vpack.c.bf16 %v635, %v634
        %v641 = vpack.c.bf16 %v637, %v636
        %v642 = vld [vmem:[#allocation5] sm:$0xff]
        %v643 = vld [vmem:[#allocation5 + $0x8] sm:$0xf]
        %v644 = vld [vmem:[#allocation5 + $0xc] sm:$0xff]
        %v645 = vld [vmem:[#allocation5 + $0x14] sm:$0xf]
        %v646 = vld [vmem:[#allocation5 + $0x18] sm:$0xff]
        %v647 = vld [vmem:[#allocation5 + $0x20] sm:$0xf]
        %v648 = vld [vmem:[#allocation5 + $0x24] sm:$0xff]
        %v649 = vld [vmem:[#allocation5 + $0x2c] sm:$0xf]
        %v650 = vld [vmem:[#allocation5 + $0x30] sm:$0xff]
        %v651 = vld [vmem:[#allocation5 + $0x38] sm:$0xf]
        %v652 = vld [vmem:[#allocation5 + $0x3c] sm:$0xff]
        %v653 = vld [vmem:[#allocation5 + $0x44] sm:$0xf]
        %v654 = vld [vmem:[#allocation5 + $0x48] sm:$0xff]
        %v655 = vld [vmem:[#allocation5 + $0x50] sm:$0xf]
        %v656 = vld [vmem:[#allocation5 + $0x54] sm:$0xff]
        %v657 = vld [vmem:[#allocation5 + $0x5c] sm:$0xf]
        %v658 = vld [vmem:[#allocation5 + $0x60] sm:$0xff]
        %v659 = vld [vmem:[#allocation5 + $0x68] sm:$0xf]
        %v660 = vld [vmem:[#allocation5 + $0x6c] sm:$0xff]
        %v661 = vld [vmem:[#allocation5 + $0x74] sm:$0xf]
        %v662 = vld [vmem:[#allocation5 + $0x78] sm:$0xff]
        %v663 = vld [vmem:[#allocation5 + $0x80] sm:$0xf]
        %v664 = vld [vmem:[#allocation5 + $0x84] sm:$0xff]
        %v665 = vld [vmem:[#allocation5 + $0x8c] sm:$0xf]
        %v666 = vld [vmem:[#allocation5 + $0x90] sm:$0xff]
        %v667 = vld [vmem:[#allocation5 + $0x98] sm:$0xf]
        %v668 = vld [vmem:[#allocation5 + $0x9c] sm:$0xff]
        %v669 = vld [vmem:[#allocation5 + $0xa4] sm:$0xf]
        %v670 = vld [vmem:[#allocation5 + $0xa8] sm:$0xff]
        %v671 = vld [vmem:[#allocation5 + $0xb0] sm:$0xf]
        %v672 = vld [vmem:[#allocation5 + $0xb4] sm:$0xff]
        %v673 = vld [vmem:[#allocation5 + $0xbc] sm:$0xf]
        %v706 = vunpack.c.l.b16 %v642
        %v707 = vunpack.c.h.b16 %v642
        %v708 = vunpack.c.l.b16 %v643
        %v709 = vunpack.c.l.b16 %v644
        %v710 = vunpack.c.h.b16 %v644
        %v711 = vunpack.c.l.b16 %v645
        %v712 = vunpack.c.l.b16 %v646
        %v713 = vunpack.c.h.b16 %v646
        %v714 = vunpack.c.l.b16 %v647
        %v715 = vunpack.c.l.b16 %v648
        %v716 = vunpack.c.h.b16 %v648
        %v717 = vunpack.c.l.b16 %v649
        %v718 = vunpack.c.l.b16 %v650
        %v719 = vunpack.c.h.b16 %v650
        %v720 = vunpack.c.l.b16 %v651
        %v721 = vunpack.c.l.b16 %v652
        %v722 = vunpack.c.h.b16 %v652
        %v723 = vunpack.c.l.b16 %v653
        %v724 = vunpack.c.l.b16 %v654
        %v725 = vunpack.c.h.b16 %v654
        %v726 = vunpack.c.l.b16 %v655
        %v727 = vunpack.c.l.b16 %v656
        %v728 = vunpack.c.h.b16 %v656
        %v729 = vunpack.c.l.b16 %v657
        %v730 = vunpack.c.l.b16 %v658
        %v731 = vunpack.c.h.b16 %v658
        %v732 = vunpack.c.l.b16 %v659
        %v733 = vunpack.c.l.b16 %v660
        %v734 = vunpack.c.h.b16 %v660
        %v735 = vunpack.c.l.b16 %v661
        %v736 = vunpack.c.l.b16 %v662
        %v737 = vunpack.c.h.b16 %v662
        %v738 = vunpack.c.l.b16 %v663
        %v739 = vunpack.c.l.b16 %v664
        %v740 = vunpack.c.h.b16 %v664
        %v741 = vunpack.c.l.b16 %v665
        %v742 = vunpack.c.l.b16 %v666
        %v743 = vunpack.c.h.b16 %v666
        %v744 = vunpack.c.l.b16 %v667
        %v745 = vunpack.c.l.b16 %v668
        %v746 = vunpack.c.h.b16 %v668
        %v747 = vunpack.c.l.b16 %v669
        %v748 = vunpack.c.l.b16 %v670
        %v749 = vunpack.c.h.b16 %v670
        %v750 = vunpack.c.l.b16 %v671
        %v751 = vunpack.c.l.b16 %v672
        %v752 = vunpack.c.h.b16 %v672
        %v753 = vunpack.c.l.b16 %v673
        %v754 = vpack.c.b16 %v709, %v706
        %v755 = vpack.c.b16 %v710, %v707
        %v756 = vpack.c.b16 %v711, %v708
        %v757 = vpack.c.b16 %v715, %v712
        %v758 = vpack.c.b16 %v716, %v713
        %v759 = vpack.c.b16 %v717, %v714
        %v760 = vpack.c.b16 %v721, %v718
        %v761 = vpack.c.b16 %v722, %v719
        %v762 = vpack.c.b16 %v723, %v720
        %v763 = vpack.c.b16 %v727, %v724
        %v764 = vpack.c.b16 %v728, %v725
        %v765 = vpack.c.b16 %v729, %v726
        %v766 = vpack.c.b16 %v733, %v730
        %v767 = vpack.c.b16 %v734, %v731
        %v768 = vpack.c.b16 %v735, %v732
        %v769 = vpack.c.b16 %v739, %v736
        %v770 = vpack.c.b16 %v740, %v737
        %v771 = vpack.c.b16 %v741, %v738
        %v772 = vpack.c.b16 %v745, %v742
        %v773 = vpack.c.b16 %v746, %v743
        %v774 = vpack.c.b16 %v747, %v744
        %v775 = vpack.c.b16 %v751, %v748
        %v776 = vpack.c.b16 %v752, %v749
        %v777 = vpack.c.b16 %v753, %v750
        %802 = vmatprep.subr.bf16.mxu0 %v755
        %803 = vmatpush1.bf16.msra.mxu0 %v754
        %804 = vmatprep.subr.bf16.mxu0 %v758
        %805 = vmatpush1.bf16.msra.mxu0 %v757
        %806 = vmatprep.subr.bf16.mxu0 %v761
        %807 = vmatpush1.bf16.msra.mxu0 %v760
        %808 = vmatprep.subr.bf16.mxu0 %v764
        %809 = vmatpush1.bf16.msra.mxu0 %v763
        %810 = vmatprep.subr.bf16.mxu0 %v767
        %811 = vmatpush1.bf16.msra.mxu0 %v766
        %812 = vmatprep.subr.bf16.mxu0 %v770
        %813 = vmatpush1.bf16.msra.mxu0 %v769
        %814 = vmatprep.subr.bf16.mxu0 %v773
        %815 = vmatpush1.bf16.msra.mxu0 %v772
        %816 = vmatprep.subr.bf16.mxu0 %v776
        %817 = vmatpush1.bf16.msra.mxu0 %v775
        %818 = vmatprep.subr.bf16.mxu0 0
        %819 = vmatpush1.bf16.msra.mxu0 0
        %820 = vmatprep.subr.bf16.mxu0 0
        %821 = vmatpush1.bf16.msra.mxu0 0
        %822 = vmatprep.subr.bf16.mxu0 0
        %823 = vmatpush1.bf16.msra.mxu0 0
        %824 = vmatprep.subr.bf16.mxu0 0
        %825 = vmatpush1.bf16.msra.mxu0 0
        %826 = vmatprep.subr.bf16.mxu0 0
        %827 = vmatpush1.bf16.msra.mxu0 0
        %828 = vmatprep.subr.bf16.mxu0 0
        %829 = vmatpush1.bf16.msra.mxu0 0
        %830 = vmatprep.subr.bf16.mxu0 0
        %831 = vmatpush1.bf16.msra.mxu0 0
        %832 = vmatprep.subr.bf16.mxu0 0
        %833 = vmatpush1.bf16.msra.mxu0 0
        %834 = vmatprep.mubr.bf16.mxu0 0
        %835 = vmatmul.mubr.bf16.gmra.mrb[0].mxu0 %v638
        %v836 = vpop.f32.mrb[0].mxu0
        %v837 = vadd.f32 0.0, %v836
        %v838 = vpop.f32.mrb[0].mxu0
        %v839 = vadd.f32 0.0, %v838
        %v840 = vpop.f32.mrb[0].mxu0
        %v841 = vadd.f32 0.0, %v840
        %v842 = vpop.f32.mrb[0].mxu0
        %v843 = vadd.f32 0.0, %v842
        %844 = vmatprep.mubr.bf16.mxu0 0
        %845 = vmatmul.mubr.bf16.gmra.mrb[0].mxu0 %v639
        %v846 = vpop.f32.mrb[0].mxu0
        %v847 = vadd.f32 0.0, %v846
        %v848 = vpop.f32.mrb[0].mxu0
        %v849 = vadd.f32 0.0, %v848
        %v850 = vpop.f32.mrb[0].mxu0
        %v851 = vadd.f32 0.0, %v850
        %v852 = vpop.f32.mrb[0].mxu0
        %v853 = vadd.f32 0.0, %v852
        %854 = vmatprep.mubr.bf16.mxu0 0
        %855 = vmatmul.mubr.bf16.gmra.mrb[0].mxu0 %v640
        %v856 = vpop.f32.mrb[0].mxu0
        %v857 = vadd.f32 0.0, %v856
        %v858 = vpop.f32.mrb[0].mxu0
        %v859 = vadd.f32 0.0, %v858
        %v860 = vpop.f32.mrb[0].mxu0
        %v861 = vadd.f32 0.0, %v860
        %v862 = vpop.f32.mrb[0].mxu0
        %v863 = vadd.f32 0.0, %v862
        %864 = vmatprep.mubr.bf16.mxu0 0
        %865 = vmatmul.mubr.bf16.gmra.mrb[0].mxu0 %v641
        %v866 = vpop.f32.mrb[0].mxu0
        %v867 = vadd.f32 0.0, %v866
        %v868 = vpop.f32.mrb[0].mxu0
        %v869 = vadd.f32 0.0, %v868
        %v870 = vpop.f32.mrb[0].mxu0
        %v871 = vadd.f32 0.0, %v870
        %v872 = vpop.f32.mrb[0].mxu0
        %v873 = vadd.f32 0.0, %v872
        %874 = vdwg.mxu0
        %875 = vmatprep.subr.bf16.mxu0 0
        %876 = vmatpush1.bf16.msra.mxu0 %v756
        %877 = vmatprep.subr.bf16.mxu0 0
        %878 = vmatpush1.bf16.msra.mxu0 %v759
        %879 = vmatprep.subr.bf16.mxu0 0
        %880 = vmatpush1.bf16.msra.mxu0 %v762
        %881 = vmatprep.subr.bf16.mxu0 0
        %882 = vmatpush1.bf16.msra.mxu0 %v765
        %883 = vmatprep.subr.bf16.mxu0 0
        %884 = vmatpush1.bf16.msra.mxu0 %v768
        %885 = vmatprep.subr.bf16.mxu0 0
        %886 = vmatpush1.bf16.msra.mxu0 %v771
        %887 = vmatprep.subr.bf16.mxu0 0
        %888 = vmatpush1.bf16.msra.mxu0 %v774
        %889 = vmatprep.subr.bf16.mxu0 0
        %890 = vmatpush1.bf16.msra.mxu0 %v777
        %891 = vmatprep.subr.bf16.mxu0 0
        %892 = vmatpush1.bf16.msra.mxu0 0
        %893 = vmatprep.subr.bf16.mxu0 0
        %894 = vmatpush1.bf16.msra.mxu0 0
        %895 = vmatprep.subr.bf16.mxu0 0
        %896 = vmatpush1.bf16.msra.mxu0 0
        %897 = vmatprep.subr.bf16.mxu0 0
        %898 = vmatpush1.bf16.msra.mxu0 0
        %899 = vmatprep.subr.bf16.mxu0 0
        %900 = vmatpush1.bf16.msra.mxu0 0
        %901 = vmatprep.subr.bf16.mxu0 0
        %902 = vmatpush1.bf16.msra.mxu0 0
        %903 = vmatprep.subr.bf16.mxu0 0
        %904 = vmatpush1.bf16.msra.mxu0 0
        %905 = vmatprep.subr.bf16.mxu0 0
        %906 = vmatpush1.bf16.msra.mxu0 0
        %907 = vmatprep.mubr.bf16.mxu0 0
        %908 = vmatmul.mubr.bf16.gmra.mrb[0].mxu0 %v638
        %v909 = vpop.f32.mrb[0].mxu0
        %v910 = vadd.f32 0.0, %v909
        %v911 = vpop.f32.mrb[0].mxu0
        %v912 = vpop.f32.mrb[0].mxu0
        %v913 = vadd.f32 0.0, %v912
        %v914 = vpop.f32.mrb[0].mxu0
        %915 = vmatprep.mubr.bf16.mxu0 0
        %916 = vmatmul.mubr.bf16.gmra.mrb[0].mxu0 %v639
        %v917 = vpop.f32.mrb[0].mxu0
        %v918 = vadd.f32 0.0, %v917
        %v919 = vpop.f32.mrb[0].mxu0
        %v920 = vpop.f32.mrb[0].mxu0
        %v921 = vadd.f32 0.0, %v920
        %v922 = vpop.f32.mrb[0].mxu0
        %923 = vmatprep.mubr.bf16.mxu0 0
        %924 = vmatmul.mubr.bf16.gmra.mrb[0].mxu0 %v640
        %v925 = vpop.f32.mrb[0].mxu0
        %v926 = vadd.f32 0.0, %v925
        %v927 = vpop.f32.mrb[0].mxu0
        %v928 = vpop.f32.mrb[0].mxu0
        %v929 = vadd.f32 0.0, %v928
        %v930 = vpop.f32.mrb[0].mxu0
        %931 = vmatprep.mubr.bf16.mxu0 0
        %932 = vmatmul.mubr.bf16.gmra.mrb[0].mxu0 %v641
        %v933 = vpop.f32.mrb[0].mxu0
        %v934 = vadd.f32 0.0, %v933
        %v935 = vpop.f32.mrb[0].mxu0
        %v936 = vpop.f32.mrb[0].mxu0
        %v937 = vadd.f32 0.0, %v936
        %v938 = vpop.f32.mrb[0].mxu0
        %939 = vdwg.mxu0
        %v940 = vpack.c.bf16 %v841, %v837
        %v941 = vpack.c.bf16 %v843, %v839
        %v942 = vpack.c.bf16 %v913, %v910
        %v943 = vpack.c.bf16 %v851, %v847
        %v944 = vpack.c.bf16 %v853, %v849
        %v945 = vpack.c.bf16 %v921, %v918
        %v946 = vpack.c.bf16 %v861, %v857
        %v947 = vpack.c.bf16 %v863, %v859
        %v948 = vpack.c.bf16 %v929, %v926
        %v949 = vpack.c.bf16 %v871, %v867
        %v950 = vpack.c.bf16 %v873, %v869
        %v951 = vpack.c.bf16 %v937, %v934
        %v952 = vld [vmem:[#allocation2] sm:$0xff]
        %v953 = vld [vmem:[#allocation2 + $0x8] sm:$0xff]
        %v954 = vld [vmem:[#allocation2 + $0x10] sm:$0xff]
        %v955 = vld [vmem:[#allocation2 + $0x18] sm:$0xff]
        %v956 = vld [vmem:[#allocation2 + $0x20] sm:$0xff]
        %v957 = vld [vmem:[#allocation2 + $0x28] sm:$0xff]
        %v958 = vld [vmem:[#allocation2 + $0x30] sm:$0xff]
        %v959 = vld [vmem:[#allocation2 + $0x38] sm:$0xff]
        %vm960 = vcmask 162816
        %v962 = vsel %vm960, %v940, 0
        %v965 = vsel %vm960, %v943, 0
        %v968 = vsel %vm960, %v946, 0
        %v971 = vsel %vm960, %v949, 0
        %v974 = vsel %vm960, %v941, 0
        %v977 = vsel %vm960, %v944, 0
        %v980 = vsel %vm960, %v947, 0
        %v983 = vsel %vm960, %v950, 0
        %985 = vmatprep.subr.bf16.mxu0 0
        %986 = vmatpush1.bf16.xpose.msra.mxu0 %v974
        %987 = vmatprep.subr.bf16.mxu0 0
        %988 = vmatpush1.bf16.xpose.msra.mxu0 %v977
        %989 = vmatprep.subr.bf16.mxu0 0
        %990 = vmatpush1.bf16.xpose.msra.mxu0 %v980
        %991 = vmatprep.subr.bf16.mxu0 0
        %992 = vmatpush1.bf16.xpose.msra.mxu0 %v983
        %993 = vmatprep.subr.bf16.mxu0 0
        %994 = vmatpush1.bf16.xpose.msra.mxu0 0
        %995 = vmatprep.subr.bf16.mxu0 0
        %996 = vmatpush1.bf16.xpose.msra.mxu0 0
        %997 = vmatprep.subr.bf16.mxu0 0
        %998 = vmatpush1.bf16.xpose.msra.mxu0 0
        %999 = vmatprep.subr.bf16.mxu0 0
        %1000 = vmatpush1.bf16.xpose.msra.mxu0 0
        %1001 = vmatprep.subr.bf16.mxu0 0
        %1002 = vmatpush1.bf16.xpose.msra.mxu0 0
        %1003 = vmatprep.subr.bf16.mxu0 0
        %1004 = vmatpush1.bf16.xpose.msra.mxu0 0
        %1005 = vmatprep.subr.bf16.mxu0 0
        %1006 = vmatpush1.bf16.xpose.msra.mxu0 0
        %1007 = vmatprep.subr.bf16.mxu0 0
        %1008 = vmatpush1.bf16.xpose.msra.mxu0 0
        %1009 = vmatprep.subr.bf16.mxu0 0
        %1010 = vmatpush1.bf16.xpose.msra.mxu0 0
        %1011 = vmatprep.subr.bf16.mxu0 0
        %1012 = vmatpush1.bf16.xpose.msra.mxu0 0
        %1013 = vmatprep.subr.bf16.mxu0 0
        %1014 = vmatpush1.bf16.xpose.msra.mxu0 0
        %1015 = vmatprep.subr.bf16.mxu0 0
        %1016 = vmatpush1.bf16.xpose.msra.mxu0 0
        %1017 = vmatprep.mubr.bf16.mxu0 0
        %1018 = vmatmul.mubr.bf16.gmra.mrb[0].mxu0 %v962
        %v1019 = vpop.f32.mrb[0].mxu0
        %v1020 = vadd.f32 %v952, %v1019
        %v1021 = vpop.f32.mrb[0].mxu0
        %v1022 = vpop.f32.mrb[0].mxu0
        %v1023 = vadd.f32 %v953, %v1022
        %v1024 = vpop.f32.mrb[0].mxu0
        %1025 = vmatprep.mubr.bf16.mxu0 0
        %1026 = vmatmul.mubr.bf16.gmra.mrb[0].mxu0 %v965
        %v1027 = vpop.f32.mrb[0].mxu0
        %v1028 = vadd.f32 %v954, %v1027
        %v1029 = vpop.f32.mrb[0].mxu0
        %v1030 = vpop.f32.mrb[0].mxu0
        %v1031 = vadd.f32 %v955, %v1030
        %v1032 = vpop.f32.mrb[0].mxu0
        %1033 = vmatprep.mubr.bf16.mxu0 0
        %1034 = vmatmul.mubr.bf16.gmra.mrb[0].mxu0 %v968
        %v1035 = vpop.f32.mrb[0].mxu0
        %v1036 = vadd.f32 %v956, %v1035
        %v1037 = vpop.f32.mrb[0].mxu0
        %v1038 = vpop.f32.mrb[0].mxu0
        %v1039 = vadd.f32 %v957, %v1038
        %v1040 = vpop.f32.mrb[0].mxu0
        %1041 = vmatprep.mubr.bf16.mxu0 0
        %1042 = vmatmul.mubr.bf16.gmra.mrb[0].mxu0 %v971
        %v1043 = vpop.f32.mrb[0].mxu0
        %v1044 = vadd.f32 %v958, %v1043
        %v1045 = vpop.f32.mrb[0].mxu0
        %v1046 = vpop.f32.mrb[0].mxu0
        %v1047 = vadd.f32 %v959, %v1046
        %v1048 = vpop.f32.mrb[0].mxu0
        %1049 = vdwg.mxu0
        %vm1050 = vcmask 523264
        %v1051 = vsel %vm1050, %v1020, -inf
        %1052 = vmax.xlane.f32.xlu0 %v1051
        %v1053 = vpop.xlane.xlu0 %1052
        %v1054 = vsel %vm1050, %v1023, -inf
        %1055 = vmax.xlane.f32.xlu0 %v1054
        %v1056 = vpop.xlane.xlu0 %1055
        %v1057 = vsel %vm1050, %v1028, -inf
        %1058 = vmax.xlane.f32.xlu0 %v1057
        %v1059 = vpop.xlane.xlu0 %1058
        %v1060 = vsel %vm1050, %v1031, -inf
        %1061 = vmax.xlane.f32.xlu0 %v1060
        %v1062 = vpop.xlane.xlu0 %1061
        %v1063 = vsel %vm1050, %v1036, -inf
        %1064 = vmax.xlane.f32.xlu0 %v1063
        %v1065 = vpop.xlane.xlu0 %1064
        %v1066 = vsel %vm1050, %v1039, -inf
        %1067 = vmax.xlane.f32.xlu0 %v1066
        %v1068 = vpop.xlane.xlu0 %1067
        %v1069 = vsel %vm1050, %v1044, -inf
        %1070 = vmax.xlane.f32.xlu0 %v1069
        %v1071 = vpop.xlane.xlu0 %1070
        %v1072 = vsel %vm1050, %v1047, -inf
        %1073 = vmax.xlane.f32.xlu0 %v1072
        %v1074 = vpop.xlane.xlu0 %1073
        %v1075 = vsub.f32 %v1020, %v1053
        %v1076 = vsub.f32 %v1023, %v1056
        %v1077 = vsub.f32 %v1028, %v1059
        %v1078 = vsub.f32 %v1031, %v1062
        %v1079 = vsub.f32 %v1036, %v1065
        %v1080 = vsub.f32 %v1039, %v1068
        %v1081 = vsub.f32 %v1044, %v1071
        %v1082 = vsub.f32 %v1047, %v1074
        %v1083 = vmul.f32 %v1075, 1.442695
        %v1084 = vpow.pop %v1083
        %v1085 = vmul.f32 %v1076, 1.442695
        %v1086 = vpow.pop %v1085
        %v1087 = vmul.f32 %v1077, 1.442695
        %v1088 = vpow.pop %v1087
        %v1089 = vmul.f32 %v1078, 1.442695
        %v1090 = vpow.pop %v1089
        %v1091 = vmul.f32 %v1079, 1.442695
        %v1092 = vpow.pop %v1091
        %v1093 = vmul.f32 %v1080, 1.442695
        %v1094 = vpow.pop %v1093
        %v1095 = vmul.f32 %v1081, 1.442695
        %v1096 = vpow.pop %v1095
        %v1097 = vmul.f32 %v1082, 1.442695
        %v1098 = vpow.pop %v1097
        %v1099 = vsel %vm1050, %v1084, 0.0
        %1100 = vadd.xlane.f32.xlu0 %v1099
        %v1101 = vpop.xlane.xlu0 %1100
        %v1102 = vsel %vm1050, %v1086, 0.0
        %1103 = vadd.xlane.f32.xlu0 %v1102
        %v1104 = vpop.xlane.xlu0 %1103
        %v1105 = vsel %vm1050, %v1088, 0.0
        %1106 = vadd.xlane.f32.xlu0 %v1105
        %v1107 = vpop.xlane.xlu0 %1106
        %v1108 = vsel %vm1050, %v1090, 0.0
        %1109 = vadd.xlane.f32.xlu0 %v1108
        %v1110 = vpop.xlane.xlu0 %1109
        %v1111 = vsel %vm1050, %v1092, 0.0
        %1112 = vadd.xlane.f32.xlu0 %v1111
        %v1113 = vpop.xlane.xlu0 %1112
        %v1114 = vsel %vm1050, %v1094, 0.0
        %1115 = vadd.xlane.f32.xlu0 %v1114
        %v1116 = vpop.xlane.xlu0 %1115
        %v1117 = vsel %vm1050, %v1096, 0.0
        %1118 = vadd.xlane.f32.xlu0 %v1117
        %v1119 = vpop.xlane.xlu0 %1118
        %v1120 = vsel %vm1050, %v1098, 0.0
        %1121 = vadd.xlane.f32.xlu0 %v1120
        %v1122 = vpop.xlane.xlu0 %1121
        %v1123 = vrcp.pop %v1101
        %v1124 = vrcp.pop %v1104
        %v1125 = vrcp.pop %v1107
        %v1126 = vrcp.pop %v1110
        %v1127 = vrcp.pop %v1113
        %v1128 = vrcp.pop %v1116
        %v1129 = vrcp.pop %v1119
        %v1130 = vrcp.pop %v1122
        %v1131 = vmul.f32 %v1084, %v1123
        %v1132 = vmul.f32 %v1086, %v1124
        %v1133 = vmul.f32 %v1088, %v1125
        %v1134 = vmul.f32 %v1090, %v1126
        %v1135 = vmul.f32 %v1092, %v1127
        %v1136 = vmul.f32 %v1094, %v1128
        %v1137 = vmul.f32 %v1096, %v1129
        %v1138 = vmul.f32 %v1098, %v1130
        %v1139 = vpack.c.bf16 %v1132, %v1131
        %v1140 = vpack.c.bf16 %v1134, %v1133
        %v1141 = vpack.c.bf16 %v1136, %v1135
        %v1142 = vpack.c.bf16 %v1138, %v1137
        %v1144 = vsel %vm1050, %v1139, 0
        %v1147 = vsel %vm1050, %v1140, 0
        %v1150 = vsel %vm1050, %v1141, 0
        %v1153 = vsel %vm1050, %v1142, 0
        %1155 = vmatprep.subr.bf16.mxu0 0
        %1156 = vmatpush1.bf16.msra.mxu0 %v942
        %1157 = vmatprep.subr.bf16.mxu0 0
        %1158 = vmatpush1.bf16.msra.mxu0 %v945
        %1159 = vmatprep.subr.bf16.mxu0 0
        %1160 = vmatpush1.bf16.msra.mxu0 %v948
        %1161 = vmatprep.subr.bf16.mxu0 0
        %1162 = vmatpush1.bf16.msra.mxu0 %v951
        %1163 = vmatprep.subr.bf16.mxu0 0
        %1164 = vmatpush1.bf16.msra.mxu0 0
        %1165 = vmatprep.subr.bf16.mxu0 0
        %1166 = vmatpush1.bf16.msra.mxu0 0
        %1167 = vmatprep.subr.bf16.mxu0 0
        %1168 = vmatpush1.bf16.msra.mxu0 0
        %1169 = vmatprep.subr.bf16.mxu0 0
        %1170 = vmatpush1.bf16.msra.mxu0 0
        %1171 = vmatprep.subr.bf16.mxu0 0
        %1172 = vmatpush1.bf16.msra.mxu0 0
        %1173 = vmatprep.subr.bf16.mxu0 0
        %1174 = vmatpush1.bf16.msra.mxu0 0
        %1175 = vmatprep.subr.bf16.mxu0 0
        %1176 = vmatpush1.bf16.msra.mxu0 0
        %1177 = vmatprep.subr.bf16.mxu0 0
        %1178 = vmatpush1.bf16.msra.mxu0 0
        %1179 = vmatprep.subr.bf16.mxu0 0
        %1180 = vmatpush1.bf16.msra.mxu0 0
        %1181 = vmatprep.subr.bf16.mxu0 0
        %1182 = vmatpush1.bf16.msra.mxu0 0
        %1183 = vmatprep.subr.bf16.mxu0 0
        %1184 = vmatpush1.bf16.msra.mxu0 0
        %1185 = vmatprep.subr.bf16.mxu0 0
        %1186 = vmatpush1.bf16.msra.mxu0 0
        %1187 = vmatprep.mubr.bf16.mxu0 0
        %1188 = vmatmul.mubr.bf16.gmra.mrb[0].mxu0 %v1144
        %v1189 = vpop.f32.mrb[0].mxu0
        %v1190 = vadd.f32 0.0, %v1189
        %v1191 = vpop.f32.mrb[0].mxu0
        %v1192 = vpop.f32.mrb[0].mxu0
        %v1193 = vadd.f32 0.0, %v1192
        %v1194 = vpop.f32.mrb[0].mxu0
        %1195 = vmatprep.mubr.bf16.mxu0 0
        %1196 = vmatmul.mubr.bf16.gmra.mrb[0].mxu0 %v1147
        %v1197 = vpop.f32.mrb[0].mxu0
        %v1198 = vadd.f32 0.0, %v1197
        %v1199 = vpop.f32.mrb[0].mxu0
        %v1200 = vpop.f32.mrb[0].mxu0
        %v1201 = vadd.f32 0.0, %v1200
        %v1202 = vpop.f32.mrb[0].mxu0
        %1203 = vmatprep.mubr.bf16.mxu0 0
        %1204 = vmatmul.mubr.bf16.gmra.mrb[0].mxu0 %v1150
        %v1205 = vpop.f32.mrb[0].mxu0
        %v1206 = vadd.f32 0.0, %v1205
        %v1207 = vpop.f32.mrb[0].mxu0
        %v1208 = vpop.f32.mrb[0].mxu0
        %v1209 = vadd.f32 0.0, %v1208
        %v1210 = vpop.f32.mrb[0].mxu0
        %1211 = vmatprep.mubr.bf16.mxu0 0
        %1212 = vmatmul.mubr.bf16.gmra.mrb[0].mxu0 %v1153
        %v1213 = vpop.f32.mrb[0].mxu0
        %v1214 = vadd.f32 0.0, %v1213
        %v1215 = vpop.f32.mrb[0].mxu0
        %v1216 = vpop.f32.mrb[0].mxu0
        %v1217 = vadd.f32 0.0, %v1216
        %v1218 = vpop.f32.mrb[0].mxu0
        %1219 = vdwg.mxu0
        %v1220 = vpack.c.bf16 %v1193, %v1190
        %v1221 = vpack.c.bf16 %v1201, %v1198
        %v1222 = vpack.c.bf16 %v1209, %v1206
        %v1223 = vpack.c.bf16 %v1217, %v1214
        %v1224 = vld [vmem:[#allocation7] sm:$0xf]
        %v1225 = vld [vmem:[#allocation7 + $0x4] sm:$0xf]
        %v1226 = vld [vmem:[#allocation7 + $0x8] sm:$0x3]
        %1231 = vrot.lane.b32.xlu0 %v940, 108
        %v1232 = vpop.permute.xlu0 %1231
        %1233 = vrot.lane.b32.xlu0 %v943, 108
        %v1234 = vpop.permute.xlu0 %1233
        %1235 = vrot.lane.b32.xlu0 %v946, 108
        %v1236 = vpop.permute.xlu0 %1235
        %1237 = vrot.lane.b32.xlu0 %v949, 108
        %v1238 = vpop.permute.xlu0 %1237
        %1243 = vrot.lane.b32.xlu0 %v941, 108
        %v1244 = vpop.permute.xlu0 %1243
        %1245 = vrot.lane.b32.xlu0 %v944, 108
        %v1246 = vpop.permute.xlu0 %1245
        %1247 = vrot.lane.b32.xlu0 %v947, 108
        %v1248 = vpop.permute.xlu0 %1247
        %1249 = vrot.lane.b32.xlu0 %v950, 108
        %v1250 = vpop.permute.xlu0 %1249
        %v1252 = vsel %vm960, %v1232, 0
        %v1255 = vsel %vm960, %v1234, 0
        %v1258 = vsel %vm960, %v1236, 0
        %v1261 = vsel %vm960, %v1238, 0
        %v1264 = vsel %vm960, %v1244, 0
        %v1267 = vsel %vm960, %v1246, 0
        %v1270 = vsel %vm960, %v1248, 0
        %v1273 = vsel %vm960, %v1250, 0
        %1275 = vmatprep.subr.bf16.mxu0 0
        %1276 = vmatpush1.bf16.xpose.msra.mxu0 %v1264
        %1277 = vmatprep.subr.bf16.mxu0 0
        %1278 = vmatpush1.bf16.xpose.msra.mxu0 %v1267
        %1279 = vmatprep.subr.bf16.mxu0 0
        %1280 = vmatpush1.bf16.xpose.msra.mxu0 %v1270
        %1281 = vmatprep.subr.bf16.mxu0 0
        %1282 = vmatpush1.bf16.xpose.msra.mxu0 %v1273
        %1283 = vmatprep.subr.bf16.mxu0 0
        %1284 = vmatpush1.bf16.xpose.msra.mxu0 0
        %1285 = vmatprep.subr.bf16.mxu0 0
        %1286 = vmatpush1.bf16.xpose.msra.mxu0 0
        %1287 = vmatprep.subr.bf16.mxu0 0
        %1288 = vmatpush1.bf16.xpose.msra.mxu0 0
        %1289 = vmatprep.subr.bf16.mxu0 0
        %1290 = vmatpush1.bf16.xpose.msra.mxu0 0
        %1291 = vmatprep.subr.bf16.mxu0 0
        %1292 = vmatpush1.bf16.xpose.msra.mxu0 0
        %1293 = vmatprep.subr.bf16.mxu0 0
        %1294 = vmatpush1.bf16.xpose.msra.mxu0 0
        %1295 = vmatprep.subr.bf16.mxu0 0
        %1296 = vmatpush1.bf16.xpose.msra.mxu0 0
        %1297 = vmatprep.subr.bf16.mxu0 0
        %1298 = vmatpush1.bf16.xpose.msra.mxu0 0
        %1299 = vmatprep.subr.bf16.mxu0 0
        %1300 = vmatpush1.bf16.xpose.msra.mxu0 0
        %1301 = vmatprep.subr.bf16.mxu0 0
        %1302 = vmatpush1.bf16.xpose.msra.mxu0 0
        %1303 = vmatprep.subr.bf16.mxu0 0
        %1304 = vmatpush1.bf16.xpose.msra.mxu0 0
        %1305 = vmatprep.subr.bf16.mxu0 0
        %1306 = vmatpush1.bf16.xpose.msra.mxu0 0
        %1307 = vmatprep.mubr.bf16.mxu0 0
        %1308 = vmatmul.mubr.bf16.gmra.mrb[0].mxu0 %v1252
        %v1309 = vpop.f32.mrb[0].mxu0
        %v1310 = vadd.f32 %v952, %v1309
        %v1311 = vpop.f32.mrb[0].mxu0
        %v1312 = vpop.f32.mrb[0].mxu0
        %v1313 = vadd.f32 %v953, %v1312
        %v1314 = vpop.f32.mrb[0].mxu0
        %1315 = vmatprep.mubr.bf16.mxu0 0
        %1316 = vmatmul.mubr.bf16.gmra.mrb[0].mxu0 %v1255
        %v1317 = vpop.f32.mrb[0].mxu0
        %v1318 = vadd.f32 %v954, %v1317
        %v1319 = vpop.f32.mrb[0].mxu0
        %v1320 = vpop.f32.mrb[0].mxu0
        %v1321 = vadd.f32 %v955, %v1320
        %v1322 = vpop.f32.mrb[0].mxu0
        %1323 = vmatprep.mubr.bf16.mxu0 0
        %1324 = vmatmul.mubr.bf16.gmra.mrb[0].mxu0 %v1258
        %v1325 = vpop.f32.mrb[0].mxu0
        %v1326 = vadd.f32 %v956, %v1325
        %v1327 = vpop.f32.mrb[0].mxu0
        %v1328 = vpop.f32.mrb[0].mxu0
        %v1329 = vadd.f32 %v957, %v1328
        %v1330 = vpop.f32.mrb[0].mxu0
        %1331 = vmatprep.mubr.bf16.mxu0 0
        %1332 = vmatmul.mubr.bf16.gmra.mrb[0].mxu0 %v1261
        %v1333 = vpop.f32.mrb[0].mxu0
        %v1334 = vadd.f32 %v958, %v1333
        %v1335 = vpop.f32.mrb[0].mxu0
        %v1336 = vpop.f32.mrb[0].mxu0
        %v1337 = vadd.f32 %v959, %v1336
        %v1338 = vpop.f32.mrb[0].mxu0
        %1339 = vdwg.mxu0
        %v1340 = vsel %vm1050, %v1310, -inf
        %1341 = vmax.xlane.f32.xlu0 %v1340
        %v1342 = vpop.xlane.xlu0 %1341
        %v1343 = vsel %vm1050, %v1313, -inf
        %1344 = vmax.xlane.f32.xlu0 %v1343
        %v1345 = vpop.xlane.xlu0 %1344
        %v1346 = vsel %vm1050, %v1318, -inf
        %1347 = vmax.xlane.f32.xlu0 %v1346
        %v1348 = vpop.xlane.xlu0 %1347
        %v1349 = vsel %vm1050, %v1321, -inf
        %1350 = vmax.xlane.f32.xlu0 %v1349
        %v1351 = vpop.xlane.xlu0 %1350
        %v1352 = vsel %vm1050, %v1326, -inf
        %1353 = vmax.xlane.f32.xlu0 %v1352
        %v1354 = vpop.xlane.xlu0 %1353
        %v1355 = vsel %vm1050, %v1329, -inf
        %1356 = vmax.xlane.f32.xlu0 %v1355
        %v1357 = vpop.xlane.xlu0 %1356
        %v1358 = vsel %vm1050, %v1334, -inf
        %1359 = vmax.xlane.f32.xlu0 %v1358
        %v1360 = vpop.xlane.xlu0 %1359
        %v1361 = vsel %vm1050, %v1337, -inf
        %1362 = vmax.xlane.f32.xlu0 %v1361
        %v1363 = vpop.xlane.xlu0 %1362
        %v1364 = vsub.f32 %v1310, %v1342
        %v1365 = vsub.f32 %v1313, %v1345
        %v1366 = vsub.f32 %v1318, %v1348
        %v1367 = vsub.f32 %v1321, %v1351
        %v1368 = vsub.f32 %v1326, %v1354
        %v1369 = vsub.f32 %v1329, %v1357
        %v1370 = vsub.f32 %v1334, %v1360
        %v1371 = vsub.f32 %v1337, %v1363
        %v1372 = vmul.f32 %v1364, 1.442695
        %v1373 = vpow.pop %v1372
        %v1374 = vmul.f32 %v1365, 1.442695
        %v1375 = vpow.pop %v1374
        %v1376 = vmul.f32 %v1366, 1.442695
        %v1377 = vpow.pop %v1376
        %v1378 = vmul.f32 %v1367, 1.442695
        %v1379 = vpow.pop %v1378
        %v1380 = vmul.f32 %v1368, 1.442695
        %v1381 = vpow.pop %v1380
        %v1382 = vmul.f32 %v1369, 1.442695
        %v1383 = vpow.pop %v1382
        %v1384 = vmul.f32 %v1370, 1.442695
        %v1385 = vpow.pop %v1384
        %v1386 = vmul.f32 %v1371, 1.442695
        %v1387 = vpow.pop %v1386
        %v1388 = vsel %vm1050, %v1373, 0.0
        %1389 = vadd.xlane.f32.xlu0 %v1388
        %v1390 = vpop.xlane.xlu0 %1389
        %v1391 = vsel %vm1050, %v1375, 0.0
        %1392 = vadd.xlane.f32.xlu0 %v1391
        %v1393 = vpop.xlane.xlu0 %1392
        %v1394 = vsel %vm1050, %v1377, 0.0
        %1395 = vadd.xlane.f32.xlu0 %v1394
        %v1396 = vpop.xlane.xlu0 %1395
        %v1397 = vsel %vm1050, %v1379, 0.0
        %1398 = vadd.xlane.f32.xlu0 %v1397
        %v1399 = vpop.xlane.xlu0 %1398
        %v1400 = vsel %vm1050, %v1381, 0.0
        %1401 = vadd.xlane.f32.xlu0 %v1400
        %v1402 = vpop.xlane.xlu0 %1401
        %v1403 = vsel %vm1050, %v1383, 0.0
        %1404 = vadd.xlane.f32.xlu0 %v1403
        %v1405 = vpop.xlane.xlu0 %1404
        %v1406 = vsel %vm1050, %v1385, 0.0
        %1407 = vadd.xlane.f32.xlu0 %v1406
        %v1408 = vpop.xlane.xlu0 %1407
        %v1409 = vsel %vm1050, %v1387, 0.0
        %1410 = vadd.xlane.f32.xlu0 %v1409
        %v1411 = vpop.xlane.xlu0 %1410
        %v1412 = vrcp.pop %v1390
        %v1413 = vrcp.pop %v1393
        %v1414 = vrcp.pop %v1396
        %v1415 = vrcp.pop %v1399
        %v1416 = vrcp.pop %v1402
        %v1417 = vrcp.pop %v1405
        %v1418 = vrcp.pop %v1408
        %v1419 = vrcp.pop %v1411
        %v1420 = vmul.f32 %v1373, %v1412
        %v1421 = vmul.f32 %v1375, %v1413
        %v1422 = vmul.f32 %v1377, %v1414
        %v1423 = vmul.f32 %v1379, %v1415
        %v1424 = vmul.f32 %v1381, %v1416
        %v1425 = vmul.f32 %v1383, %v1417
        %v1426 = vmul.f32 %v1385, %v1418
        %v1427 = vmul.f32 %v1387, %v1419
        %v1428 = vpack.c.bf16 %v1421, %v1420
        %v1429 = vpack.c.bf16 %v1423, %v1422
        %v1430 = vpack.c.bf16 %v1425, %v1424
        %v1431 = vpack.c.bf16 %v1427, %v1426
        %1436 = vrot.lane.b32.xlu0 %v942, 108
        %v1437 = vpop.permute.xlu0 %1436
        %1438 = vrot.lane.b32.xlu0 %v945, 108
        %v1439 = vpop.permute.xlu0 %1438
        %1440 = vrot.lane.b32.xlu0 %v948, 108
        %v1441 = vpop.permute.xlu0 %1440
        %1442 = vrot.lane.b32.xlu0 %v951, 108
        %v1443 = vpop.permute.xlu0 %1442
        %v1449 = vsel %vm1050, %v1428, 0
        %v1452 = vsel %vm1050, %v1429, 0
        %v1455 = vsel %vm1050, %v1430, 0
        %v1458 = vsel %vm1050, %v1431, 0
        %1460 = vmatprep.subr.bf16.mxu0 0
        %1461 = vmatpush1.bf16.msra.mxu0 %v1437
        %1462 = vmatprep.subr.bf16.mxu0 0
        %1463 = vmatpush1.bf16.msra.mxu0 %v1439
        %1464 = vmatprep.subr.bf16.mxu0 0
        %1465 = vmatpush1.bf16.msra.mxu0 %v1441
        %1466 = vmatprep.subr.bf16.mxu0 0
        %1467 = vmatpush1.bf16.msra.mxu0 %v1443
        %1468 = vmatprep.subr.bf16.mxu0 0
        %1469 = vmatpush1.bf16.msra.mxu0 0
        %1470 = vmatprep.subr.bf16.mxu0 0
        %1471 = vmatpush1.bf16.msra.mxu0 0
        %1472 = vmatprep.subr.bf16.mxu0 0
        %1473 = vmatpush1.bf16.msra.mxu0 0
        %1474 = vmatprep.subr.bf16.mxu0 0
        %1475 = vmatpush1.bf16.msra.mxu0 0
        %1476 = vmatprep.subr.bf16.mxu0 0
        %1477 = vmatpush1.bf16.msra.mxu0 0
        %1478 = vmatprep.subr.bf16.mxu0 0
        %1479 = vmatpush1.bf16.msra.mxu0 0
        %1480 = vmatprep.subr.bf16.mxu0 0
        %1481 = vmatpush1.bf16.msra.mxu0 0
        %1482 = vmatprep.subr.bf16.mxu0 0
        %1483 = vmatpush1.bf16.msra.mxu0 0
        %1484 = vmatprep.subr.bf16.mxu0 0
        %1485 = vmatpush1.bf16.msra.mxu0 0
        %1486 = vmatprep.subr.bf16.mxu0 0
        %1487 = vmatpush1.bf16.msra.mxu0 0
        %1488 = vmatprep.subr.bf16.mxu0 0
        %1489 = vmatpush1.bf16.msra.mxu0 0
        %1490 = vmatprep.subr.bf16.mxu0 0
        %1491 = vmatpush1.bf16.msra.mxu0 0
        %1492 = vmatprep.mubr.bf16.mxu0 0
        %1493 = vmatmul.mubr.bf16.gmra.mrb[0].mxu0 %v1449
        %v1494 = vpop.f32.mrb[0].mxu0
        %v1495 = vadd.f32 0.0, %v1494
        %v1496 = vpop.f32.mrb[0].mxu0
        %v1497 = vpop.f32.mrb[0].mxu0
        %v1498 = vadd.f32 0.0, %v1497
        %v1499 = vpop.f32.mrb[0].mxu0
        %1500 = vmatprep.mubr.bf16.mxu0 0
        %1501 = vmatmul.mubr.bf16.gmra.mrb[0].mxu0 %v1452
        %v1502 = vpop.f32.mrb[0].mxu0
        %v1503 = vadd.f32 0.0, %v1502
        %v1504 = vpop.f32.mrb[0].mxu0
        %v1505 = vpop.f32.mrb[0].mxu0
        %v1506 = vadd.f32 0.0, %v1505
        %v1507 = vpop.f32.mrb[0].mxu0
        %1508 = vmatprep.mubr.bf16.mxu0 0
        %1509 = vmatmul.mubr.bf16.gmra.mrb[0].mxu0 %v1455
        %v1510 = vpop.f32.mrb[0].mxu0
        %v1511 = vadd.f32 0.0, %v1510
        %v1512 = vpop.f32.mrb[0].mxu0
        %v1513 = vpop.f32.mrb[0].mxu0
        %v1514 = vadd.f32 0.0, %v1513
        %v1515 = vpop.f32.mrb[0].mxu0
        %1516 = vmatprep.mubr.bf16.mxu0 0
        %1517 = vmatmul.mubr.bf16.gmra.mrb[0].mxu0 %v1458
        %v1518 = vpop.f32.mrb[0].mxu0
        %v1519 = vadd.f32 0.0, %v1518
        %v1520 = vpop.f32.mrb[0].mxu0
        %v1521 = vpop.f32.mrb[0].mxu0
        %v1522 = vadd.f32 0.0, %v1521
        %v1523 = vpop.f32.mrb[0].mxu0
        %1524 = vdwg.mxu0
        %v1525 = vpack.c.bf16 %v1498, %v1495
        %v1526 = vpack.c.bf16 %v1506, %v1503
        %v1527 = vpack.c.bf16 %v1514, %v1511
        %v1528 = vpack.c.bf16 %v1522, %v1519
        %s1529 = scalar_lea.vmem [#allocation7], 12
        %v1530 = vld [vmem:[%s1529] sm:$0xf]
        %v1531 = vld [vmem:[%s1529 + $0x4] sm:$0xf]
        %v1532 = vld [vmem:[%s1529 + $0x8] sm:$0x3]
        %v1536 = vunpack.c.l.b16 %v1530
        %v1537 = vunpack.c.l.b16 %v1531
        %v1538 = vunpack.c.l.b16 %v1532
        %v1539 = vpack.c.b16 %v1537, %v1536
        %v1540 = vpack.c.b16 %v1538, %v1538
        %v1543 = vsel %vm960, %v1525, 0
        %v1546 = vsel %vm960, %v1526, 0
        %v1549 = vsel %vm960, %v1527, 0
        %v1552 = vsel %vm960, %v1528, 0
        %vm1554 = vcmask 1041408
        %v1556 = vsel %vm1554, %v1540, 0
        %1558 = vmatprep.subr.bf16.mxu0 0
        %1559 = vmatpush1.bf16.msra.mxu0 %v1539
        %1560 = vmatprep.subr.bf16.mxu0 0
        %1561 = vmatpush1.bf16.msra.mxu0 %v1556
        %1562 = vmatprep.subr.bf16.mxu0 0
        %1563 = vmatpush1.bf16.msra.mxu0 0
        %1564 = vmatprep.subr.bf16.mxu0 0
        %1565 = vmatpush1.bf16.msra.mxu0 0
        %1566 = vmatprep.subr.bf16.mxu0 0
        %1567 = vmatpush1.bf16.msra.mxu0 0
        %1568 = vmatprep.subr.bf16.mxu0 0
        %1569 = vmatpush1.bf16.msra.mxu0 0
        %1570 = vmatprep.subr.bf16.mxu0 0
        %1571 = vmatpush1.bf16.msra.mxu0 0
        %1572 = vmatprep.subr.bf16.mxu0 0
        %1573 = vmatpush1.bf16.msra.mxu0 0
        %1574 = vmatprep.subr.bf16.mxu0 0
        %1575 = vmatpush1.bf16.msra.mxu0 0
        %1576 = vmatprep.subr.bf16.mxu0 0
        %1577 = vmatpush1.bf16.msra.mxu0 0
        %1578 = vmatprep.subr.bf16.mxu0 0
        %1579 = vmatpush1.bf16.msra.mxu0 0
        %1580 = vmatprep.subr.bf16.mxu0 0
        %1581 = vmatpush1.bf16.msra.mxu0 0
        %1582 = vmatprep.subr.bf16.mxu0 0
        %1583 = vmatpush1.bf16.msra.mxu0 0
        %1584 = vmatprep.subr.bf16.mxu0 0
        %1585 = vmatpush1.bf16.msra.mxu0 0
        %1586 = vmatprep.subr.bf16.mxu0 0
        %1587 = vmatpush1.bf16.msra.mxu0 0
        %1588 = vmatprep.subr.bf16.mxu0 0
        %1589 = vmatpush1.bf16.msra.mxu0 0
        %1590 = vmatprep.mubr.bf16.mxu0 0
        %1591 = vmatmul.mubr.bf16.gmra.mrb[0].mxu0 %v1543
        %v1592 = vpop.f32.mrb[0].mxu0
        %v1593 = vadd.f32 0.0, %v1592
        %v1594 = vpop.f32.mrb[0].mxu0
        %v1595 = vpop.f32.mrb[0].mxu0
        %v1596 = vadd.f32 0.0, %v1595
        %v1597 = vpop.f32.mrb[0].mxu0
        %1598 = vmatprep.mubr.bf16.mxu0 0
        %1599 = vmatmul.mubr.bf16.gmra.mrb[0].mxu0 %v1546
        %v1600 = vpop.f32.mrb[0].mxu0
        %v1601 = vadd.f32 0.0, %v1600
        %v1602 = vpop.f32.mrb[0].mxu0
        %v1603 = vpop.f32.mrb[0].mxu0
        %v1604 = vadd.f32 0.0, %v1603
        %v1605 = vpop.f32.mrb[0].mxu0
        %1606 = vmatprep.mubr.bf16.mxu0 0
        %1607 = vmatmul.mubr.bf16.gmra.mrb[0].mxu0 %v1549
        %v1608 = vpop.f32.mrb[0].mxu0
        %v1609 = vadd.f32 0.0, %v1608
        %v1610 = vpop.f32.mrb[0].mxu0
        %v1611 = vpop.f32.mrb[0].mxu0
        %v1612 = vadd.f32 0.0, %v1611
        %v1613 = vpop.f32.mrb[0].mxu0
        %1614 = vmatprep.mubr.bf16.mxu0 0
        %1615 = vmatmul.mubr.bf16.gmra.mrb[0].mxu0 %v1552
        %v1616 = vpop.f32.mrb[0].mxu0
        %v1617 = vadd.f32 0.0, %v1616
        %v1618 = vpop.f32.mrb[0].mxu0
        %v1619 = vpop.f32.mrb[0].mxu0
        %v1620 = vadd.f32 0.0, %v1619
        %v1621 = vpop.f32.mrb[0].mxu0
        %1622 = vdwg.mxu0
        %v1626 = vunpack.c.l.b16 %v1224
        %v1627 = vunpack.c.l.b16 %v1225
        %v1628 = vunpack.c.l.b16 %v1226
        %v1629 = vpack.c.b16 %v1627, %v1626
        %v1630 = vpack.c.b16 %v1628, %v1628
        %v1633 = vsel %vm960, %v1220, 0
        %v1636 = vsel %vm960, %v1221, 0
        %v1639 = vsel %vm960, %v1222, 0
        %v1642 = vsel %vm960, %v1223, 0
        %v1645 = vsel %vm1554, %v1630, 0
        %1647 = vmatprep.subr.bf16.mxu0 0
        %1648 = vmatpush1.bf16.msra.mxu0 %v1629
        %1649 = vmatprep.subr.bf16.mxu0 0
        %1650 = vmatpush1.bf16.msra.mxu0 %v1645
        %1651 = vmatprep.subr.bf16.mxu0 0
        %1652 = vmatpush1.bf16.msra.mxu0 0
        %1653 = vmatprep.subr.bf16.mxu0 0
        %1654 = vmatpush1.bf16.msra.mxu0 0
        %1655 = vmatprep.subr.bf16.mxu0 0
        %1656 = vmatpush1.bf16.msra.mxu0 0
        %1657 = vmatprep.subr.bf16.mxu0 0
        %1658 = vmatpush1.bf16.msra.mxu0 0
        %1659 = vmatprep.subr.bf16.mxu0 0
        %1660 = vmatpush1.bf16.msra.mxu0 0
        %1661 = vmatprep.subr.bf16.mxu0 0
        %1662 = vmatpush1.bf16.msra.mxu0 0
        %1663 = vmatprep.subr.bf16.mxu0 0
        %1664 = vmatpush1.bf16.msra.mxu0 0
        %1665 = vmatprep.subr.bf16.mxu0 0
        %1666 = vmatpush1.bf16.msra.mxu0 0
        %1667 = vmatprep.subr.bf16.mxu0 0
        %1668 = vmatpush1.bf16.msra.mxu0 0
        %1669 = vmatprep.subr.bf16.mxu0 0
        %1670 = vmatpush1.bf16.msra.mxu0 0
        %1671 = vmatprep.subr.bf16.mxu0 0
        %1672 = vmatpush1.bf16.msra.mxu0 0
        %1673 = vmatprep.subr.bf16.mxu0 0
        %1674 = vmatpush1.bf16.msra.mxu0 0
        %1675 = vmatprep.subr.bf16.mxu0 0
        %1676 = vmatpush1.bf16.msra.mxu0 0
        %1677 = vmatprep.subr.bf16.mxu0 0
        %1678 = vmatpush1.bf16.msra.mxu0 0
        %1679 = vmatprep.mubr.bf16.mxu0 0
        %1680 = vmatmul.mubr.bf16.gmra.mrb[0].mxu0 %v1633
        %v1681 = vpop.f32.mrb[0].mxu0
        %v1682 = vadd.f32 %v1593, %v1681
        %v1683 = vpop.f32.mrb[0].mxu0
        %v1684 = vpop.f32.mrb[0].mxu0
        %v1685 = vadd.f32 %v1596, %v1684
        %v1686 = vpop.f32.mrb[0].mxu0
        %1687 = vmatprep.mubr.bf16.mxu0 0
        %1688 = vmatmul.mubr.bf16.gmra.mrb[0].mxu0 %v1636
        %v1689 = vpop.f32.mrb[0].mxu0
        %v1690 = vadd.f32 %v1601, %v1689
        %v1691 = vpop.f32.mrb[0].mxu0
        %v1692 = vpop.f32.mrb[0].mxu0
        %v1693 = vadd.f32 %v1604, %v1692
        %v1694 = vpop.f32.mrb[0].mxu0
        %1695 = vmatprep.mubr.bf16.mxu0 0
        %1696 = vmatmul.mubr.bf16.gmra.mrb[0].mxu0 %v1639
        %v1697 = vpop.f32.mrb[0].mxu0
        %v1698 = vadd.f32 %v1609, %v1697
        %v1699 = vpop.f32.mrb[0].mxu0
        %v1700 = vpop.f32.mrb[0].mxu0
        %v1701 = vadd.f32 %v1612, %v1700
        %v1702 = vpop.f32.mrb[0].mxu0
        %1703 = vmatprep.mubr.bf16.mxu0 0
        %1704 = vmatmul.mubr.bf16.gmra.mrb[0].mxu0 %v1642
        %v1705 = vpop.f32.mrb[0].mxu0
        %v1706 = vadd.f32 %v1617, %v1705
        %v1707 = vpop.f32.mrb[0].mxu0
        %v1708 = vpop.f32.mrb[0].mxu0
        %v1709 = vadd.f32 %v1620, %v1708
        %v1710 = vpop.f32.mrb[0].mxu0
        %1711 = vdwg.mxu0
        %1712 = vrot.lane.b32.xlu0 %v940, 88
        %v1713 = vpop.permute.xlu0 %1712
        %1714 = vrot.lane.b32.xlu0 %v943, 88
        %v1715 = vpop.permute.xlu0 %1714
        %1716 = vrot.lane.b32.xlu0 %v946, 88
        %v1717 = vpop.permute.xlu0 %1716
        %1718 = vrot.lane.b32.xlu0 %v949, 88
        %v1719 = vpop.permute.xlu0 %1718
        %1720 = vrot.lane.b32.xlu0 %v941, 88
        %v1721 = vpop.permute.xlu0 %1720
        %1722 = vrot.lane.b32.xlu0 %v944, 88
        %v1723 = vpop.permute.xlu0 %1722
        %1724 = vrot.lane.b32.xlu0 %v947, 88
        %v1725 = vpop.permute.xlu0 %1724
        %1726 = vrot.lane.b32.xlu0 %v950, 88
        %v1727 = vpop.permute.xlu0 %1726
        %v1729 = vsel %vm960, %v1713, 0
        %v1732 = vsel %vm960, %v1715, 0
        %v1735 = vsel %vm960, %v1717, 0
        %v1738 = vsel %vm960, %v1719, 0
        %v1741 = vsel %vm960, %v1721, 0
        %v1744 = vsel %vm960, %v1723, 0
        %v1747 = vsel %vm960, %v1725, 0
        %v1750 = vsel %vm960, %v1727, 0
        %1752 = vmatprep.subr.bf16.mxu0 0
        %1753 = vmatpush1.bf16.xpose.msra.mxu0 %v1741
        %1754 = vmatprep.subr.bf16.mxu0 0
        %1755 = vmatpush1.bf16.xpose.msra.mxu0 %v1744
        %1756 = vmatprep.subr.bf16.mxu0 0
        %1757 = vmatpush1.bf16.xpose.msra.mxu0 %v1747
        %1758 = vmatprep.subr.bf16.mxu0 0
        %1759 = vmatpush1.bf16.xpose.msra.mxu0 %v1750
        %1760 = vmatprep.subr.bf16.mxu0 0
        %1761 = vmatpush1.bf16.xpose.msra.mxu0 0
        %1762 = vmatprep.subr.bf16.mxu0 0
        %1763 = vmatpush1.bf16.xpose.msra.mxu0 0
        %1764 = vmatprep.subr.bf16.mxu0 0
        %1765 = vmatpush1.bf16.xpose.msra.mxu0 0
        %1766 = vmatprep.subr.bf16.mxu0 0
        %1767 = vmatpush1.bf16.xpose.msra.mxu0 0
        %1768 = vmatprep.subr.bf16.mxu0 0
        %1769 = vmatpush1.bf16.xpose.msra.mxu0 0
        %1770 = vmatprep.subr.bf16.mxu0 0
        %1771 = vmatpush1.bf16.xpose.msra.mxu0 0
        %1772 = vmatprep.subr.bf16.mxu0 0
        %1773 = vmatpush1.bf16.xpose.msra.mxu0 0
        %1774 = vmatprep.subr.bf16.mxu0 0
        %1775 = vmatpush1.bf16.xpose.msra.mxu0 0
        %1776 = vmatprep.subr.bf16.mxu0 0
        %1777 = vmatpush1.bf16.xpose.msra.mxu0 0
        %1778 = vmatprep.subr.bf16.mxu0 0
        %1779 = vmatpush1.bf16.xpose.msra.mxu0 0
        %1780 = vmatprep.subr.bf16.mxu0 0
        %1781 = vmatpush1.bf16.xpose.msra.mxu0 0
        %1782 = vmatprep.subr.bf16.mxu0 0
        %1783 = vmatpush1.bf16.xpose.msra.mxu0 0
        %1784 = vmatprep.mubr.bf16.mxu0 0
        %1785 = vmatmul.mubr.bf16.gmra.mrb[0].mxu0 %v1729
        %v1786 = vpop.f32.mrb[0].mxu0
        %v1787 = vadd.f32 %v952, %v1786
        %v1788 = vpop.f32.mrb[0].mxu0
        %v1789 = vpop.f32.mrb[0].mxu0
        %v1790 = vadd.f32 %v953, %v1789
        %v1791 = vpop.f32.mrb[0].mxu0
        %1792 = vmatprep.mubr.bf16.mxu0 0
        %1793 = vmatmul.mubr.bf16.gmra.mrb[0].mxu0 %v1732
        %v1794 = vpop.f32.mrb[0].mxu0
        %v1795 = vadd.f32 %v954, %v1794
        %v1796 = vpop.f32.mrb[0].mxu0
        %v1797 = vpop.f32.mrb[0].mxu0
        %v1798 = vadd.f32 %v955, %v1797
        %v1799 = vpop.f32.mrb[0].mxu0
        %1800 = vmatprep.mubr.bf16.mxu0 0
        %1801 = vmatmul.mubr.bf16.gmra.mrb[0].mxu0 %v1735
        %v1802 = vpop.f32.mrb[0].mxu0
        %v1803 = vadd.f32 %v956, %v1802
        %v1804 = vpop.f32.mrb[0].mxu0
        %v1805 = vpop.f32.mrb[0].mxu0
        %v1806 = vadd.f32 %v957, %v1805
        %v1807 = vpop.f32.mrb[0].mxu0
        %1808 = vmatprep.mubr.bf16.mxu0 0
        %1809 = vmatmul.mubr.bf16.gmra.mrb[0].mxu0 %v1738
        %v1810 = vpop.f32.mrb[0].mxu0
        %v1811 = vadd.f32 %v958, %v1810
        %v1812 = vpop.f32.mrb[0].mxu0
        %v1813 = vpop.f32.mrb[0].mxu0
        %v1814 = vadd.f32 %v959, %v1813
        %v1815 = vpop.f32.mrb[0].mxu0
        %1816 = vdwg.mxu0
        %v1817 = vsel %vm1050, %v1787, -inf
        %1818 = vmax.xlane.f32.xlu0 %v1817
        %v1819 = vpop.xlane.xlu0 %1818
        %v1820 = vsel %vm1050, %v1790, -inf
        %1821 = vmax.xlane.f32.xlu0 %v1820
        %v1822 = vpop.xlane.xlu0 %1821
        %v1823 = vsel %vm1050, %v1795, -inf
        %1824 = vmax.xlane.f32.xlu0 %v1823
        %v1825 = vpop.xlane.xlu0 %1824
        %v1826 = vsel %vm1050, %v1798, -inf
        %1827 = vmax.xlane.f32.xlu0 %v1826
        %v1828 = vpop.xlane.xlu0 %1827
        %v1829 = vsel %vm1050, %v1803, -inf
        %1830 = vmax.xlane.f32.xlu0 %v1829
        %v1831 = vpop.xlane.xlu0 %1830
        %v1832 = vsel %vm1050, %v1806, -inf
        %1833 = vmax.xlane.f32.xlu0 %v1832
        %v1834 = vpop.xlane.xlu0 %1833
        %v1835 = vsel %vm1050, %v1811, -inf
        %1836 = vmax.xlane.f32.xlu0 %v1835
        %v1837 = vpop.xlane.xlu0 %1836
        %v1838 = vsel %vm1050, %v1814, -inf
        %1839 = vmax.xlane.f32.xlu0 %v1838
        %v1840 = vpop.xlane.xlu0 %1839
        %v1841 = vsub.f32 %v1787, %v1819
        %v1842 = vsub.f32 %v1790, %v1822
        %v1843 = vsub.f32 %v1795, %v1825
        %v1844 = vsub.f32 %v1798, %v1828
        %v1845 = vsub.f32 %v1803, %v1831
        %v1846 = vsub.f32 %v1806, %v1834
        %v1847 = vsub.f32 %v1811, %v1837
        %v1848 = vsub.f32 %v1814, %v1840
        %v1849 = vmul.f32 %v1841, 1.442695
        %v1850 = vpow.pop %v1849
        %v1851 = vmul.f32 %v1842, 1.442695
        %v1852 = vpow.pop %v1851
        %v1853 = vmul.f32 %v1843, 1.442695
        %v1854 = vpow.pop %v1853
        %v1855 = vmul.f32 %v1844, 1.442695
        %v1856 = vpow.pop %v1855
        %v1857 = vmul.f32 %v1845, 1.442695
        %v1858 = vpow.pop %v1857
        %v1859 = vmul.f32 %v1846, 1.442695
        %v1860 = vpow.pop %v1859
        %v1861 = vmul.f32 %v1847, 1.442695
        %v1862 = vpow.pop %v1861
        %v1863 = vmul.f32 %v1848, 1.442695
        %v1864 = vpow.pop %v1863
        %v1865 = vsel %vm1050, %v1850, 0.0
        %1866 = vadd.xlane.f32.xlu0 %v1865
        %v1867 = vpop.xlane.xlu0 %1866
        %v1868 = vsel %vm1050, %v1852, 0.0
        %1869 = vadd.xlane.f32.xlu0 %v1868
        %v1870 = vpop.xlane.xlu0 %1869
        %v1871 = vsel %vm1050, %v1854, 0.0
        %1872 = vadd.xlane.f32.xlu0 %v1871
        %v1873 = vpop.xlane.xlu0 %1872
        %v1874 = vsel %vm1050, %v1856, 0.0
        %1875 = vadd.xlane.f32.xlu0 %v1874
        %v1876 = vpop.xlane.xlu0 %1875
        %v1877 = vsel %vm1050, %v1858, 0.0
        %1878 = vadd.xlane.f32.xlu0 %v1877
        %v1879 = vpop.xlane.xlu0 %1878
        %v1880 = vsel %vm1050, %v1860, 0.0
        %1881 = vadd.xlane.f32.xlu0 %v1880
        %v1882 = vpop.xlane.xlu0 %1881
        %v1883 = vsel %vm1050, %v1862, 0.0
        %1884 = vadd.xlane.f32.xlu0 %v1883
        %v1885 = vpop.xlane.xlu0 %1884
        %v1886 = vsel %vm1050, %v1864, 0.0
        %1887 = vadd.xlane.f32.xlu0 %v1886
        %v1888 = vpop.xlane.xlu0 %1887
        %v1889 = vrcp.pop %v1867
        %v1890 = vrcp.pop %v1870
        %v1891 = vrcp.pop %v1873
        %v1892 = vrcp.pop %v1876
        %v1893 = vrcp.pop %v1879
        %v1894 = vrcp.pop %v1882
        %v1895 = vrcp.pop %v1885
        %v1896 = vrcp.pop %v1888
        %v1897 = vmul.f32 %v1850, %v1889
        %v1898 = vmul.f32 %v1852, %v1890
        %v1899 = vmul.f32 %v1854, %v1891
        %v1900 = vmul.f32 %v1856, %v1892
        %v1901 = vmul.f32 %v1858, %v1893
        %v1902 = vmul.f32 %v1860, %v1894
        %v1903 = vmul.f32 %v1862, %v1895
        %v1904 = vmul.f32 %v1864, %v1896
        %v1905 = vpack.c.bf16 %v1898, %v1897
        %v1906 = vpack.c.bf16 %v1900, %v1899
        %v1907 = vpack.c.bf16 %v1902, %v1901
        %v1908 = vpack.c.bf16 %v1904, %v1903
        %1909 = vrot.lane.b32.xlu0 %v942, 88
        %v1910 = vpop.permute.xlu0 %1909
        %1911 = vrot.lane.b32.xlu0 %v945, 88
        %v1912 = vpop.permute.xlu0 %1911
        %1913 = vrot.lane.b32.xlu0 %v948, 88
        %v1914 = vpop.permute.xlu0 %1913
        %1915 = vrot.lane.b32.xlu0 %v951, 88
        %v1916 = vpop.permute.xlu0 %1915
        %v1922 = vsel %vm1050, %v1905, 0
        %v1925 = vsel %vm1050, %v1906, 0
        %v1928 = vsel %vm1050, %v1907, 0
        %v1931 = vsel %vm1050, %v1908, 0
        %1933 = vmatprep.subr.bf16.mxu0 0
        %1934 = vmatpush1.bf16.msra.mxu0 %v1910
        %1935 = vmatprep.subr.bf16.mxu0 0
        %1936 = vmatpush1.bf16.msra.mxu0 %v1912
        %1937 = vmatprep.subr.bf16.mxu0 0
        %1938 = vmatpush1.bf16.msra.mxu0 %v1914
        %1939 = vmatprep.subr.bf16.mxu0 0
        %1940 = vmatpush1.bf16.msra.mxu0 %v1916
        %1941 = vmatprep.subr.bf16.mxu0 0
        %1942 = vmatpush1.bf16.msra.mxu0 0
        %1943 = vmatprep.subr.bf16.mxu0 0
        %1944 = vmatpush1.bf16.msra.mxu0 0
        %1945 = vmatprep.subr.bf16.mxu0 0
        %1946 = vmatpush1.bf16.msra.mxu0 0
        %1947 = vmatprep.subr.bf16.mxu0 0
        %1948 = vmatpush1.bf16.msra.mxu0 0
        %1949 = vmatprep.subr.bf16.mxu0 0
        %1950 = vmatpush1.bf16.msra.mxu0 0
        %1951 = vmatprep.subr.bf16.mxu0 0
        %1952 = vmatpush1.bf16.msra.mxu0 0
        %1953 = vmatprep.subr.bf16.mxu0 0
        %1954 = vmatpush1.bf16.msra.mxu0 0
        %1955 = vmatprep.subr.bf16.mxu0 0
        %1956 = vmatpush1.bf16.msra.mxu0 0
        %1957 = vmatprep.subr.bf16.mxu0 0
        %1958 = vmatpush1.bf16.msra.mxu0 0
        %1959 = vmatprep.subr.bf16.mxu0 0
        %1960 = vmatpush1.bf16.msra.mxu0 0
        %1961 = vmatprep.subr.bf16.mxu0 0
        %1962 = vmatpush1.bf16.msra.mxu0 0
        %1963 = vmatprep.subr.bf16.mxu0 0
        %1964 = vmatpush1.bf16.msra.mxu0 0
        %1965 = vmatprep.mubr.bf16.mxu0 0
        %1966 = vmatmul.mubr.bf16.gmra.mrb[0].mxu0 %v1922
        %v1967 = vpop.f32.mrb[0].mxu0
        %v1968 = vadd.f32 0.0, %v1967
        %v1969 = vpop.f32.mrb[0].mxu0
        %v1970 = vpop.f32.mrb[0].mxu0
        %v1971 = vadd.f32 0.0, %v1970
        %v1972 = vpop.f32.mrb[0].mxu0
        %1973 = vmatprep.mubr.bf16.mxu0 0
        %1974 = vmatmul.mubr.bf16.gmra.mrb[0].mxu0 %v1925
        %v1975 = vpop.f32.mrb[0].mxu0
        %v1976 = vadd.f32 0.0, %v1975
        %v1977 = vpop.f32.mrb[0].mxu0
        %v1978 = vpop.f32.mrb[0].mxu0
        %v1979 = vadd.f32 0.0, %v1978
        %v1980 = vpop.f32.mrb[0].mxu0
        %1981 = vmatprep.mubr.bf16.mxu0 0
        %1982 = vmatmul.mubr.bf16.gmra.mrb[0].mxu0 %v1928
        %v1983 = vpop.f32.mrb[0].mxu0
        %v1984 = vadd.f32 0.0, %v1983
        %v1985 = vpop.f32.mrb[0].mxu0
        %v1986 = vpop.f32.mrb[0].mxu0
        %v1987 = vadd.f32 0.0, %v1986
        %v1988 = vpop.f32.mrb[0].mxu0
        %1989 = vmatprep.mubr.bf16.mxu0 0
        %1990 = vmatmul.mubr.bf16.gmra.mrb[0].mxu0 %v1931
        %v1991 = vpop.f32.mrb[0].mxu0
        %v1992 = vadd.f32 0.0, %v1991
        %v1993 = vpop.f32.mrb[0].mxu0
        %v1994 = vpop.f32.mrb[0].mxu0
        %v1995 = vadd.f32 0.0, %v1994
        %v1996 = vpop.f32.mrb[0].mxu0
        %1997 = vdwg.mxu0
        %v1998 = vpack.c.bf16 %v1971, %v1968
        %v1999 = vpack.c.bf16 %v1979, %v1976
        %v2000 = vpack.c.bf16 %v1987, %v1984
        %v2001 = vpack.c.bf16 %v1995, %v1992
        %s2002 = scalar_lea.vmem [#allocation7], 24
        %v2003 = vld [vmem:[%s2002] sm:$0xf]
        %v2004 = vld [vmem:[%s2002 + $0x4] sm:$0xf]
        %v2005 = vld [vmem:[%s2002 + $0x8] sm:$0x3]
        %v2009 = vunpack.c.l.b16 %v2003
        %v2010 = vunpack.c.l.b16 %v2004
        %v2011 = vunpack.c.l.b16 %v2005
        %v2012 = vpack.c.b16 %v2010, %v2009
        %v2013 = vpack.c.b16 %v2011, %v2011
        %v2016 = vsel %vm960, %v1998, 0
        %v2019 = vsel %vm960, %v1999, 0
        %v2022 = vsel %vm960, %v2000, 0
        %v2025 = vsel %vm960, %v2001, 0
        %v2028 = vsel %vm1554, %v2013, 0
        %2030 = vmatprep.subr.bf16.mxu0 0
        %2031 = vmatpush1.bf16.msra.mxu0 %v2012
        %2032 = vmatprep.subr.bf16.mxu0 0
        %2033 = vmatpush1.bf16.msra.mxu0 %v2028
        %2034 = vmatprep.subr.bf16.mxu0 0
        %2035 = vmatpush1.bf16.msra.mxu0 0
        %2036 = vmatprep.subr.bf16.mxu0 0
        %2037 = vmatpush1.bf16.msra.mxu0 0
        %2038 = vmatprep.subr.bf16.mxu0 0
        %2039 = vmatpush1.bf16.msra.mxu0 0
        %2040 = vmatprep.subr.bf16.mxu0 0
        %2041 = vmatpush1.bf16.msra.mxu0 0
        %2042 = vmatprep.subr.bf16.mxu0 0
        %2043 = vmatpush1.bf16.msra.mxu0 0
        %2044 = vmatprep.subr.bf16.mxu0 0
        %2045 = vmatpush1.bf16.msra.mxu0 0
        %2046 = vmatprep.subr.bf16.mxu0 0
        %2047 = vmatpush1.bf16.msra.mxu0 0
        %2048 = vmatprep.subr.bf16.mxu0 0
        %2049 = vmatpush1.bf16.msra.mxu0 0
        %2050 = vmatprep.subr.bf16.mxu0 0
        %2051 = vmatpush1.bf16.msra.mxu0 0
        %2052 = vmatprep.subr.bf16.mxu0 0
        %2053 = vmatpush1.bf16.msra.mxu0 0
        %2054 = vmatprep.subr.bf16.mxu0 0
        %2055 = vmatpush1.bf16.msra.mxu0 0
        %2056 = vmatprep.subr.bf16.mxu0 0
        %2057 = vmatpush1.bf16.msra.mxu0 0
        %2058 = vmatprep.subr.bf16.mxu0 0
        %2059 = vmatpush1.bf16.msra.mxu0 0
        %2060 = vmatprep.subr.bf16.mxu0 0
        %2061 = vmatpush1.bf16.msra.mxu0 0
        %2062 = vmatprep.mubr.bf16.mxu0 0
        %2063 = vmatmul.mubr.bf16.gmra.mrb[0].mxu0 %v2016
        %v2064 = vpop.f32.mrb[0].mxu0
        %v2065 = vadd.f32 0.0, %v2064
        %v2066 = vpop.f32.mrb[0].mxu0
        %v2067 = vpop.f32.mrb[0].mxu0
        %v2068 = vadd.f32 0.0, %v2067
        %v2069 = vpop.f32.mrb[0].mxu0
        %2070 = vmatprep.mubr.bf16.mxu0 0
        %2071 = vmatmul.mubr.bf16.gmra.mrb[0].mxu0 %v2019
        %v2072 = vpop.f32.mrb[0].mxu0
        %v2073 = vadd.f32 0.0, %v2072
        %v2074 = vpop.f32.mrb[0].mxu0
        %v2075 = vpop.f32.mrb[0].mxu0
        %v2076 = vadd.f32 0.0, %v2075
        %v2077 = vpop.f32.mrb[0].mxu0
        %2078 = vmatprep.mubr.bf16.mxu0 0
        %2079 = vmatmul.mubr.bf16.gmra.mrb[0].mxu0 %v2022
        %v2080 = vpop.f32.mrb[0].mxu0
        %v2081 = vadd.f32 0.0, %v2080
        %v2082 = vpop.f32.mrb[0].mxu0
        %v2083 = vpop.f32.mrb[0].mxu0
        %v2084 = vadd.f32 0.0, %v2083
        %v2085 = vpop.f32.mrb[0].mxu0
        %2086 = vmatprep.mubr.bf16.mxu0 0
        %2087 = vmatmul.mubr.bf16.gmra.mrb[0].mxu0 %v2025
        %v2088 = vpop.f32.mrb[0].mxu0
        %v2089 = vadd.f32 0.0, %v2088
        %v2090 = vpop.f32.mrb[0].mxu0
        %v2091 = vpop.f32.mrb[0].mxu0
        %v2092 = vadd.f32 0.0, %v2091
        %v2093 = vpop.f32.mrb[0].mxu0
        %2094 = vdwg.mxu0
        %v2095 = vadd.f32 %v1682, %v2065
        %v2096 = vadd.f32 %v1685, %v2068
        %v2097 = vadd.f32 %v1690, %v2073
        %v2098 = vadd.f32 %v1693, %v2076
        %v2099 = vadd.f32 %v1698, %v2081
        %v2100 = vadd.f32 %v1701, %v2084
        %v2101 = vadd.f32 %v1706, %v2089
        %v2102 = vadd.f32 %v1709, %v2092
        %2103 = vrot.lane.b32.xlu0 %v940, 68
        %v2104 = vpop.permute.xlu0 %2103
        %2105 = vrot.lane.b32.xlu0 %v943, 68
        %v2106 = vpop.permute.xlu0 %2105
        %2107 = vrot.lane.b32.xlu0 %v946, 68
        %v2108 = vpop.permute.xlu0 %2107
        %2109 = vrot.lane.b32.xlu0 %v949, 68
        %v2110 = vpop.permute.xlu0 %2109
        %2111 = vrot.lane.b32.xlu0 %v941, 68
        %v2112 = vpop.permute.xlu0 %2111
        %2113 = vrot.lane.b32.xlu0 %v944, 68
        %v2114 = vpop.permute.xlu0 %2113
        %2115 = vrot.lane.b32.xlu0 %v947, 68
        %v2116 = vpop.permute.xlu0 %2115
        %2117 = vrot.lane.b32.xlu0 %v950, 68
        %v2118 = vpop.permute.xlu0 %2117
        %v2120 = vsel %vm960, %v2104, 0
        %v2123 = vsel %vm960, %v2106, 0
        %v2126 = vsel %vm960, %v2108, 0
        %v2129 = vsel %vm960, %v2110, 0
        %v2132 = vsel %vm960, %v2112, 0
        %v2135 = vsel %vm960, %v2114, 0
        %v2138 = vsel %vm960, %v2116, 0
        %v2141 = vsel %vm960, %v2118, 0
        %2143 = vmatprep.subr.bf16.mxu0 0
        %2144 = vmatpush1.bf16.xpose.msra.mxu0 %v2132
        %2145 = vmatprep.subr.bf16.mxu0 0
        %2146 = vmatpush1.bf16.xpose.msra.mxu0 %v2135
        %2147 = vmatprep.subr.bf16.mxu0 0
        %2148 = vmatpush1.bf16.xpose.msra.mxu0 %v2138
        %2149 = vmatprep.subr.bf16.mxu0 0
        %2150 = vmatpush1.bf16.xpose.msra.mxu0 %v2141
        %2151 = vmatprep.subr.bf16.mxu0 0
        %2152 = vmatpush1.bf16.xpose.msra.mxu0 0
        %2153 = vmatprep.subr.bf16.mxu0 0
        %2154 = vmatpush1.bf16.xpose.msra.mxu0 0
        %2155 = vmatprep.subr.bf16.mxu0 0
        %2156 = vmatpush1.bf16.xpose.msra.mxu0 0
        %2157 = vmatprep.subr.bf16.mxu0 0
        %2158 = vmatpush1.bf16.xpose.msra.mxu0 0
        %2159 = vmatprep.subr.bf16.mxu0 0
        %2160 = vmatpush1.bf16.xpose.msra.mxu0 0
        %2161 = vmatprep.subr.bf16.mxu0 0
        %2162 = vmatpush1.bf16.xpose.msra.mxu0 0
        %2163 = vmatprep.subr.bf16.mxu0 0
        %2164 = vmatpush1.bf16.xpose.msra.mxu0 0
        %2165 = vmatprep.subr.bf16.mxu0 0
        %2166 = vmatpush1.bf16.xpose.msra.mxu0 0
        %2167 = vmatprep.subr.bf16.mxu0 0
        %2168 = vmatpush1.bf16.xpose.msra.mxu0 0
        %2169 = vmatprep.subr.bf16.mxu0 0
        %2170 = vmatpush1.bf16.xpose.msra.mxu0 0
        %2171 = vmatprep.subr.bf16.mxu0 0
        %2172 = vmatpush1.bf16.xpose.msra.mxu0 0
        %2173 = vmatprep.subr.bf16.mxu0 0
        %2174 = vmatpush1.bf16.xpose.msra.mxu0 0
        %2175 = vmatprep.mubr.bf16.mxu0 0
        %2176 = vmatmul.mubr.bf16.gmra.mrb[0].mxu0 %v2120
        %v2177 = vpop.f32.mrb[0].mxu0
        %v2178 = vadd.f32 %v952, %v2177
        %v2179 = vpop.f32.mrb[0].mxu0
        %v2180 = vpop.f32.mrb[0].mxu0
        %v2181 = vadd.f32 %v953, %v2180
        %v2182 = vpop.f32.mrb[0].mxu0
        %2183 = vmatprep.mubr.bf16.mxu0 0
        %2184 = vmatmul.mubr.bf16.gmra.mrb[0].mxu0 %v2123
        %v2185 = vpop.f32.mrb[0].mxu0
        %v2186 = vadd.f32 %v954, %v2185
        %v2187 = vpop.f32.mrb[0].mxu0
        %v2188 = vpop.f32.mrb[0].mxu0
        %v2189 = vadd.f32 %v955, %v2188
        %v2190 = vpop.f32.mrb[0].mxu0
        %2191 = vmatprep.mubr.bf16.mxu0 0
        %2192 = vmatmul.mubr.bf16.gmra.mrb[0].mxu0 %v2126
        %v2193 = vpop.f32.mrb[0].mxu0
        %v2194 = vadd.f32 %v956, %v2193
        %v2195 = vpop.f32.mrb[0].mxu0
        %v2196 = vpop.f32.mrb[0].mxu0
        %v2197 = vadd.f32 %v957, %v2196
        %v2198 = vpop.f32.mrb[0].mxu0
        %2199 = vmatprep.mubr.bf16.mxu0 0
        %2200 = vmatmul.mubr.bf16.gmra.mrb[0].mxu0 %v2129
        %v2201 = vpop.f32.mrb[0].mxu0
        %v2202 = vadd.f32 %v958, %v2201
        %v2203 = vpop.f32.mrb[0].mxu0
        %v2204 = vpop.f32.mrb[0].mxu0
        %v2205 = vadd.f32 %v959, %v2204
        %v2206 = vpop.f32.mrb[0].mxu0
        %2207 = vdwg.mxu0
        %v2208 = vsel %vm1050, %v2178, -inf
        %2209 = vmax.xlane.f32.xlu0 %v2208
        %v2210 = vpop.xlane.xlu0 %2209
        %v2211 = vsel %vm1050, %v2181, -inf
        %2212 = vmax.xlane.f32.xlu0 %v2211
        %v2213 = vpop.xlane.xlu0 %2212
        %v2214 = vsel %vm1050, %v2186, -inf
        %2215 = vmax.xlane.f32.xlu0 %v2214
        %v2216 = vpop.xlane.xlu0 %2215
        %v2217 = vsel %vm1050, %v2189, -inf
        %2218 = vmax.xlane.f32.xlu0 %v2217
        %v2219 = vpop.xlane.xlu0 %2218
        %v2220 = vsel %vm1050, %v2194, -inf
        %2221 = vmax.xlane.f32.xlu0 %v2220
        %v2222 = vpop.xlane.xlu0 %2221
        %v2223 = vsel %vm1050, %v2197, -inf
        %2224 = vmax.xlane.f32.xlu0 %v2223
        %v2225 = vpop.xlane.xlu0 %2224
        %v2226 = vsel %vm1050, %v2202, -inf
        %2227 = vmax.xlane.f32.xlu0 %v2226
        %v2228 = vpop.xlane.xlu0 %2227
        %v2229 = vsel %vm1050, %v2205, -inf
        %2230 = vmax.xlane.f32.xlu0 %v2229
        %v2231 = vpop.xlane.xlu0 %2230
        %v2232 = vsub.f32 %v2178, %v2210
        %v2233 = vsub.f32 %v2181, %v2213
        %v2234 = vsub.f32 %v2186, %v2216
        %v2235 = vsub.f32 %v2189, %v2219
        %v2236 = vsub.f32 %v2194, %v2222
        %v2237 = vsub.f32 %v2197, %v2225
        %v2238 = vsub.f32 %v2202, %v2228
        %v2239 = vsub.f32 %v2205, %v2231
        %v2240 = vmul.f32 %v2232, 1.442695
        %v2241 = vpow.pop %v2240
        %v2242 = vmul.f32 %v2233, 1.442695
        %v2243 = vpow.pop %v2242
        %v2244 = vmul.f32 %v2234, 1.442695
        %v2245 = vpow.pop %v2244
        %v2246 = vmul.f32 %v2235, 1.442695
        %v2247 = vpow.pop %v2246
        %v2248 = vmul.f32 %v2236, 1.442695
        %v2249 = vpow.pop %v2248
        %v2250 = vmul.f32 %v2237, 1.442695
        %v2251 = vpow.pop %v2250
        %v2252 = vmul.f32 %v2238, 1.442695
        %v2253 = vpow.pop %v2252
        %v2254 = vmul.f32 %v2239, 1.442695
        %v2255 = vpow.pop %v2254
        %v2256 = vsel %vm1050, %v2241, 0.0
        %2257 = vadd.xlane.f32.xlu0 %v2256
        %v2258 = vpop.xlane.xlu0 %2257
        %v2259 = vsel %vm1050, %v2243, 0.0
        %2260 = vadd.xlane.f32.xlu0 %v2259
        %v2261 = vpop.xlane.xlu0 %2260
        %v2262 = vsel %vm1050, %v2245, 0.0
        %2263 = vadd.xlane.f32.xlu0 %v2262
        %v2264 = vpop.xlane.xlu0 %2263
        %v2265 = vsel %vm1050, %v2247, 0.0
        %2266 = vadd.xlane.f32.xlu0 %v2265
        %v2267 = vpop.xlane.xlu0 %2266
        %v2268 = vsel %vm1050, %v2249, 0.0
        %2269 = vadd.xlane.f32.xlu0 %v2268
        %v2270 = vpop.xlane.xlu0 %2269
        %v2271 = vsel %vm1050, %v2251, 0.0
        %2272 = vadd.xlane.f32.xlu0 %v2271
        %v2273 = vpop.xlane.xlu0 %2272
        %v2274 = vsel %vm1050, %v2253, 0.0
        %2275 = vadd.xlane.f32.xlu0 %v2274
        %v2276 = vpop.xlane.xlu0 %2275
        %v2277 = vsel %vm1050, %v2255, 0.0
        %2278 = vadd.xlane.f32.xlu0 %v2277
        %v2279 = vpop.xlane.xlu0 %2278
        %v2280 = vrcp.pop %v2258
        %v2281 = vrcp.pop %v2261
        %v2282 = vrcp.pop %v2264
        %v2283 = vrcp.pop %v2267
        %v2284 = vrcp.pop %v2270
        %v2285 = vrcp.pop %v2273
        %v2286 = vrcp.pop %v2276
        %v2287 = vrcp.pop %v2279
        %v2288 = vmul.f32 %v2241, %v2280
        %v2289 = vmul.f32 %v2243, %v2281
        %v2290 = vmul.f32 %v2245, %v2282
        %v2291 = vmul.f32 %v2247, %v2283
        %v2292 = vmul.f32 %v2249, %v2284
        %v2293 = vmul.f32 %v2251, %v2285
        %v2294 = vmul.f32 %v2253, %v2286
        %v2295 = vmul.f32 %v2255, %v2287
        %v2296 = vpack.c.bf16 %v2289, %v2288
        %v2297 = vpack.c.bf16 %v2291, %v2290
        %v2298 = vpack.c.bf16 %v2293, %v2292
        %v2299 = vpack.c.bf16 %v2295, %v2294
        %2300 = vrot.lane.b32.xlu0 %v942, 68
        %v2301 = vpop.permute.xlu0 %2300
        %2302 = vrot.lane.b32.xlu0 %v945, 68
        %v2303 = vpop.permute.xlu0 %2302
        %2304 = vrot.lane.b32.xlu0 %v948, 68
        %v2305 = vpop.permute.xlu0 %2304
        %2306 = vrot.lane.b32.xlu0 %v951, 68
        %v2307 = vpop.permute.xlu0 %2306
        %v2313 = vsel %vm1050, %v2296, 0
        %v2316 = vsel %vm1050, %v2297, 0
        %v2319 = vsel %vm1050, %v2298, 0
        %v2322 = vsel %vm1050, %v2299, 0
        %2324 = vmatprep.subr.bf16.mxu0 0
        %2325 = vmatpush1.bf16.msra.mxu0 %v2301
        %2326 = vmatprep.subr.bf16.mxu0 0
        %2327 = vmatpush1.bf16.msra.mxu0 %v2303
        %2328 = vmatprep.subr.bf16.mxu0 0
        %2329 = vmatpush1.bf16.msra.mxu0 %v2305
        %2330 = vmatprep.subr.bf16.mxu0 0
        %2331 = vmatpush1.bf16.msra.mxu0 %v2307
        %2332 = vmatprep.subr.bf16.mxu0 0
        %2333 = vmatpush1.bf16.msra.mxu0 0
        %2334 = vmatprep.subr.bf16.mxu0 0
        %2335 = vmatpush1.bf16.msra.mxu0 0
        %2336 = vmatprep.subr.bf16.mxu0 0
        %2337 = vmatpush1.bf16.msra.mxu0 0
        %2338 = vmatprep.subr.bf16.mxu0 0
        %2339 = vmatpush1.bf16.msra.mxu0 0
        %2340 = vmatprep.subr.bf16.mxu0 0
        %2341 = vmatpush1.bf16.msra.mxu0 0
        %2342 = vmatprep.subr.bf16.mxu0 0
        %2343 = vmatpush1.bf16.msra.mxu0 0
        %2344 = vmatprep.subr.bf16.mxu0 0
        %2345 = vmatpush1.bf16.msra.mxu0 0
        %2346 = vmatprep.subr.bf16.mxu0 0
        %2347 = vmatpush1.bf16.msra.mxu0 0
        %2348 = vmatprep.subr.bf16.mxu0 0
        %2349 = vmatpush1.bf16.msra.mxu0 0
        %2350 = vmatprep.subr.bf16.mxu0 0
        %2351 = vmatpush1.bf16.msra.mxu0 0
        %2352 = vmatprep.subr.bf16.mxu0 0
        %2353 = vmatpush1.bf16.msra.mxu0 0
        %2354 = vmatprep.subr.bf16.mxu0 0
        %2355 = vmatpush1.bf16.msra.mxu0 0
        %2356 = vmatprep.mubr.bf16.mxu0 0
        %2357 = vmatmul.mubr.bf16.gmra.mrb[0].mxu0 %v2313
        %v2358 = vpop.f32.mrb[0].mxu0
        %v2359 = vadd.f32 0.0, %v2358
        %v2360 = vpop.f32.mrb[0].mxu0
        %v2361 = vpop.f32.mrb[0].mxu0
        %v2362 = vadd.f32 0.0, %v2361
        %v2363 = vpop.f32.mrb[0].mxu0
        %2364 = vmatprep.mubr.bf16.mxu0 0
        %2365 = vmatmul.mubr.bf16.gmra.mrb[0].mxu0 %v2316
        %v2366 = vpop.f32.mrb[0].mxu0
        %v2367 = vadd.f32 0.0, %v2366
        %v2368 = vpop.f32.mrb[0].mxu0
        %v2369 = vpop.f32.mrb[0].mxu0
        %v2370 = vadd.f32 0.0, %v2369
        %v2371 = vpop.f32.mrb[0].mxu0
        %2372 = vmatprep.mubr.bf16.mxu0 0
        %2373 = vmatmul.mubr.bf16.gmra.mrb[0].mxu0 %v2319
        %v2374 = vpop.f32.mrb[0].mxu0
        %v2375 = vadd.f32 0.0, %v2374
        %v2376 = vpop.f32.mrb[0].mxu0
        %v2377 = vpop.f32.mrb[0].mxu0
        %v2378 = vadd.f32 0.0, %v2377
        %v2379 = vpop.f32.mrb[0].mxu0
        %2380 = vmatprep.mubr.bf16.mxu0 0
        %2381 = vmatmul.mubr.bf16.gmra.mrb[0].mxu0 %v2322
        %v2382 = vpop.f32.mrb[0].mxu0
        %v2383 = vadd.f32 0.0, %v2382
        %v2384 = vpop.f32.mrb[0].mxu0
        %v2385 = vpop.f32.mrb[0].mxu0
        %v2386 = vadd.f32 0.0, %v2385
        %v2387 = vpop.f32.mrb[0].mxu0
        %2388 = vdwg.mxu0
        %v2389 = vpack.c.bf16 %v2362, %v2359
        %v2390 = vpack.c.bf16 %v2370, %v2367
        %v2391 = vpack.c.bf16 %v2378, %v2375
        %v2392 = vpack.c.bf16 %v2386, %v2383
        %s2393 = scalar_lea.vmem [#allocation7], 36
        %v2394 = vld [vmem:[%s2393] sm:$0xf]
        %v2395 = vld [vmem:[%s2393 + $0x4] sm:$0xf]
        %v2396 = vld [vmem:[%s2393 + $0x8] sm:$0x3]
        %v2400 = vunpack.c.l.b16 %v2394
        %v2401 = vunpack.c.l.b16 %v2395
        %v2402 = vunpack.c.l.b16 %v2396
        %v2403 = vpack.c.b16 %v2401, %v2400
        %v2404 = vpack.c.b16 %v2402, %v2402
        %v2407 = vsel %vm960, %v2389, 0
        %v2410 = vsel %vm960, %v2390, 0
        %v2413 = vsel %vm960, %v2391, 0
        %v2416 = vsel %vm960, %v2392, 0
        %v2419 = vsel %vm1554, %v2404, 0
        %2421 = vmatprep.subr.bf16.mxu0 0
        %2422 = vmatpush1.bf16.msra.mxu0 %v2403
        %2423 = vmatprep.subr.bf16.mxu0 0
        %2424 = vmatpush1.bf16.msra.mxu0 %v2419
        %2425 = vmatprep.subr.bf16.mxu0 0
        %2426 = vmatpush1.bf16.msra.mxu0 0
        %2427 = vmatprep.subr.bf16.mxu0 0
        %2428 = vmatpush1.bf16.msra.mxu0 0
        %2429 = vmatprep.subr.bf16.mxu0 0
        %2430 = vmatpush1.bf16.msra.mxu0 0
        %2431 = vmatprep.subr.bf16.mxu0 0
        %2432 = vmatpush1.bf16.msra.mxu0 0
        %2433 = vmatprep.subr.bf16.mxu0 0
        %2434 = vmatpush1.bf16.msra.mxu0 0
        %2435 = vmatprep.subr.bf16.mxu0 0
        %2436 = vmatpush1.bf16.msra.mxu0 0
        %2437 = vmatprep.subr.bf16.mxu0 0
        %2438 = vmatpush1.bf16.msra.mxu0 0
        %2439 = vmatprep.subr.bf16.mxu0 0
        %2440 = vmatpush1.bf16.msra.mxu0 0
        %2441 = vmatprep.subr.bf16.mxu0 0
        %2442 = vmatpush1.bf16.msra.mxu0 0
        %2443 = vmatprep.subr.bf16.mxu0 0
        %2444 = vmatpush1.bf16.msra.mxu0 0
        %2445 = vmatprep.subr.bf16.mxu0 0
        %2446 = vmatpush1.bf16.msra.mxu0 0
        %2447 = vmatprep.subr.bf16.mxu0 0
        %2448 = vmatpush1.bf16.msra.mxu0 0
        %2449 = vmatprep.subr.bf16.mxu0 0
        %2450 = vmatpush1.bf16.msra.mxu0 0
        %2451 = vmatprep.subr.bf16.mxu0 0
        %2452 = vmatpush1.bf16.msra.mxu0 0
        %2453 = vmatprep.mubr.bf16.mxu0 0
        %2454 = vmatmul.mubr.bf16.gmra.mrb[0].mxu0 %v2407
        %v2455 = vpop.f32.mrb[0].mxu0
        %v2456 = vadd.f32 0.0, %v2455
        %v2457 = vpop.f32.mrb[0].mxu0
        %v2458 = vpop.f32.mrb[0].mxu0
        %v2459 = vadd.f32 0.0, %v2458
        %v2460 = vpop.f32.mrb[0].mxu0
        %2461 = vmatprep.mubr.bf16.mxu0 0
        %2462 = vmatmul.mubr.bf16.gmra.mrb[0].mxu0 %v2410
        %v2463 = vpop.f32.mrb[0].mxu0
        %v2464 = vadd.f32 0.0, %v2463
        %v2465 = vpop.f32.mrb[0].mxu0
        %v2466 = vpop.f32.mrb[0].mxu0
        %v2467 = vadd.f32 0.0, %v2466
        %v2468 = vpop.f32.mrb[0].mxu0
        %2469 = vmatprep.mubr.bf16.mxu0 0
        %2470 = vmatmul.mubr.bf16.gmra.mrb[0].mxu0 %v2413
        %v2471 = vpop.f32.mrb[0].mxu0
        %v2472 = vadd.f32 0.0, %v2471
        %v2473 = vpop.f32.mrb[0].mxu0
        %v2474 = vpop.f32.mrb[0].mxu0
        %v2475 = vadd.f32 0.0, %v2474
        %v2476 = vpop.f32.mrb[0].mxu0
        %2477 = vmatprep.mubr.bf16.mxu0 0
        %2478 = vmatmul.mubr.bf16.gmra.mrb[0].mxu0 %v2416
        %v2479 = vpop.f32.mrb[0].mxu0
        %v2480 = vadd.f32 0.0, %v2479
        %v2481 = vpop.f32.mrb[0].mxu0
        %v2482 = vpop.f32.mrb[0].mxu0
        %v2483 = vadd.f32 0.0, %v2482
        %v2484 = vpop.f32.mrb[0].mxu0
        %2485 = vdwg.mxu0
        %v2486 = vadd.f32 %v2095, %v2456
        %v2487 = vadd.f32 %v2096, %v2459
        %v2488 = vadd.f32 %v2097, %v2464
        %v2489 = vadd.f32 %v2098, %v2467
        %v2490 = vadd.f32 %v2099, %v2472
        %v2491 = vadd.f32 %v2100, %v2475
        %v2492 = vadd.f32 %v2101, %v2480
        %v2493 = vadd.f32 %v2102, %v2483
        %2494 = vrot.lane.b32.xlu0 %v940, 48
        %v2495 = vpop.permute.xlu0 %2494
        %2496 = vrot.lane.b32.xlu0 %v943, 48
        %v2497 = vpop.permute.xlu0 %2496
        %2498 = vrot.lane.b32.xlu0 %v946, 48
        %v2499 = vpop.permute.xlu0 %2498
        %2500 = vrot.lane.b32.xlu0 %v949, 48
        %v2501 = vpop.permute.xlu0 %2500
        %2502 = vrot.lane.b32.xlu0 %v941, 48
        %v2503 = vpop.permute.xlu0 %2502
        %2504 = vrot.lane.b32.xlu0 %v944, 48
        %v2505 = vpop.permute.xlu0 %2504
        %2506 = vrot.lane.b32.xlu0 %v947, 48
        %v2507 = vpop.permute.xlu0 %2506
        %2508 = vrot.lane.b32.xlu0 %v950, 48
        %v2509 = vpop.permute.xlu0 %2508
        %v2511 = vsel %vm960, %v2495, 0
        %v2514 = vsel %vm960, %v2497, 0
        %v2517 = vsel %vm960, %v2499, 0
        %v2520 = vsel %vm960, %v2501, 0
        %v2523 = vsel %vm960, %v2503, 0
        %v2526 = vsel %vm960, %v2505, 0
        %v2529 = vsel %vm960, %v2507, 0
        %v2532 = vsel %vm960, %v2509, 0
        %2534 = vmatprep.subr.bf16.mxu0 0
        %2535 = vmatpush1.bf16.xpose.msra.mxu0 %v2523
        %2536 = vmatprep.subr.bf16.mxu0 0
        %2537 = vmatpush1.bf16.xpose.msra.mxu0 %v2526
        %2538 = vmatprep.subr.bf16.mxu0 0
        %2539 = vmatpush1.bf16.xpose.msra.mxu0 %v2529
        %2540 = vmatprep.subr.bf16.mxu0 0
        %2541 = vmatpush1.bf16.xpose.msra.mxu0 %v2532
        %2542 = vmatprep.subr.bf16.mxu0 0
        %2543 = vmatpush1.bf16.xpose.msra.mxu0 0
        %2544 = vmatprep.subr.bf16.mxu0 0
        %2545 = vmatpush1.bf16.xpose.msra.mxu0 0
        %2546 = vmatprep.subr.bf16.mxu0 0
        %2547 = vmatpush1.bf16.xpose.msra.mxu0 0
        %2548 = vmatprep.subr.bf16.mxu0 0
        %2549 = vmatpush1.bf16.xpose.msra.mxu0 0
        %2550 = vmatprep.subr.bf16.mxu0 0
        %2551 = vmatpush1.bf16.xpose.msra.mxu0 0
        %2552 = vmatprep.subr.bf16.mxu0 0
        %2553 = vmatpush1.bf16.xpose.msra.mxu0 0
        %2554 = vmatprep.subr.bf16.mxu0 0
        %2555 = vmatpush1.bf16.xpose.msra.mxu0 0
        %2556 = vmatprep.subr.bf16.mxu0 0
        %2557 = vmatpush1.bf16.xpose.msra.mxu0 0
        %2558 = vmatprep.subr.bf16.mxu0 0
        %2559 = vmatpush1.bf16.xpose.msra.mxu0 0
        %2560 = vmatprep.subr.bf16.mxu0 0
        %2561 = vmatpush1.bf16.xpose.msra.mxu0 0
        %2562 = vmatprep.subr.bf16.mxu0 0
        %2563 = vmatpush1.bf16.xpose.msra.mxu0 0
        %2564 = vmatprep.subr.bf16.mxu0 0
        %2565 = vmatpush1.bf16.xpose.msra.mxu0 0
        %2566 = vmatprep.mubr.bf16.mxu0 0
        %2567 = vmatmul.mubr.bf16.gmra.mrb[0].mxu0 %v2511
        %v2568 = vpop.f32.mrb[0].mxu0
        %v2569 = vadd.f32 %v952, %v2568
        %v2570 = vpop.f32.mrb[0].mxu0
        %v2571 = vpop.f32.mrb[0].mxu0
        %v2572 = vadd.f32 %v953, %v2571
        %v2573 = vpop.f32.mrb[0].mxu0
        %2574 = vmatprep.mubr.bf16.mxu0 0
        %2575 = vmatmul.mubr.bf16.gmra.mrb[0].mxu0 %v2514
        %v2576 = vpop.f32.mrb[0].mxu0
        %v2577 = vadd.f32 %v954, %v2576
        %v2578 = vpop.f32.mrb[0].mxu0
        %v2579 = vpop.f32.mrb[0].mxu0
        %v2580 = vadd.f32 %v955, %v2579
        %v2581 = vpop.f32.mrb[0].mxu0
        %2582 = vmatprep.mubr.bf16.mxu0 0
        %2583 = vmatmul.mubr.bf16.gmra.mrb[0].mxu0 %v2517
        %v2584 = vpop.f32.mrb[0].mxu0
        %v2585 = vadd.f32 %v956, %v2584
        %v2586 = vpop.f32.mrb[0].mxu0
        %v2587 = vpop.f32.mrb[0].mxu0
        %v2588 = vadd.f32 %v957, %v2587
        %v2589 = vpop.f32.mrb[0].mxu0
        %2590 = vmatprep.mubr.bf16.mxu0 0
        %2591 = vmatmul.mubr.bf16.gmra.mrb[0].mxu0 %v2520
        %v2592 = vpop.f32.mrb[0].mxu0
        %v2593 = vadd.f32 %v958, %v2592
        %v2594 = vpop.f32.mrb[0].mxu0
        %v2595 = vpop.f32.mrb[0].mxu0
        %v2596 = vadd.f32 %v959, %v2595
        %v2597 = vpop.f32.mrb[0].mxu0
        %2598 = vdwg.mxu0
        %v2599 = vsel %vm1050, %v2569, -inf
        %2600 = vmax.xlane.f32.xlu0 %v2599
        %v2601 = vpop.xlane.xlu0 %2600
        %v2602 = vsel %vm1050, %v2572, -inf
        %2603 = vmax.xlane.f32.xlu0 %v2602
        %v2604 = vpop.xlane.xlu0 %2603
        %v2605 = vsel %vm1050, %v2577, -inf
        %2606 = vmax.xlane.f32.xlu0 %v2605
        %v2607 = vpop.xlane.xlu0 %2606
        %v2608 = vsel %vm1050, %v2580, -inf
        %2609 = vmax.xlane.f32.xlu0 %v2608
        %v2610 = vpop.xlane.xlu0 %2609
        %v2611 = vsel %vm1050, %v2585, -inf
        %2612 = vmax.xlane.f32.xlu0 %v2611
        %v2613 = vpop.xlane.xlu0 %2612
        %v2614 = vsel %vm1050, %v2588, -inf
        %2615 = vmax.xlane.f32.xlu0 %v2614
        %v2616 = vpop.xlane.xlu0 %2615
        %v2617 = vsel %vm1050, %v2593, -inf
        %2618 = vmax.xlane.f32.xlu0 %v2617
        %v2619 = vpop.xlane.xlu0 %2618
        %v2620 = vsel %vm1050, %v2596, -inf
        %2621 = vmax.xlane.f32.xlu0 %v2620
        %v2622 = vpop.xlane.xlu0 %2621
        %v2623 = vsub.f32 %v2569, %v2601
        %v2624 = vsub.f32 %v2572, %v2604
        %v2625 = vsub.f32 %v2577, %v2607
        %v2626 = vsub.f32 %v2580, %v2610
        %v2627 = vsub.f32 %v2585, %v2613
        %v2628 = vsub.f32 %v2588, %v2616
        %v2629 = vsub.f32 %v2593, %v2619
        %v2630 = vsub.f32 %v2596, %v2622
        %v2631 = vmul.f32 %v2623, 1.442695
        %v2632 = vpow.pop %v2631
        %v2633 = vmul.f32 %v2624, 1.442695
        %v2634 = vpow.pop %v2633
        %v2635 = vmul.f32 %v2625, 1.442695
        %v2636 = vpow.pop %v2635
        %v2637 = vmul.f32 %v2626, 1.442695
        %v2638 = vpow.pop %v2637
        %v2639 = vmul.f32 %v2627, 1.442695
        %v2640 = vpow.pop %v2639
        %v2641 = vmul.f32 %v2628, 1.442695
        %v2642 = vpow.pop %v2641
        %v2643 = vmul.f32 %v2629, 1.442695
        %v2644 = vpow.pop %v2643
        %v2645 = vmul.f32 %v2630, 1.442695
        %v2646 = vpow.pop %v2645
        %v2647 = vsel %vm1050, %v2632, 0.0
        %2648 = vadd.xlane.f32.xlu0 %v2647
        %v2649 = vpop.xlane.xlu0 %2648
        %v2650 = vsel %vm1050, %v2634, 0.0
        %2651 = vadd.xlane.f32.xlu0 %v2650
        %v2652 = vpop.xlane.xlu0 %2651
        %v2653 = vsel %vm1050, %v2636, 0.0
        %2654 = vadd.xlane.f32.xlu0 %v2653
        %v2655 = vpop.xlane.xlu0 %2654
        %v2656 = vsel %vm1050, %v2638, 0.0
        %2657 = vadd.xlane.f32.xlu0 %v2656
        %v2658 = vpop.xlane.xlu0 %2657
        %v2659 = vsel %vm1050, %v2640, 0.0
        %2660 = vadd.xlane.f32.xlu0 %v2659
        %v2661 = vpop.xlane.xlu0 %2660
        %v2662 = vsel %vm1050, %v2642, 0.0
        %2663 = vadd.xlane.f32.xlu0 %v2662
        %v2664 = vpop.xlane.xlu0 %2663
        %v2665 = vsel %vm1050, %v2644, 0.0
        %2666 = vadd.xlane.f32.xlu0 %v2665
        %v2667 = vpop.xlane.xlu0 %2666
        %v2668 = vsel %vm1050, %v2646, 0.0
        %2669 = vadd.xlane.f32.xlu0 %v2668
        %v2670 = vpop.xlane.xlu0 %2669
        %v2671 = vrcp.pop %v2649
        %v2672 = vrcp.pop %v2652
        %v2673 = vrcp.pop %v2655
        %v2674 = vrcp.pop %v2658
        %v2675 = vrcp.pop %v2661
        %v2676 = vrcp.pop %v2664
        %v2677 = vrcp.pop %v2667
        %v2678 = vrcp.pop %v2670
        %v2679 = vmul.f32 %v2632, %v2671
        %v2680 = vmul.f32 %v2634, %v2672
        %v2681 = vmul.f32 %v2636, %v2673
        %v2682 = vmul.f32 %v2638, %v2674
        %v2683 = vmul.f32 %v2640, %v2675
        %v2684 = vmul.f32 %v2642, %v2676
        %v2685 = vmul.f32 %v2644, %v2677
        %v2686 = vmul.f32 %v2646, %v2678
        %v2687 = vpack.c.bf16 %v2680, %v2679
        %v2688 = vpack.c.bf16 %v2682, %v2681
        %v2689 = vpack.c.bf16 %v2684, %v2683
        %v2690 = vpack.c.bf16 %v2686, %v2685
        %2691 = vrot.lane.b32.xlu0 %v942, 48
        %v2692 = vpop.permute.xlu0 %2691
        %2693 = vrot.lane.b32.xlu0 %v945, 48
        %v2694 = vpop.permute.xlu0 %2693
        %2695 = vrot.lane.b32.xlu0 %v948, 48
        %v2696 = vpop.permute.xlu0 %2695
        %2697 = vrot.lane.b32.xlu0 %v951, 48
        %v2698 = vpop.permute.xlu0 %2697
        %v2704 = vsel %vm1050, %v2687, 0
        %v2707 = vsel %vm1050, %v2688, 0
        %v2710 = vsel %vm1050, %v2689, 0
        %v2713 = vsel %vm1050, %v2690, 0
        %2715 = vmatprep.subr.bf16.mxu0 0
        %2716 = vmatpush1.bf16.msra.mxu0 %v2692
        %2717 = vmatprep.subr.bf16.mxu0 0
        %2718 = vmatpush1.bf16.msra.mxu0 %v2694
        %2719 = vmatprep.subr.bf16.mxu0 0
        %2720 = vmatpush1.bf16.msra.mxu0 %v2696
        %2721 = vmatprep.subr.bf16.mxu0 0
        %2722 = vmatpush1.bf16.msra.mxu0 %v2698
        %2723 = vmatprep.subr.bf16.mxu0 0
        %2724 = vmatpush1.bf16.msra.mxu0 0
        %2725 = vmatprep.subr.bf16.mxu0 0
        %2726 = vmatpush1.bf16.msra.mxu0 0
        %2727 = vmatprep.subr.bf16.mxu0 0
        %2728 = vmatpush1.bf16.msra.mxu0 0
        %2729 = vmatprep.subr.bf16.mxu0 0
        %2730 = vmatpush1.bf16.msra.mxu0 0
        %2731 = vmatprep.subr.bf16.mxu0 0
        %2732 = vmatpush1.bf16.msra.mxu0 0
        %2733 = vmatprep.subr.bf16.mxu0 0
        %2734 = vmatpush1.bf16.msra.mxu0 0
        %2735 = vmatprep.subr.bf16.mxu0 0
        %2736 = vmatpush1.bf16.msra.mxu0 0
        %2737 = vmatprep.subr.bf16.mxu0 0
        %2738 = vmatpush1.bf16.msra.mxu0 0
        %2739 = vmatprep.subr.bf16.mxu0 0
        %2740 = vmatpush1.bf16.msra.mxu0 0
        %2741 = vmatprep.subr.bf16.mxu0 0
        %2742 = vmatpush1.bf16.msra.mxu0 0
        %2743 = vmatprep.subr.bf16.mxu0 0
        %2744 = vmatpush1.bf16.msra.mxu0 0
        %2745 = vmatprep.subr.bf16.mxu0 0
        %2746 = vmatpush1.bf16.msra.mxu0 0
        %2747 = vmatprep.mubr.bf16.mxu0 0
        %2748 = vmatmul.mubr.bf16.gmra.mrb[0].mxu0 %v2704
        %v2749 = vpop.f32.mrb[0].mxu0
        %v2750 = vadd.f32 0.0, %v2749
        %v2751 = vpop.f32.mrb[0].mxu0
        %v2752 = vpop.f32.mrb[0].mxu0
        %v2753 = vadd.f32 0.0, %v2752
        %v2754 = vpop.f32.mrb[0].mxu0
        %2755 = vmatprep.mubr.bf16.mxu0 0
        %2756 = vmatmul.mubr.bf16.gmra.mrb[0].mxu0 %v2707
        %v2757 = vpop.f32.mrb[0].mxu0
        %v2758 = vadd.f32 0.0, %v2757
        %v2759 = vpop.f32.mrb[0].mxu0
        %v2760 = vpop.f32.mrb[0].mxu0
        %v2761 = vadd.f32 0.0, %v2760
        %v2762 = vpop.f32.mrb[0].mxu0
        %2763 = vmatprep.mubr.bf16.mxu0 0
        %2764 = vmatmul.mubr.bf16.gmra.mrb[0].mxu0 %v2710
        %v2765 = vpop.f32.mrb[0].mxu0
        %v2766 = vadd.f32 0.0, %v2765
        %v2767 = vpop.f32.mrb[0].mxu0
        %v2768 = vpop.f32.mrb[0].mxu0
        %v2769 = vadd.f32 0.0, %v2768
        %v2770 = vpop.f32.mrb[0].mxu0
        %2771 = vmatprep.mubr.bf16.mxu0 0
        %2772 = vmatmul.mubr.bf16.gmra.mrb[0].mxu0 %v2713
        %v2773 = vpop.f32.mrb[0].mxu0
        %v2774 = vadd.f32 0.0, %v2773
        %v2775 = vpop.f32.mrb[0].mxu0
        %v2776 = vpop.f32.mrb[0].mxu0
        %v2777 = vadd.f32 0.0, %v2776
        %v2778 = vpop.f32.mrb[0].mxu0
        %2779 = vdwg.mxu0
        %v2780 = vpack.c.bf16 %v2753, %v2750
        %v2781 = vpack.c.bf16 %v2761, %v2758
        %v2782 = vpack.c.bf16 %v2769, %v2766
        %v2783 = vpack.c.bf16 %v2777, %v2774
        %s2784 = scalar_lea.vmem [#allocation7], 48
        %v2785 = vld [vmem:[%s2784] sm:$0xf]
        %v2786 = vld [vmem:[%s2784 + $0x4] sm:$0xf]
        %v2787 = vld [vmem:[%s2784 + $0x8] sm:$0x3]
        %v2791 = vunpack.c.l.b16 %v2785
        %v2792 = vunpack.c.l.b16 %v2786
        %v2793 = vunpack.c.l.b16 %v2787
        %v2794 = vpack.c.b16 %v2792, %v2791
        %v2795 = vpack.c.b16 %v2793, %v2793
        %v2798 = vsel %vm960, %v2780, 0
        %v2801 = vsel %vm960, %v2781, 0
        %v2804 = vsel %vm960, %v2782, 0
        %v2807 = vsel %vm960, %v2783, 0
        %v2810 = vsel %vm1554, %v2795, 0
        %2812 = vmatprep.subr.bf16.mxu0 0
        %2813 = vmatpush1.bf16.msra.mxu0 %v2794
        %2814 = vmatprep.subr.bf16.mxu0 0
        %2815 = vmatpush1.bf16.msra.mxu0 %v2810
        %2816 = vmatprep.subr.bf16.mxu0 0
        %2817 = vmatpush1.bf16.msra.mxu0 0
        %2818 = vmatprep.subr.bf16.mxu0 0
        %2819 = vmatpush1.bf16.msra.mxu0 0
        %2820 = vmatprep.subr.bf16.mxu0 0
        %2821 = vmatpush1.bf16.msra.mxu0 0
        %2822 = vmatprep.subr.bf16.mxu0 0
        %2823 = vmatpush1.bf16.msra.mxu0 0
        %2824 = vmatprep.subr.bf16.mxu0 0
        %2825 = vmatpush1.bf16.msra.mxu0 0
        %2826 = vmatprep.subr.bf16.mxu0 0
        %2827 = vmatpush1.bf16.msra.mxu0 0
        %2828 = vmatprep.subr.bf16.mxu0 0
        %2829 = vmatpush1.bf16.msra.mxu0 0
        %2830 = vmatprep.subr.bf16.mxu0 0
        %2831 = vmatpush1.bf16.msra.mxu0 0
        %2832 = vmatprep.subr.bf16.mxu0 0
        %2833 = vmatpush1.bf16.msra.mxu0 0
        %2834 = vmatprep.subr.bf16.mxu0 0
        %2835 = vmatpush1.bf16.msra.mxu0 0
        %2836 = vmatprep.subr.bf16.mxu0 0
        %2837 = vmatpush1.bf16.msra.mxu0 0
        %2838 = vmatprep.subr.bf16.mxu0 0
        %2839 = vmatpush1.bf16.msra.mxu0 0
        %2840 = vmatprep.subr.bf16.mxu0 0
        %2841 = vmatpush1.bf16.msra.mxu0 0
        %2842 = vmatprep.subr.bf16.mxu0 0
        %2843 = vmatpush1.bf16.msra.mxu0 0
        %2844 = vmatprep.mubr.bf16.mxu0 0
        %2845 = vmatmul.mubr.bf16.gmra.mrb[0].mxu0 %v2798
        %v2846 = vpop.f32.mrb[0].mxu0
        %v2847 = vadd.f32 0.0, %v2846
        %v2848 = vpop.f32.mrb[0].mxu0
        %v2849 = vpop.f32.mrb[0].mxu0
        %v2850 = vadd.f32 0.0, %v2849
        %v2851 = vpop.f32.mrb[0].mxu0
        %2852 = vmatprep.mubr.bf16.mxu0 0
        %2853 = vmatmul.mubr.bf16.gmra.mrb[0].mxu0 %v2801
        %v2854 = vpop.f32.mrb[0].mxu0
        %v2855 = vadd.f32 0.0, %v2854
        %v2856 = vpop.f32.mrb[0].mxu0
        %v2857 = vpop.f32.mrb[0].mxu0
        %v2858 = vadd.f32 0.0, %v2857
        %v2859 = vpop.f32.mrb[0].mxu0
        %2860 = vmatprep.mubr.bf16.mxu0 0
        %2861 = vmatmul.mubr.bf16.gmra.mrb[0].mxu0 %v2804
        %v2862 = vpop.f32.mrb[0].mxu0
        %v2863 = vadd.f32 0.0, %v2862
        %v2864 = vpop.f32.mrb[0].mxu0
        %v2865 = vpop.f32.mrb[0].mxu0
        %v2866 = vadd.f32 0.0, %v2865
        %v2867 = vpop.f32.mrb[0].mxu0
        %2868 = vmatprep.mubr.bf16.mxu0 0
        %2869 = vmatmul.mubr.bf16.gmra.mrb[0].mxu0 %v2807
        %v2870 = vpop.f32.mrb[0].mxu0
        %v2871 = vadd.f32 0.0, %v2870
        %v2872 = vpop.f32.mrb[0].mxu0
        %v2873 = vpop.f32.mrb[0].mxu0
        %v2874 = vadd.f32 0.0, %v2873
        %v2875 = vpop.f32.mrb[0].mxu0
        %2876 = vdwg.mxu0
        %v2877 = vadd.f32 %v2486, %v2847
        %v2878 = vadd.f32 %v2487, %v2850
        %v2879 = vadd.f32 %v2488, %v2855
        %v2880 = vadd.f32 %v2489, %v2858
        %v2881 = vadd.f32 %v2490, %v2863
        %v2882 = vadd.f32 %v2491, %v2866
        %v2883 = vadd.f32 %v2492, %v2871
        %v2884 = vadd.f32 %v2493, %v2874
        %2885 = vrot.lane.b32.xlu0 %v940, 28
        %v2886 = vpop.permute.xlu0 %2885
        %2887 = vrot.lane.b32.xlu0 %v943, 28
        %v2888 = vpop.permute.xlu0 %2887
        %2889 = vrot.lane.b32.xlu0 %v946, 28
        %v2890 = vpop.permute.xlu0 %2889
        %2891 = vrot.lane.b32.xlu0 %v949, 28
        %v2892 = vpop.permute.xlu0 %2891
        %2893 = vrot.lane.b32.xlu0 %v941, 28
        %v2894 = vpop.permute.xlu0 %2893
        %2895 = vrot.lane.b32.xlu0 %v944, 28
        %v2896 = vpop.permute.xlu0 %2895
        %2897 = vrot.lane.b32.xlu0 %v947, 28
        %v2898 = vpop.permute.xlu0 %2897
        %2899 = vrot.lane.b32.xlu0 %v950, 28
        %v2900 = vpop.permute.xlu0 %2899
        %v2902 = vsel %vm960, %v2886, 0
        %v2905 = vsel %vm960, %v2888, 0
        %v2908 = vsel %vm960, %v2890, 0
        %v2911 = vsel %vm960, %v2892, 0
        %v2914 = vsel %vm960, %v2894, 0
        %v2917 = vsel %vm960, %v2896, 0
        %v2920 = vsel %vm960, %v2898, 0
        %v2923 = vsel %vm960, %v2900, 0
        %2925 = vmatprep.subr.bf16.mxu0 0
        %2926 = vmatpush1.bf16.xpose.msra.mxu0 %v2914
        %2927 = vmatprep.subr.bf16.mxu0 0
        %2928 = vmatpush1.bf16.xpose.msra.mxu0 %v2917
        %2929 = vmatprep.subr.bf16.mxu0 0
        %2930 = vmatpush1.bf16.xpose.msra.mxu0 %v2920
        %2931 = vmatprep.subr.bf16.mxu0 0
        %2932 = vmatpush1.bf16.xpose.msra.mxu0 %v2923
        %2933 = vmatprep.subr.bf16.mxu0 0
        %2934 = vmatpush1.bf16.xpose.msra.mxu0 0
        %2935 = vmatprep.subr.bf16.mxu0 0
        %2936 = vmatpush1.bf16.xpose.msra.mxu0 0
        %2937 = vmatprep.subr.bf16.mxu0 0
        %2938 = vmatpush1.bf16.xpose.msra.mxu0 0
        %2939 = vmatprep.subr.bf16.mxu0 0
        %2940 = vmatpush1.bf16.xpose.msra.mxu0 0
        %2941 = vmatprep.subr.bf16.mxu0 0
        %2942 = vmatpush1.bf16.xpose.msra.mxu0 0
        %2943 = vmatprep.subr.bf16.mxu0 0
        %2944 = vmatpush1.bf16.xpose.msra.mxu0 0
        %2945 = vmatprep.subr.bf16.mxu0 0
        %2946 = vmatpush1.bf16.xpose.msra.mxu0 0
        %2947 = vmatprep.subr.bf16.mxu0 0
        %2948 = vmatpush1.bf16.xpose.msra.mxu0 0
        %2949 = vmatprep.subr.bf16.mxu0 0
        %2950 = vmatpush1.bf16.xpose.msra.mxu0 0
        %2951 = vmatprep.subr.bf16.mxu0 0
        %2952 = vmatpush1.bf16.xpose.msra.mxu0 0
        %2953 = vmatprep.subr.bf16.mxu0 0
        %2954 = vmatpush1.bf16.xpose.msra.mxu0 0
        %2955 = vmatprep.subr.bf16.mxu0 0
        %2956 = vmatpush1.bf16.xpose.msra.mxu0 0
        %2957 = vmatprep.mubr.bf16.mxu0 0
        %2958 = vmatmul.mubr.bf16.gmra.mrb[0].mxu0 %v2902
        %v2959 = vpop.f32.mrb[0].mxu0
        %v2960 = vadd.f32 %v952, %v2959
        %v2961 = vpop.f32.mrb[0].mxu0
        %v2962 = vpop.f32.mrb[0].mxu0
        %v2963 = vadd.f32 %v953, %v2962
        %v2964 = vpop.f32.mrb[0].mxu0
        %2965 = vmatprep.mubr.bf16.mxu0 0
        %2966 = vmatmul.mubr.bf16.gmra.mrb[0].mxu0 %v2905
        %v2967 = vpop.f32.mrb[0].mxu0
        %v2968 = vadd.f32 %v954, %v2967
        %v2969 = vpop.f32.mrb[0].mxu0
        %v2970 = vpop.f32.mrb[0].mxu0
        %v2971 = vadd.f32 %v955, %v2970
        %v2972 = vpop.f32.mrb[0].mxu0
        %2973 = vmatprep.mubr.bf16.mxu0 0
        %2974 = vmatmul.mubr.bf16.gmra.mrb[0].mxu0 %v2908
        %v2975 = vpop.f32.mrb[0].mxu0
        %v2976 = vadd.f32 %v956, %v2975
        %v2977 = vpop.f32.mrb[0].mxu0
        %v2978 = vpop.f32.mrb[0].mxu0
        %v2979 = vadd.f32 %v957, %v2978
        %v2980 = vpop.f32.mrb[0].mxu0
        %2981 = vmatprep.mubr.bf16.mxu0 0
        %2982 = vmatmul.mubr.bf16.gmra.mrb[0].mxu0 %v2911
        %v2983 = vpop.f32.mrb[0].mxu0
        %v2984 = vadd.f32 %v958, %v2983
        %v2985 = vpop.f32.mrb[0].mxu0
        %v2986 = vpop.f32.mrb[0].mxu0
        %v2987 = vadd.f32 %v959, %v2986
        %v2988 = vpop.f32.mrb[0].mxu0
        %2989 = vdwg.mxu0
        %v2990 = vsel %vm1050, %v2960, -inf
        %2991 = vmax.xlane.f32.xlu0 %v2990
        %v2992 = vpop.xlane.xlu0 %2991
        %v2993 = vsel %vm1050, %v2963, -inf
        %2994 = vmax.xlane.f32.xlu0 %v2993
        %v2995 = vpop.xlane.xlu0 %2994
        %v2996 = vsel %vm1050, %v2968, -inf
        %2997 = vmax.xlane.f32.xlu0 %v2996
        %v2998 = vpop.xlane.xlu0 %2997
        %v2999 = vsel %vm1050, %v2971, -inf
        %3000 = vmax.xlane.f32.xlu0 %v2999
        %v3001 = vpop.xlane.xlu0 %3000
        %v3002 = vsel %vm1050, %v2976, -inf
        %3003 = vmax.xlane.f32.xlu0 %v3002
        %v3004 = vpop.xlane.xlu0 %3003
        %v3005 = vsel %vm1050, %v2979, -inf
        %3006 = vmax.xlane.f32.xlu0 %v3005
        %v3007 = vpop.xlane.xlu0 %3006
        %v3008 = vsel %vm1050, %v2984, -inf
        %3009 = vmax.xlane.f32.xlu0 %v3008
        %v3010 = vpop.xlane.xlu0 %3009
        %v3011 = vsel %vm1050, %v2987, -inf
        %3012 = vmax.xlane.f32.xlu0 %v3011
        %v3013 = vpop.xlane.xlu0 %3012
        %v3014 = vsub.f32 %v2960, %v2992
        %v3015 = vsub.f32 %v2963, %v2995
        %v3016 = vsub.f32 %v2968, %v2998
        %v3017 = vsub.f32 %v2971, %v3001
        %v3018 = vsub.f32 %v2976, %v3004
        %v3019 = vsub.f32 %v2979, %v3007
        %v3020 = vsub.f32 %v2984, %v3010
        %v3021 = vsub.f32 %v2987, %v3013
        %v3022 = vmul.f32 %v3014, 1.442695
        %v3023 = vpow.pop %v3022
        %v3024 = vmul.f32 %v3015, 1.442695
        %v3025 = vpow.pop %v3024
        %v3026 = vmul.f32 %v3016, 1.442695
        %v3027 = vpow.pop %v3026
        %v3028 = vmul.f32 %v3017, 1.442695
        %v3029 = vpow.pop %v3028
        %v3030 = vmul.f32 %v3018, 1.442695
        %v3031 = vpow.pop %v3030
        %v3032 = vmul.f32 %v3019, 1.442695
        %v3033 = vpow.pop %v3032
        %v3034 = vmul.f32 %v3020, 1.442695
        %v3035 = vpow.pop %v3034
        %v3036 = vmul.f32 %v3021, 1.442695
        %v3037 = vpow.pop %v3036
        %v3038 = vsel %vm1050, %v3023, 0.0
        %3039 = vadd.xlane.f32.xlu0 %v3038
        %v3040 = vpop.xlane.xlu0 %3039
        %v3041 = vsel %vm1050, %v3025, 0.0
        %3042 = vadd.xlane.f32.xlu0 %v3041
        %v3043 = vpop.xlane.xlu0 %3042
        %v3044 = vsel %vm1050, %v3027, 0.0
        %3045 = vadd.xlane.f32.xlu0 %v3044
        %v3046 = vpop.xlane.xlu0 %3045
        %v3047 = vsel %vm1050, %v3029, 0.0
        %3048 = vadd.xlane.f32.xlu0 %v3047
        %v3049 = vpop.xlane.xlu0 %3048
        %v3050 = vsel %vm1050, %v3031, 0.0
        %3051 = vadd.xlane.f32.xlu0 %v3050
        %v3052 = vpop.xlane.xlu0 %3051
        %v3053 = vsel %vm1050, %v3033, 0.0
        %3054 = vadd.xlane.f32.xlu0 %v3053
        %v3055 = vpop.xlane.xlu0 %3054
        %v3056 = vsel %vm1050, %v3035, 0.0
        %3057 = vadd.xlane.f32.xlu0 %v3056
        %v3058 = vpop.xlane.xlu0 %3057
        %v3059 = vsel %vm1050, %v3037, 0.0
        %3060 = vadd.xlane.f32.xlu0 %v3059
        %v3061 = vpop.xlane.xlu0 %3060
        %v3062 = vrcp.pop %v3040
        %v3063 = vrcp.pop %v3043
        %v3064 = vrcp.pop %v3046
        %v3065 = vrcp.pop %v3049
        %v3066 = vrcp.pop %v3052
        %v3067 = vrcp.pop %v3055
        %v3068 = vrcp.pop %v3058
        %v3069 = vrcp.pop %v3061
        %v3070 = vmul.f32 %v3023, %v3062
        %v3071 = vmul.f32 %v3025, %v3063
        %v3072 = vmul.f32 %v3027, %v3064
        %v3073 = vmul.f32 %v3029, %v3065
        %v3074 = vmul.f32 %v3031, %v3066
        %v3075 = vmul.f32 %v3033, %v3067
        %v3076 = vmul.f32 %v3035, %v3068
        %v3077 = vmul.f32 %v3037, %v3069
        %v3078 = vpack.c.bf16 %v3071, %v3070
        %v3079 = vpack.c.bf16 %v3073, %v3072
        %v3080 = vpack.c.bf16 %v3075, %v3074
        %v3081 = vpack.c.bf16 %v3077, %v3076
        %3082 = vrot.lane.b32.xlu0 %v942, 28
        %v3083 = vpop.permute.xlu0 %3082
        %3084 = vrot.lane.b32.xlu0 %v945, 28
        %v3085 = vpop.permute.xlu0 %3084
        %3086 = vrot.lane.b32.xlu0 %v948, 28
        %v3087 = vpop.permute.xlu0 %3086
        %3088 = vrot.lane.b32.xlu0 %v951, 28
        %v3089 = vpop.permute.xlu0 %3088
        %v3095 = vsel %vm1050, %v3078, 0
        %v3098 = vsel %vm1050, %v3079, 0
        %v3101 = vsel %vm1050, %v3080, 0
        %v3104 = vsel %vm1050, %v3081, 0
        %3106 = vmatprep.subr.bf16.mxu0 0
        %3107 = vmatpush1.bf16.msra.mxu0 %v3083
        %3108 = vmatprep.subr.bf16.mxu0 0
        %3109 = vmatpush1.bf16.msra.mxu0 %v3085
        %3110 = vmatprep.subr.bf16.mxu0 0
        %3111 = vmatpush1.bf16.msra.mxu0 %v3087
        %3112 = vmatprep.subr.bf16.mxu0 0
        %3113 = vmatpush1.bf16.msra.mxu0 %v3089
        %3114 = vmatprep.subr.bf16.mxu0 0
        %3115 = vmatpush1.bf16.msra.mxu0 0
        %3116 = vmatprep.subr.bf16.mxu0 0
        %3117 = vmatpush1.bf16.msra.mxu0 0
        %3118 = vmatprep.subr.bf16.mxu0 0
        %3119 = vmatpush1.bf16.msra.mxu0 0
        %3120 = vmatprep.subr.bf16.mxu0 0
        %3121 = vmatpush1.bf16.msra.mxu0 0
        %3122 = vmatprep.subr.bf16.mxu0 0
        %3123 = vmatpush1.bf16.msra.mxu0 0
        %3124 = vmatprep.subr.bf16.mxu0 0
        %3125 = vmatpush1.bf16.msra.mxu0 0
        %3126 = vmatprep.subr.bf16.mxu0 0
        %3127 = vmatpush1.bf16.msra.mxu0 0
        %3128 = vmatprep.subr.bf16.mxu0 0
        %3129 = vmatpush1.bf16.msra.mxu0 0
        %3130 = vmatprep.subr.bf16.mxu0 0
        %3131 = vmatpush1.bf16.msra.mxu0 0
        %3132 = vmatprep.subr.bf16.mxu0 0
        %3133 = vmatpush1.bf16.msra.mxu0 0
        %3134 = vmatprep.subr.bf16.mxu0 0
        %3135 = vmatpush1.bf16.msra.mxu0 0
        %3136 = vmatprep.subr.bf16.mxu0 0
        %3137 = vmatpush1.bf16.msra.mxu0 0
        %3138 = vmatprep.mubr.bf16.mxu0 0
        %3139 = vmatmul.mubr.bf16.gmra.mrb[0].mxu0 %v3095
        %v3140 = vpop.f32.mrb[0].mxu0
        %v3141 = vadd.f32 0.0, %v3140
        %v3142 = vpop.f32.mrb[0].mxu0
        %v3143 = vpop.f32.mrb[0].mxu0
        %v3144 = vadd.f32 0.0, %v3143
        %v3145 = vpop.f32.mrb[0].mxu0
        %3146 = vmatprep.mubr.bf16.mxu0 0
        %3147 = vmatmul.mubr.bf16.gmra.mrb[0].mxu0 %v3098
        %v3148 = vpop.f32.mrb[0].mxu0
        %v3149 = vadd.f32 0.0, %v3148
        %v3150 = vpop.f32.mrb[0].mxu0
        %v3151 = vpop.f32.mrb[0].mxu0
        %v3152 = vadd.f32 0.0, %v3151
        %v3153 = vpop.f32.mrb[0].mxu0
        %3154 = vmatprep.mubr.bf16.mxu0 0
        %3155 = vmatmul.mubr.bf16.gmra.mrb[0].mxu0 %v3101
        %v3156 = vpop.f32.mrb[0].mxu0
        %v3157 = vadd.f32 0.0, %v3156
        %v3158 = vpop.f32.mrb[0].mxu0
        %v3159 = vpop.f32.mrb[0].mxu0
        %v3160 = vadd.f32 0.0, %v3159
        %v3161 = vpop.f32.mrb[0].mxu0
        %3162 = vmatprep.mubr.bf16.mxu0 0
        %3163 = vmatmul.mubr.bf16.gmra.mrb[0].mxu0 %v3104
        %v3164 = vpop.f32.mrb[0].mxu0
        %v3165 = vadd.f32 0.0, %v3164
        %v3166 = vpop.f32.mrb[0].mxu0
        %v3167 = vpop.f32.mrb[0].mxu0
        %v3168 = vadd.f32 0.0, %v3167
        %v3169 = vpop.f32.mrb[0].mxu0
        %3170 = vdwg.mxu0
        %v3171 = vpack.c.bf16 %v3144, %v3141
        %v3172 = vpack.c.bf16 %v3152, %v3149
        %v3173 = vpack.c.bf16 %v3160, %v3157
        %v3174 = vpack.c.bf16 %v3168, %v3165
        %s3175 = scalar_lea.vmem [#allocation7], 60
        %v3176 = vld [vmem:[%s3175] sm:$0xf]
        %v3177 = vld [vmem:[%s3175 + $0x4] sm:$0xf]
        %v3178 = vld [vmem:[%s3175 + $0x8] sm:$0x3]
        %v3182 = vunpack.c.l.b16 %v3176
        %v3183 = vunpack.c.l.b16 %v3177
        %v3184 = vunpack.c.l.b16 %v3178
        %v3185 = vpack.c.b16 %v3183, %v3182
        %v3186 = vpack.c.b16 %v3184, %v3184
        %v3189 = vsel %vm960, %v3171, 0
        %v3192 = vsel %vm960, %v3172, 0
        %v3195 = vsel %vm960, %v3173, 0
        %v3198 = vsel %vm960, %v3174, 0
        %v3201 = vsel %vm1554, %v3186, 0
        %3203 = vmatprep.subr.bf16.mxu0 0
        %3204 = vmatpush1.bf16.msra.mxu0 %v3185
        %3205 = vmatprep.subr.bf16.mxu0 0
        %3206 = vmatpush1.bf16.msra.mxu0 %v3201
        %3207 = vmatprep.subr.bf16.mxu0 0
        %3208 = vmatpush1.bf16.msra.mxu0 0
        %3209 = vmatprep.subr.bf16.mxu0 0
        %3210 = vmatpush1.bf16.msra.mxu0 0
        %3211 = vmatprep.subr.bf16.mxu0 0
        %3212 = vmatpush1.bf16.msra.mxu0 0
        %3213 = vmatprep.subr.bf16.mxu0 0
        %3214 = vmatpush1.bf16.msra.mxu0 0
        %3215 = vmatprep.subr.bf16.mxu0 0
        %3216 = vmatpush1.bf16.msra.mxu0 0
        %3217 = vmatprep.subr.bf16.mxu0 0
        %3218 = vmatpush1.bf16.msra.mxu0 0
        %3219 = vmatprep.subr.bf16.mxu0 0
        %3220 = vmatpush1.bf16.msra.mxu0 0
        %3221 = vmatprep.subr.bf16.mxu0 0
        %3222 = vmatpush1.bf16.msra.mxu0 0
        %3223 = vmatprep.subr.bf16.mxu0 0
        %3224 = vmatpush1.bf16.msra.mxu0 0
        %3225 = vmatprep.subr.bf16.mxu0 0
        %3226 = vmatpush1.bf16.msra.mxu0 0
        %3227 = vmatprep.subr.bf16.mxu0 0
        %3228 = vmatpush1.bf16.msra.mxu0 0
        %3229 = vmatprep.subr.bf16.mxu0 0
        %3230 = vmatpush1.bf16.msra.mxu0 0
        %3231 = vmatprep.subr.bf16.mxu0 0
        %3232 = vmatpush1.bf16.msra.mxu0 0
        %3233 = vmatprep.subr.bf16.mxu0 0
        %3234 = vmatpush1.bf16.msra.mxu0 0
        %3235 = vmatprep.mubr.bf16.mxu0 0
        %3236 = vmatmul.mubr.bf16.gmra.mrb[0].mxu0 %v3189
        %v3237 = vpop.f32.mrb[0].mxu0
        %v3238 = vadd.f32 0.0, %v3237
        %v3239 = vpop.f32.mrb[0].mxu0
        %v3240 = vpop.f32.mrb[0].mxu0
        %v3241 = vadd.f32 0.0, %v3240
        %v3242 = vpop.f32.mrb[0].mxu0
        %3243 = vmatprep.mubr.bf16.mxu0 0
        %3244 = vmatmul.mubr.bf16.gmra.mrb[0].mxu0 %v3192
        %v3245 = vpop.f32.mrb[0].mxu0
        %v3246 = vadd.f32 0.0, %v3245
        %v3247 = vpop.f32.mrb[0].mxu0
        %v3248 = vpop.f32.mrb[0].mxu0
        %v3249 = vadd.f32 0.0, %v3248
        %v3250 = vpop.f32.mrb[0].mxu0
        %3251 = vmatprep.mubr.bf16.mxu0 0
        %3252 = vmatmul.mubr.bf16.gmra.mrb[0].mxu0 %v3195
        %v3253 = vpop.f32.mrb[0].mxu0
        %v3254 = vadd.f32 0.0, %v3253
        %v3255 = vpop.f32.mrb[0].mxu0
        %v3256 = vpop.f32.mrb[0].mxu0
        %v3257 = vadd.f32 0.0, %v3256
        %v3258 = vpop.f32.mrb[0].mxu0
        %3259 = vmatprep.mubr.bf16.mxu0 0
        %3260 = vmatmul.mubr.bf16.gmra.mrb[0].mxu0 %v3198
        %v3261 = vpop.f32.mrb[0].mxu0
        %v3262 = vadd.f32 0.0, %v3261
        %v3263 = vpop.f32.mrb[0].mxu0
        %v3264 = vpop.f32.mrb[0].mxu0
        %v3265 = vadd.f32 0.0, %v3264
        %v3266 = vpop.f32.mrb[0].mxu0
        %3267 = vdwg.mxu0
        %v3268 = vadd.f32 %v2877, %v3238
        %v3269 = vadd.f32 %v2878, %v3241
        %v3270 = vadd.f32 %v2879, %v3246
        %v3271 = vadd.f32 %v2880, %v3249
        %v3272 = vadd.f32 %v2881, %v3254
        %v3273 = vadd.f32 %v2882, %v3257
        %v3274 = vadd.f32 %v2883, %v3262
        %v3275 = vadd.f32 %v2884, %v3265
        %v3276 = vld [vmem:[%s6] sm:$0x1]
        %v3278 = vlaneseq
        %v3279 = vshrl.u32 %v3278, 7
        %v3280 = vsub.s32 0, %v3279
        %v3281 = vrot.slane %v3276, %v3280
        %v3283 = vadd.f32 %v3268, %v3281
        %v3284 = vadd.f32 %v3269, %v3281
        %v3285 = vadd.f32 %v3270, %v3281
        %v3286 = vadd.f32 %v3271, %v3281
        %v3287 = vadd.f32 %v3272, %v3281
        %v3288 = vadd.f32 %v3273, %v3281
        %v3289 = vadd.f32 %v3274, %v3281
        %v3290 = vadd.f32 %v3275, %v3281
        %v3291 = vadd.f32 %v499, %v3283
        %v3292 = vadd.f32 %v500, %v3284
        %v3293 = vadd.f32 %v501, %v3285
        %v3294 = vadd.f32 %v502, %v3286
        %v3295 = vadd.f32 %v503, %v3287
        %v3296 = vadd.f32 %v504, %v3288
        %v3297 = vadd.f32 %v505, %v3289
        %v3298 = vadd.f32 %v506, %v3290
        %v3299 = vld [vmem:[%s7] sm:$0x1]
        %v3300 = vld [vmem:[%s8] sm:$0x1]
        %3301 = vadd.xlane.f32.xlu0 %v3291
        %v3302 = vpop.xlane.xlu0 %3301
        %3303 = vadd.xlane.f32.xlu0 %v3292
        %v3304 = vpop.xlane.xlu0 %3303
        %3305 = vadd.xlane.f32.xlu0 %v3293
        %v3306 = vpop.xlane.xlu0 %3305
        %3307 = vadd.xlane.f32.xlu0 %v3294
        %v3308 = vpop.xlane.xlu0 %3307
        %3309 = vadd.xlane.f32.xlu0 %v3295
        %v3310 = vpop.xlane.xlu0 %3309
        %3311 = vadd.xlane.f32.xlu0 %v3296
        %v3312 = vpop.xlane.xlu0 %3311
        %3313 = vadd.xlane.f32.xlu0 %v3297
        %v3314 = vpop.xlane.xlu0 %3313
        %3315 = vadd.xlane.f32.xlu0 %v3298
        %v3316 = vpop.xlane.xlu0 %3315
        %v3317 = vmul.f32 %v3302, 0.008333334
        %v3318 = vmul.f32 %v3304, 0.008333334
        %v3319 = vmul.f32 %v3306, 0.008333334
        %v3320 = vmul.f32 %v3308, 0.008333334
        %v3321 = vmul.f32 %v3310, 0.008333334
        %v3322 = vmul.f32 %v3312, 0.008333334
        %v3323 = vmul.f32 %v3314, 0.008333334
        %v3324 = vmul.f32 %v3316, 0.008333334
        %v3325 = vsub.f32 %v3291, %v3317
        %v3326 = vsub.f32 %v3292, %v3318
        %v3327 = vsub.f32 %v3293, %v3319
        %v3328 = vsub.f32 %v3294, %v3320
        %v3329 = vsub.f32 %v3295, %v3321
        %v3330 = vsub.f32 %v3296, %v3322
        %v3331 = vsub.f32 %v3297, %v3323
        %v3332 = vsub.f32 %v3298, %v3324
        %v3333 = vmul.f32 %v3325, %v511
        %v3334 = vmul.f32 %v3326, %v511
        %v3335 = vmul.f32 %v3327, %v511
        %v3336 = vmul.f32 %v3328, %v511
        %v3337 = vmul.f32 %v3329, %v511
        %v3338 = vmul.f32 %v3330, %v511
        %v3339 = vmul.f32 %v3331, %v511
        %v3340 = vmul.f32 %v3332, %v511
        %v3341 = vmul.f32 %v3333, %v3333
        %v3342 = vmul.f32 %v3334, %v3334
        %v3343 = vmul.f32 %v3335, %v3335
        %v3344 = vmul.f32 %v3336, %v3336
        %v3345 = vmul.f32 %v3337, %v3337
        %v3346 = vmul.f32 %v3338, %v3338
        %v3347 = vmul.f32 %v3339, %v3339
        %v3348 = vmul.f32 %v3340, %v3340
        %3349 = vadd.xlane.f32.xlu0 %v3341
        %v3350 = vpop.xlane.xlu0 %3349
        %3351 = vadd.xlane.f32.xlu0 %v3342
        %v3352 = vpop.xlane.xlu0 %3351
        %3353 = vadd.xlane.f32.xlu0 %v3343
        %v3354 = vpop.xlane.xlu0 %3353
        %3355 = vadd.xlane.f32.xlu0 %v3344
        %v3356 = vpop.xlane.xlu0 %3355
        %3357 = vadd.xlane.f32.xlu0 %v3345
        %v3358 = vpop.xlane.xlu0 %3357
        %3359 = vadd.xlane.f32.xlu0 %v3346
        %v3360 = vpop.xlane.xlu0 %3359
        %3361 = vadd.xlane.f32.xlu0 %v3347
        %v3362 = vpop.xlane.xlu0 %3361
        %3363 = vadd.xlane.f32.xlu0 %v3348
        %v3364 = vpop.xlane.xlu0 %3363
        %v3365 = vmul.f32 %v3350, 0.008333334
        %v3366 = vmul.f32 %v3352, 0.008333334
        %v3367 = vmul.f32 %v3354, 0.008333334
        %v3368 = vmul.f32 %v3356, 0.008333334
        %v3369 = vmul.f32 %v3358, 0.008333334
        %v3370 = vmul.f32 %v3360, 0.008333334
        %v3371 = vmul.f32 %v3362, 0.008333334
        %v3372 = vmul.f32 %v3364, 0.008333334
        %v3373 = vadd.f32 %v3365, 1e-12
        %v3374 = vadd.f32 %v3366, 1e-12
        %v3375 = vadd.f32 %v3367, 1e-12
        %v3376 = vadd.f32 %v3368, 1e-12
        %v3377 = vadd.f32 %v3369, 1e-12
        %v3378 = vadd.f32 %v3370, 1e-12
        %v3379 = vadd.f32 %v3371, 1e-12
        %v3380 = vadd.f32 %v3372, 1e-12
        %v3381 = vrsqrt.pop %v3373
        %v3382 = vrsqrt.pop %v3374
        %v3383 = vrsqrt.pop %v3375
        %v3384 = vrsqrt.pop %v3376
        %v3385 = vrsqrt.pop %v3377
        %v3386 = vrsqrt.pop %v3378
        %v3387 = vrsqrt.pop %v3379
        %v3388 = vrsqrt.pop %v3380
        %v3389 = vmul.f32 %v3333, %v3381
        %v3390 = vmul.f32 %v3334, %v3382
        %v3391 = vmul.f32 %v3335, %v3383
        %v3392 = vmul.f32 %v3336, %v3384
        %v3393 = vmul.f32 %v3337, %v3385
        %v3394 = vmul.f32 %v3338, %v3386
        %v3395 = vmul.f32 %v3339, %v3387
        %v3396 = vmul.f32 %v3340, %v3388
        %v3398 = vlaneseq
        %v3399 = vshrl.u32 %v3398, 7
        %v3400 = vsub.s32 0, %v3399
        %v3401 = vrot.slane %v3299, %v3400
        %v3403 = vmul.f32 %v3389, %v3401
        %v3404 = vmul.f32 %v3390, %v3401
        %v3405 = vmul.f32 %v3391, %v3401
        %v3406 = vmul.f32 %v3392, %v3401
        %v3407 = vmul.f32 %v3393, %v3401
        %v3408 = vmul.f32 %v3394, %v3401
        %v3409 = vmul.f32 %v3395, %v3401
        %v3410 = vmul.f32 %v3396, %v3401
        %v3412 = vlaneseq
        %v3413 = vshrl.u32 %v3412, 7
        %v3414 = vsub.s32 0, %v3413
        %v3415 = vrot.slane %v3300, %v3414
        %v3417 = vadd.f32 %v3403, %v3415
        %v3418 = vadd.f32 %v3404, %v3415
        %v3419 = vadd.f32 %v3405, %v3415
        %v3420 = vadd.f32 %v3406, %v3415
        %v3421 = vadd.f32 %v3407, %v3415
        %v3422 = vadd.f32 %v3408, %v3415
        %v3423 = vadd.f32 %v3409, %v3415
        %v3424 = vadd.f32 %v3410, %v3415
        %v3425 = vpack.c.bf16 %v3418, %v3417
        %v3426 = vpack.c.bf16 %v3420, %v3419
        %v3427 = vpack.c.bf16 %v3422, %v3421
        %v3428 = vpack.c.bf16 %v3424, %v3423
        %v3429 = vld [vmem:[%s9] sm:$0xff]
        %v3430 = vld [vmem:[%s9 + $0x8] sm:$0xff]
        %v3431 = vld [vmem:[%s9 + $0x10] sm:$0xff]
        %v3432 = vld [vmem:[%s9 + $0x18] sm:$0xff]
        %v3433 = vld [vmem:[%s9 + $0x20] sm:$0xff]
        %v3434 = vld [vmem:[%s9 + $0x28] sm:$0xff]
        %v3435 = vld [vmem:[%s9 + $0x30] sm:$0xff]
        %v3436 = vld [vmem:[%s9 + $0x38] sm:$0xff]
        %v3437 = vld [vmem:[%s9 + $0x40] sm:$0xff]
        %v3438 = vld [vmem:[%s9 + $0x48] sm:$0xff]
        %v3439 = vld [vmem:[%s9 + $0x50] sm:$0xff]
        %v3440 = vld [vmem:[%s9 + $0x58] sm:$0xff]
        %v3441 = vld [vmem:[%s9 + $0x60] sm:$0xff]
        %v3442 = vld [vmem:[%s9 + $0x68] sm:$0xff]
        %v3443 = vld [vmem:[%s9 + $0x70] sm:$0xff]
        %v3444 = vld [vmem:[%s9 + $0x78] sm:$0xff]
        %v3445 = vld [vmem:[%s9 + $0x80] sm:$0xff]
        %v3446 = vld [vmem:[%s9 + $0x88] sm:$0xff]
        %v3447 = vld [vmem:[%s9 + $0x90] sm:$0xff]
        %v3448 = vld [vmem:[%s9 + $0x98] sm:$0xff]
        %v3449 = vld [vmem:[%s9 + $0xa0] sm:$0xff]
        %v3450 = vld [vmem:[%s9 + $0xa8] sm:$0xff]
        %v3451 = vld [vmem:[%s9 + $0xb0] sm:$0xff]
        %v3452 = vld [vmem:[%s9 + $0xb8] sm:$0xff]
        %v3453 = vld [vmem:[%s9 + $0xc0] sm:$0xff]
        %v3454 = vld [vmem:[%s9 + $0xc8] sm:$0xff]
        %v3455 = vld [vmem:[%s9 + $0xd0] sm:$0xff]
        %v3456 = vld [vmem:[%s9 + $0xd8] sm:$0xff]
        %v3457 = vld [vmem:[%s9 + $0xe0] sm:$0xff]
        %v3458 = vld [vmem:[%s9 + $0xe8] sm:$0xff]
        %v3459 = vld [vmem:[%s9 + $0xf0] sm:$0xff]
        %v3460 = vld [vmem:[%s9 + $0xf8] sm:$0xff]
        %v3461 = vld [vmem:[%s10] sm:$0xf]
        %v3463 = vlaneseq
        %v3464 = vshrl.u32 %v3463, 7
        %v3465 = vsub.s32 0, %v3464
        %v3466 = vrot.slane %v3461, %v3465
        %v3467 = vlaneseq
        %v3468 = vshrl.u32 %v3467, 7
        %v3469 = vsub.s32 1, %v3468
        %v3470 = vrot.slane %v3461, %v3469
        %v3471 = vlaneseq
        %v3472 = vshrl.u32 %v3471, 7
        %v3473 = vsub.s32 2, %v3472
        %v3474 = vrot.slane %v3461, %v3473
        %v3475 = vlaneseq
        %v3476 = vshrl.u32 %v3475, 7
        %v3477 = vsub.s32 3, %v3476
        %v3478 = vrot.slane %v3461, %v3477
        %v3515 = vunpack.c.l.b16 %v3429
        %v3516 = vunpack.c.h.b16 %v3429
        %v3517 = vunpack.c.l.b16 %v3430
        %v3518 = vunpack.c.h.b16 %v3430
        %v3519 = vunpack.c.l.b16 %v3431
        %v3520 = vunpack.c.h.b16 %v3431
        %v3521 = vunpack.c.l.b16 %v3432
        %v3522 = vunpack.c.h.b16 %v3432
        %v3523 = vunpack.c.l.b16 %v3433
        %v3524 = vunpack.c.h.b16 %v3433
        %v3525 = vunpack.c.l.b16 %v3434
        %v3526 = vunpack.c.h.b16 %v3434
        %v3527 = vunpack.c.l.b16 %v3435
        %v3528 = vunpack.c.h.b16 %v3435
        %v3529 = vunpack.c.l.b16 %v3436
        %v3530 = vunpack.c.h.b16 %v3436
        %v3531 = vunpack.c.l.b16 %v3437
        %v3532 = vunpack.c.h.b16 %v3437
        %v3533 = vunpack.c.l.b16 %v3438
        %v3534 = vunpack.c.h.b16 %v3438
        %v3535 = vunpack.c.l.b16 %v3439
        %v3536 = vunpack.c.h.b16 %v3439
        %v3537 = vunpack.c.l.b16 %v3440
        %v3538 = vunpack.c.h.b16 %v3440
        %v3539 = vunpack.c.l.b16 %v3441
        %v3540 = vunpack.c.h.b16 %v3441
        %v3541 = vunpack.c.l.b16 %v3442
        %v3542 = vunpack.c.h.b16 %v3442
        %v3543 = vunpack.c.l.b16 %v3443
        %v3544 = vunpack.c.h.b16 %v3443
        %v3545 = vunpack.c.l.b16 %v3444
        %v3546 = vunpack.c.h.b16 %v3444
        %v3547 = vunpack.c.l.b16 %v3445
        %v3548 = vunpack.c.h.b16 %v3445
        %v3549 = vunpack.c.l.b16 %v3446
        %v3550 = vunpack.c.h.b16 %v3446
        %v3551 = vunpack.c.l.b16 %v3447
        %v3552 = vunpack.c.h.b16 %v3447
        %v3553 = vunpack.c.l.b16 %v3448
        %v3554 = vunpack.c.h.b16 %v3448
        %v3555 = vunpack.c.l.b16 %v3449
        %v3556 = vunpack.c.h.b16 %v3449
        %v3557 = vunpack.c.l.b16 %v3450
        %v3558 = vunpack.c.h.b16 %v3450
        %v3559 = vunpack.c.l.b16 %v3451
        %v3560 = vunpack.c.h.b16 %v3451
        %v3561 = vunpack.c.l.b16 %v3452
        %v3562 = vunpack.c.h.b16 %v3452
        %v3563 = vunpack.c.l.b16 %v3453
        %v3564 = vunpack.c.h.b16 %v3453
        %v3565 = vunpack.c.l.b16 %v3454
        %v3566 = vunpack.c.h.b16 %v3454
        %v3567 = vunpack.c.l.b16 %v3455
        %v3568 = vunpack.c.h.b16 %v3455
        %v3569 = vunpack.c.l.b16 %v3456
        %v3570 = vunpack.c.h.b16 %v3456
        %v3571 = vunpack.c.l.b16 %v3457
        %v3572 = vunpack.c.h.b16 %v3457
        %v3573 = vunpack.c.l.b16 %v3458
        %v3574 = vunpack.c.h.b16 %v3458
        %v3575 = vunpack.c.l.b16 %v3459
        %v3576 = vunpack.c.h.b16 %v3459
        %v3577 = vunpack.c.l.b16 %v3460
        %v3578 = vunpack.c.h.b16 %v3460
        %v3579 = vpack.c.b16 %v3519, %v3515
        %v3580 = vpack.c.b16 %v3520, %v3516
        %v3581 = vpack.c.b16 %v3521, %v3517
        %v3582 = vpack.c.b16 %v3522, %v3518
        %v3583 = vpack.c.b16 %v3527, %v3523
        %v3584 = vpack.c.b16 %v3528, %v3524
        %v3585 = vpack.c.b16 %v3529, %v3525
        %v3586 = vpack.c.b16 %v3530, %v3526
        %v3587 = vpack.c.b16 %v3535, %v3531
        %v3588 = vpack.c.b16 %v3536, %v3532
        %v3589 = vpack.c.b16 %v3537, %v3533
        %v3590 = vpack.c.b16 %v3538, %v3534
        %v3591 = vpack.c.b16 %v3543, %v3539
        %v3592 = vpack.c.b16 %v3544, %v3540
        %v3593 = vpack.c.b16 %v3545, %v3541
        %v3594 = vpack.c.b16 %v3546, %v3542
        %v3595 = vpack.c.b16 %v3551, %v3547
        %v3596 = vpack.c.b16 %v3552, %v3548
        %v3597 = vpack.c.b16 %v3553, %v3549
        %v3598 = vpack.c.b16 %v3554, %v3550
        %v3599 = vpack.c.b16 %v3559, %v3555
        %v3600 = vpack.c.b16 %v3560, %v3556
        %v3601 = vpack.c.b16 %v3561, %v3557
        %v3602 = vpack.c.b16 %v3562, %v3558
        %v3603 = vpack.c.b16 %v3567, %v3563
        %v3604 = vpack.c.b16 %v3568, %v3564
        %v3605 = vpack.c.b16 %v3569, %v3565
        %v3606 = vpack.c.b16 %v3570, %v3566
        %v3607 = vpack.c.b16 %v3575, %v3571
        %v3608 = vpack.c.b16 %v3576, %v3572
        %v3609 = vpack.c.b16 %v3577, %v3573
        %v3610 = vpack.c.b16 %v3578, %v3574
        %3643 = vmatprep.subr.bf16.mxu0 %v3580
        %3644 = vmatpush1.bf16.msra.mxu0 %v3579
        %3645 = vmatprep.subr.bf16.mxu0 %v3584
        %3646 = vmatpush1.bf16.msra.mxu0 %v3583
        %3647 = vmatprep.subr.bf16.mxu0 %v3588
        %3648 = vmatpush1.bf16.msra.mxu0 %v3587
        %3649 = vmatprep.subr.bf16.mxu0 %v3592
        %3650 = vmatpush1.bf16.msra.mxu0 %v3591
        %3651 = vmatprep.subr.bf16.mxu0 %v3596
        %3652 = vmatpush1.bf16.msra.mxu0 %v3595
        %3653 = vmatprep.subr.bf16.mxu0 %v3600
        %3654 = vmatpush1.bf16.msra.mxu0 %v3599
        %3655 = vmatprep.subr.bf16.mxu0 %v3604
        %3656 = vmatpush1.bf16.msra.mxu0 %v3603
        %3657 = vmatprep.subr.bf16.mxu0 %v3608
        %3658 = vmatpush1.bf16.msra.mxu0 %v3607
        %3659 = vmatprep.subr.bf16.mxu0 0
        %3660 = vmatpush1.bf16.msra.mxu0 0
        %3661 = vmatprep.subr.bf16.mxu0 0
        %3662 = vmatpush1.bf16.msra.mxu0 0
        %3663 = vmatprep.subr.bf16.mxu0 0
        %3664 = vmatpush1.bf16.msra.mxu0 0
        %3665 = vmatprep.subr.bf16.mxu0 0
        %3666 = vmatpush1.bf16.msra.mxu0 0
        %3667 = vmatprep.subr.bf16.mxu0 0
        %3668 = vmatpush1.bf16.msra.mxu0 0
        %3669 = vmatprep.subr.bf16.mxu0 0
        %3670 = vmatpush1.bf16.msra.mxu0 0
        %3671 = vmatprep.subr.bf16.mxu0 0
        %3672 = vmatpush1.bf16.msra.mxu0 0
        %3673 = vmatprep.subr.bf16.mxu0 0
        %3674 = vmatpush1.bf16.msra.mxu0 0
        %3675 = vmatprep.mubr.bf16.mxu0 0
        %3676 = vmatmul.mubr.bf16.gmra.mrb[0].mxu0 %v3425
        %v3677 = vpop.f32.mrb[0].mxu0
        %v3678 = vadd.f32 %v3466, %v3677
        %v3679 = vpop.f32.mrb[0].mxu0
        %v3680 = vadd.f32 %v3470, %v3679
        %v3681 = vpop.f32.mrb[0].mxu0
        %v3682 = vadd.f32 %v3466, %v3681
        %v3683 = vpop.f32.mrb[0].mxu0
        %v3684 = vadd.f32 %v3470, %v3683
        %3685 = vmatprep.mubr.bf16.mxu0 0
        %3686 = vmatmul.mubr.bf16.gmra.mrb[0].mxu0 %v3426
        %v3687 = vpop.f32.mrb[0].mxu0
        %v3688 = vadd.f32 %v3466, %v3687
        %v3689 = vpop.f32.mrb[0].mxu0
        %v3690 = vadd.f32 %v3470, %v3689
        %v3691 = vpop.f32.mrb[0].mxu0
        %v3692 = vadd.f32 %v3466, %v3691
        %v3693 = vpop.f32.mrb[0].mxu0
        %v3694 = vadd.f32 %v3470, %v3693
        %3695 = vmatprep.mubr.bf16.mxu0 0
        %3696 = vmatmul.mubr.bf16.gmra.mrb[0].mxu0 %v3427
        %v3697 = vpop.f32.mrb[0].mxu0
        %v3698 = vadd.f32 %v3466, %v3697
        %v3699 = vpop.f32.mrb[0].mxu0
        %v3700 = vadd.f32 %v3470, %v3699
        %v3701 = vpop.f32.mrb[0].mxu0
        %v3702 = vadd.f32 %v3466, %v3701
        %v3703 = vpop.f32.mrb[0].mxu0
        %v3704 = vadd.f32 %v3470, %v3703
        %3705 = vmatprep.mubr.bf16.mxu0 0
        %3706 = vmatmul.mubr.bf16.gmra.mrb[0].mxu0 %v3428
        %v3707 = vpop.f32.mrb[0].mxu0
        %v3708 = vadd.f32 %v3466, %v3707
        %v3709 = vpop.f32.mrb[0].mxu0
        %v3710 = vadd.f32 %v3470, %v3709
        %v3711 = vpop.f32.mrb[0].mxu0
        %v3712 = vadd.f32 %v3466, %v3711
        %v3713 = vpop.f32.mrb[0].mxu0
        %v3714 = vadd.f32 %v3470, %v3713
        %3715 = vdwg.mxu0
        %3716 = vmatprep.subr.bf16.mxu0 %v3582
        %3717 = vmatpush1.bf16.msra.mxu0 %v3581
        %3718 = vmatprep.subr.bf16.mxu0 %v3586
        %3719 = vmatpush1.bf16.msra.mxu0 %v3585
        %3720 = vmatprep.subr.bf16.mxu0 %v3590
        %3721 = vmatpush1.bf16.msra.mxu0 %v3589
        %3722 = vmatprep.subr.bf16.mxu0 %v3594
        %3723 = vmatpush1.bf16.msra.mxu0 %v3593
        %3724 = vmatprep.subr.bf16.mxu0 %v3598
        %3725 = vmatpush1.bf16.msra.mxu0 %v3597
        %3726 = vmatprep.subr.bf16.mxu0 %v3602
        %3727 = vmatpush1.bf16.msra.mxu0 %v3601
        %3728 = vmatprep.subr.bf16.mxu0 %v3606
        %3729 = vmatpush1.bf16.msra.mxu0 %v3605
        %3730 = vmatprep.subr.bf16.mxu0 %v3610
        %3731 = vmatpush1.bf16.msra.mxu0 %v3609
        %3732 = vmatprep.subr.bf16.mxu0 0
        %3733 = vmatpush1.bf16.msra.mxu0 0
        %3734 = vmatprep.subr.bf16.mxu0 0
        %3735 = vmatpush1.bf16.msra.mxu0 0
        %3736 = vmatprep.subr.bf16.mxu0 0
        %3737 = vmatpush1.bf16.msra.mxu0 0
        %3738 = vmatprep.subr.bf16.mxu0 0
        %3739 = vmatpush1.bf16.msra.mxu0 0
        %3740 = vmatprep.subr.bf16.mxu0 0
        %3741 = vmatpush1.bf16.msra.mxu0 0
        %3742 = vmatprep.subr.bf16.mxu0 0
        %3743 = vmatpush1.bf16.msra.mxu0 0
        %3744 = vmatprep.subr.bf16.mxu0 0
        %3745 = vmatpush1.bf16.msra.mxu0 0
        %3746 = vmatprep.subr.bf16.mxu0 0
        %3747 = vmatpush1.bf16.msra.mxu0 0
        %3748 = vmatprep.mubr.bf16.mxu0 0
        %3749 = vmatmul.mubr.bf16.gmra.mrb[0].mxu0 %v3425
        %v3750 = vpop.f32.mrb[0].mxu0
        %v3751 = vadd.f32 %v3474, %v3750
        %v3752 = vpop.f32.mrb[0].mxu0
        %v3753 = vadd.f32 %v3478, %v3752
        %v3754 = vpop.f32.mrb[0].mxu0
        %v3755 = vadd.f32 %v3474, %v3754
        %v3756 = vpop.f32.mrb[0].mxu0
        %v3757 = vadd.f32 %v3478, %v3756
        %3758 = vmatprep.mubr.bf16.mxu0 0
        %3759 = vmatmul.mubr.bf16.gmra.mrb[0].mxu0 %v3426
        %v3760 = vpop.f32.mrb[0].mxu0
        %v3761 = vadd.f32 %v3474, %v3760
        %v3762 = vpop.f32.mrb[0].mxu0
        %v3763 = vadd.f32 %v3478, %v3762
        %v3764 = vpop.f32.mrb[0].mxu0
        %v3765 = vadd.f32 %v3474, %v3764
        %v3766 = vpop.f32.mrb[0].mxu0
        %v3767 = vadd.f32 %v3478, %v3766
        %3768 = vmatprep.mubr.bf16.mxu0 0
        %3769 = vmatmul.mubr.bf16.gmra.mrb[0].mxu0 %v3427
        %v3770 = vpop.f32.mrb[0].mxu0
        %v3771 = vadd.f32 %v3474, %v3770
        %v3772 = vpop.f32.mrb[0].mxu0
        %v3773 = vadd.f32 %v3478, %v3772
        %v3774 = vpop.f32.mrb[0].mxu0
        %v3775 = vadd.f32 %v3474, %v3774
        %v3776 = vpop.f32.mrb[0].mxu0
        %v3777 = vadd.f32 %v3478, %v3776
        %3778 = vmatprep.mubr.bf16.mxu0 0
        %3779 = vmatmul.mubr.bf16.gmra.mrb[0].mxu0 %v3428
        %v3780 = vpop.f32.mrb[0].mxu0
        %v3781 = vadd.f32 %v3474, %v3780
        %v3782 = vpop.f32.mrb[0].mxu0
        %v3783 = vadd.f32 %v3478, %v3782
        %v3784 = vpop.f32.mrb[0].mxu0
        %v3785 = vadd.f32 %v3474, %v3784
        %v3786 = vpop.f32.mrb[0].mxu0
        %v3787 = vadd.f32 %v3478, %v3786
        %3788 = vdwg.mxu0
        %v3789 = vmul.f32 %v3678, 0.5
        %v3790 = vmul.f32 %v3680, 0.5
        %v3791 = vmul.f32 %v3751, 0.5
        %v3792 = vmul.f32 %v3753, 0.5
        %v3793 = vmul.f32 %v3682, 0.5
        %v3794 = vmul.f32 %v3684, 0.5
        %v3795 = vmul.f32 %v3755, 0.5
        %v3796 = vmul.f32 %v3757, 0.5
        %v3797 = vmul.f32 %v3688, 0.5
        %v3798 = vmul.f32 %v3690, 0.5
        %v3799 = vmul.f32 %v3761, 0.5
        %v3800 = vmul.f32 %v3763, 0.5
        %v3801 = vmul.f32 %v3692, 0.5
        %v3802 = vmul.f32 %v3694, 0.5
        %v3803 = vmul.f32 %v3765, 0.5
        %v3804 = vmul.f32 %v3767, 0.5
        %v3805 = vmul.f32 %v3698, 0.5
        %v3806 = vmul.f32 %v3700, 0.5
        %v3807 = vmul.f32 %v3771, 0.5
        %v3808 = vmul.f32 %v3773, 0.5
        %v3809 = vmul.f32 %v3702, 0.5
        %v3810 = vmul.f32 %v3704, 0.5
        %v3811 = vmul.f32 %v3775, 0.5
        %v3812 = vmul.f32 %v3777, 0.5
        %v3813 = vmul.f32 %v3708, 0.5
        %v3814 = vmul.f32 %v3710, 0.5
        %v3815 = vmul.f32 %v3781, 0.5
        %v3816 = vmul.f32 %v3783, 0.5
        %v3817 = vmul.f32 %v3712, 0.5
        %v3818 = vmul.f32 %v3714, 0.5
        %v3819 = vmul.f32 %v3785, 0.5
        %v3820 = vmul.f32 %v3787, 0.5
        %v3821 = vmul.f32 %v3678, 0.044715
        %v3822 = vmul.f32 %v3680, 0.044715
        %v3823 = vmul.f32 %v3751, 0.044715
        %v3824 = vmul.f32 %v3753, 0.044715
        %v3825 = vmul.f32 %v3682, 0.044715
        %v3826 = vmul.f32 %v3684, 0.044715
        %v3827 = vmul.f32 %v3755, 0.044715
        %v3828 = vmul.f32 %v3757, 0.044715
        %v3829 = vmul.f32 %v3688, 0.044715
        %v3830 = vmul.f32 %v3690, 0.044715
        %v3831 = vmul.f32 %v3761, 0.044715
        %v3832 = vmul.f32 %v3763, 0.044715
        %v3833 = vmul.f32 %v3692, 0.044715
        %v3834 = vmul.f32 %v3694, 0.044715
        %v3835 = vmul.f32 %v3765, 0.044715
        %v3836 = vmul.f32 %v3767, 0.044715
        %v3837 = vmul.f32 %v3698, 0.044715
        %v3838 = vmul.f32 %v3700, 0.044715
        %v3839 = vmul.f32 %v3771, 0.044715
        %v3840 = vmul.f32 %v3773, 0.044715
        %v3841 = vmul.f32 %v3702, 0.044715
        %v3842 = vmul.f32 %v3704, 0.044715
        %v3843 = vmul.f32 %v3775, 0.044715
        %v3844 = vmul.f32 %v3777, 0.044715
        %v3845 = vmul.f32 %v3708, 0.044715
        %v3846 = vmul.f32 %v3710, 0.044715
        %v3847 = vmul.f32 %v3781, 0.044715
        %v3848 = vmul.f32 %v3783, 0.044715
        %v3849 = vmul.f32 %v3712, 0.044715
        %v3850 = vmul.f32 %v3714, 0.044715
        %v3851 = vmul.f32 %v3785, 0.044715
        %v3852 = vmul.f32 %v3787, 0.044715
        %v3853 = vmul.f32 %v3821, %v3678
        %v3854 = vmul.f32 %v3822, %v3680
        %v3855 = vmul.f32 %v3823, %v3751
        %v3856 = vmul.f32 %v3824, %v3753
        %v3857 = vmul.f32 %v3825, %v3682
        %v3858 = vmul.f32 %v3826, %v3684
        %v3859 = vmul.f32 %v3827, %v3755
        %v3860 = vmul.f32 %v3828, %v3757
        %v3861 = vmul.f32 %v3829, %v3688
        %v3862 = vmul.f32 %v3830, %v3690
        %v3863 = vmul.f32 %v3831, %v3761
        %v3864 = vmul.f32 %v3832, %v3763
        %v3865 = vmul.f32 %v3833, %v3692
        %v3866 = vmul.f32 %v3834, %v3694
        %v3867 = vmul.f32 %v3835, %v3765
        %v3868 = vmul.f32 %v3836, %v3767
        %v3869 = vmul.f32 %v3837, %v3698
        %v3870 = vmul.f32 %v3838, %v3700
        %v3871 = vmul.f32 %v3839, %v3771
        %v3872 = vmul.f32 %v3840, %v3773
        %v3873 = vmul.f32 %v3841, %v3702
        %v3874 = vmul.f32 %v3842, %v3704
        %v3875 = vmul.f32 %v3843, %v3775
        %v3876 = vmul.f32 %v3844, %v3777
        %v3877 = vmul.f32 %v3845, %v3708
        %v3878 = vmul.f32 %v3846, %v3710
        %v3879 = vmul.f32 %v3847, %v3781
        %v3880 = vmul.f32 %v3848, %v3783
        %v3881 = vmul.f32 %v3849, %v3712
        %v3882 = vmul.f32 %v3850, %v3714
        %v3883 = vmul.f32 %v3851, %v3785
        %v3884 = vmul.f32 %v3852, %v3787
        %v3885 = vmul.f32 %v3853, %v3678
        %v3886 = vmul.f32 %v3854, %v3680
        %v3887 = vmul.f32 %v3855, %v3751
        %v3888 = vmul.f32 %v3856, %v3753
        %v3889 = vmul.f32 %v3857, %v3682
        %v3890 = vmul.f32 %v3858, %v3684
        %v3891 = vmul.f32 %v3859, %v3755
        %v3892 = vmul.f32 %v3860, %v3757
        %v3893 = vmul.f32 %v3861, %v3688
        %v3894 = vmul.f32 %v3862, %v3690
        %v3895 = vmul.f32 %v3863, %v3761
        %v3896 = vmul.f32 %v3864, %v3763
        %v3897 = vmul.f32 %v3865, %v3692
        %v3898 = vmul.f32 %v3866, %v3694
        %v3899 = vmul.f32 %v3867, %v3765
        %v3900 = vmul.f32 %v3868, %v3767
        %v3901 = vmul.f32 %v3869, %v3698
        %v3902 = vmul.f32 %v3870, %v3700
        %v3903 = vmul.f32 %v3871, %v3771
        %v3904 = vmul.f32 %v3872, %v3773
        %v3905 = vmul.f32 %v3873, %v3702
        %v3906 = vmul.f32 %v3874, %v3704
        %v3907 = vmul.f32 %v3875, %v3775
        %v3908 = vmul.f32 %v3876, %v3777
        %v3909 = vmul.f32 %v3877, %v3708
        %v3910 = vmul.f32 %v3878, %v3710
        %v3911 = vmul.f32 %v3879, %v3781
        %v3912 = vmul.f32 %v3880, %v3783
        %v3913 = vmul.f32 %v3881, %v3712
        %v3914 = vmul.f32 %v3882, %v3714
        %v3915 = vmul.f32 %v3883, %v3785
        %v3916 = vmul.f32 %v3884, %v3787
        %v3917 = vadd.f32 %v3678, %v3885
        %v3918 = vadd.f32 %v3680, %v3886
        %v3919 = vadd.f32 %v3751, %v3887
        %v3920 = vadd.f32 %v3753, %v3888
        %v3921 = vadd.f32 %v3682, %v3889
        %v3922 = vadd.f32 %v3684, %v3890
        %v3923 = vadd.f32 %v3755, %v3891
        %v3924 = vadd.f32 %v3757, %v3892
        %v3925 = vadd.f32 %v3688, %v3893
        %v3926 = vadd.f32 %v3690, %v3894
        %v3927 = vadd.f32 %v3761, %v3895
        %v3928 = vadd.f32 %v3763, %v3896
        %v3929 = vadd.f32 %v3692, %v3897
        %v3930 = vadd.f32 %v3694, %v3898
        %v3931 = vadd.f32 %v3765, %v3899
        %v3932 = vadd.f32 %v3767, %v3900
        %v3933 = vadd.f32 %v3698, %v3901
        %v3934 = vadd.f32 %v3700, %v3902
        %v3935 = vadd.f32 %v3771, %v3903
        %v3936 = vadd.f32 %v3773, %v3904
        %v3937 = vadd.f32 %v3702, %v3905
        %v3938 = vadd.f32 %v3704, %v3906
        %v3939 = vadd.f32 %v3775, %v3907
        %v3940 = vadd.f32 %v3777, %v3908
        %v3941 = vadd.f32 %v3708, %v3909
        %v3942 = vadd.f32 %v3710, %v3910
        %v3943 = vadd.f32 %v3781, %v3911
        %v3944 = vadd.f32 %v3783, %v3912
        %v3945 = vadd.f32 %v3712, %v3913
        %v3946 = vadd.f32 %v3714, %v3914
        %v3947 = vadd.f32 %v3785, %v3915
        %v3948 = vadd.f32 %v3787, %v3916
        %v3949 = vmul.f32 %v3917, 0.7978846
        %v3950 = vmul.f32 %v3918, 0.7978846
        %v3951 = vmul.f32 %v3919, 0.7978846
        %v3952 = vmul.f32 %v3920, 0.7978846
        %v3953 = vmul.f32 %v3921, 0.7978846
        %v3954 = vmul.f32 %v3922, 0.7978846
        %v3955 = vmul.f32 %v3923, 0.7978846
        %v3956 = vmul.f32 %v3924, 0.7978846
        %v3957 = vmul.f32 %v3925, 0.7978846
        %v3958 = vmul.f32 %v3926, 0.7978846
        %v3959 = vmul.f32 %v3927, 0.7978846
        %v3960 = vmul.f32 %v3928, 0.7978846
        %v3961 = vmul.f32 %v3929, 0.7978846
        %v3962 = vmul.f32 %v3930, 0.7978846
        %v3963 = vmul.f32 %v3931, 0.7978846
        %v3964 = vmul.f32 %v3932, 0.7978846
        %v3965 = vmul.f32 %v3933, 0.7978846
        %v3966 = vmul.f32 %v3934, 0.7978846
        %v3967 = vmul.f32 %v3935, 0.7978846
        %v3968 = vmul.f32 %v3936, 0.7978846
        %v3969 = vmul.f32 %v3937, 0.7978846
        %v3970 = vmul.f32 %v3938, 0.7978846
        %v3971 = vmul.f32 %v3939, 0.7978846
        %v3972 = vmul.f32 %v3940, 0.7978846
        %v3973 = vmul.f32 %v3941, 0.7978846
        %v3974 = vmul.f32 %v3942, 0.7978846
        %v3975 = vmul.f32 %v3943, 0.7978846
        %v3976 = vmul.f32 %v3944, 0.7978846
        %v3977 = vmul.f32 %v3945, 0.7978846
        %v3978 = vmul.f32 %v3946, 0.7978846
        %v3979 = vmul.f32 %v3947, 0.7978846
        %v3980 = vmul.f32 %v3948, 0.7978846
        %v3981 = vtanh.pop %v3949
        %v3982 = vtanh.pop %v3950
        %v3983 = vtanh.pop %v3951
        %v3984 = vtanh.pop %v3952
        %v3985 = vtanh.pop %v3953
        %v3986 = vtanh.pop %v3954
        %v3987 = vtanh.pop %v3955
        %v3988 = vtanh.pop %v3956
        %v3989 = vtanh.pop %v3957
        %v3990 = vtanh.pop %v3958
        %v3991 = vtanh.pop %v3959
        %v3992 = vtanh.pop %v3960
        %v3993 = vtanh.pop %v3961
        %v3994 = vtanh.pop %v3962
        %v3995 = vtanh.pop %v3963
        %v3996 = vtanh.pop %v3964
        %v3997 = vtanh.pop %v3965
        %v3998 = vtanh.pop %v3966
        %v3999 = vtanh.pop %v3967
        %v4000 = vtanh.pop %v3968
        %v4001 = vtanh.pop %v3969
        %v4002 = vtanh.pop %v3970
        %v4003 = vtanh.pop %v3971
        %v4004 = vtanh.pop %v3972
        %v4005 = vtanh.pop %v3973
        %v4006 = vtanh.pop %v3974
        %v4007 = vtanh.pop %v3975
        %v4008 = vtanh.pop %v3976
        %v4009 = vtanh.pop %v3977
        %v4010 = vtanh.pop %v3978
        %v4011 = vtanh.pop %v3979
        %v4012 = vtanh.pop %v3980
        %v4013 = vadd.f32 %v3981, 1.0
        %v4014 = vadd.f32 %v3982, 1.0
        %v4015 = vadd.f32 %v3983, 1.0
        %v4016 = vadd.f32 %v3984, 1.0
        %v4017 = vadd.f32 %v3985, 1.0
        %v4018 = vadd.f32 %v3986, 1.0
        %v4019 = vadd.f32 %v3987, 1.0
        %v4020 = vadd.f32 %v3988, 1.0
        %v4021 = vadd.f32 %v3989, 1.0
        %v4022 = vadd.f32 %v3990, 1.0
        %v4023 = vadd.f32 %v3991, 1.0
        %v4024 = vadd.f32 %v3992, 1.0
        %v4025 = vadd.f32 %v3993, 1.0
        %v4026 = vadd.f32 %v3994, 1.0
        %v4027 = vadd.f32 %v3995, 1.0
        %v4028 = vadd.f32 %v3996, 1.0
        %v4029 = vadd.f32 %v3997, 1.0
        %v4030 = vadd.f32 %v3998, 1.0
        %v4031 = vadd.f32 %v3999, 1.0
        %v4032 = vadd.f32 %v4000, 1.0
        %v4033 = vadd.f32 %v4001, 1.0
        %v4034 = vadd.f32 %v4002, 1.0
        %v4035 = vadd.f32 %v4003, 1.0
        %v4036 = vadd.f32 %v4004, 1.0
        %v4037 = vadd.f32 %v4005, 1.0
        %v4038 = vadd.f32 %v4006, 1.0
        %v4039 = vadd.f32 %v4007, 1.0
        %v4040 = vadd.f32 %v4008, 1.0
        %v4041 = vadd.f32 %v4009, 1.0
        %v4042 = vadd.f32 %v4010, 1.0
        %v4043 = vadd.f32 %v4011, 1.0
        %v4044 = vadd.f32 %v4012, 1.0
        %v4045 = vmul.f32 %v3789, %v4013
        %v4046 = vmul.f32 %v3790, %v4014
        %v4047 = vmul.f32 %v3791, %v4015
        %v4048 = vmul.f32 %v3792, %v4016
        %v4049 = vmul.f32 %v3793, %v4017
        %v4050 = vmul.f32 %v3794, %v4018
        %v4051 = vmul.f32 %v3795, %v4019
        %v4052 = vmul.f32 %v3796, %v4020
        %v4053 = vmul.f32 %v3797, %v4021
        %v4054 = vmul.f32 %v3798, %v4022
        %v4055 = vmul.f32 %v3799, %v4023
        %v4056 = vmul.f32 %v3800, %v4024
        %v4057 = vmul.f32 %v3801, %v4025
        %v4058 = vmul.f32 %v3802, %v4026
        %v4059 = vmul.f32 %v3803, %v4027
        %v4060 = vmul.f32 %v3804, %v4028
        %v4061 = vmul.f32 %v3805, %v4029
        %v4062 = vmul.f32 %v3806, %v4030
        %v4063 = vmul.f32 %v3807, %v4031
        %v4064 = vmul.f32 %v3808, %v4032
        %v4065 = vmul.f32 %v3809, %v4033
        %v4066 = vmul.f32 %v3810, %v4034
        %v4067 = vmul.f32 %v3811, %v4035
        %v4068 = vmul.f32 %v3812, %v4036
        %v4069 = vmul.f32 %v3813, %v4037
        %v4070 = vmul.f32 %v3814, %v4038
        %v4071 = vmul.f32 %v3815, %v4039
        %v4072 = vmul.f32 %v3816, %v4040
        %v4073 = vmul.f32 %v3817, %v4041
        %v4074 = vmul.f32 %v3818, %v4042
        %v4075 = vmul.f32 %v3819, %v4043
        %v4076 = vmul.f32 %v3820, %v4044
        %v4077 = vpack.c.bf16 %v4049, %v4045
        %v4078 = vpack.c.bf16 %v4050, %v4046
        %v4079 = vpack.c.bf16 %v4051, %v4047
        %v4080 = vpack.c.bf16 %v4052, %v4048
        %v4081 = vpack.c.bf16 %v4057, %v4053
        %v4082 = vpack.c.bf16 %v4058, %v4054
        %v4083 = vpack.c.bf16 %v4059, %v4055
        %v4084 = vpack.c.bf16 %v4060, %v4056
        %v4085 = vpack.c.bf16 %v4065, %v4061
        %v4086 = vpack.c.bf16 %v4066, %v4062
        %v4087 = vpack.c.bf16 %v4067, %v4063
        %v4088 = vpack.c.bf16 %v4068, %v4064
        %v4089 = vpack.c.bf16 %v4073, %v4069
        %v4090 = vpack.c.bf16 %v4074, %v4070
        %v4091 = vpack.c.bf16 %v4075, %v4071
        %v4092 = vpack.c.bf16 %v4076, %v4072
        %v4093 = vld [vmem:[#allocation8] sm:$0xf]
        %v4094 = vld [vmem:[#allocation8 + $0x4] sm:$0xf]
        %v4095 = vld [vmem:[#allocation8 + $0x8] sm:$0xf]
        %v4096 = vld [vmem:[#allocation8 + $0xc] sm:$0xf]
        %v4097 = vld [vmem:[#allocation8 + $0x10] sm:$0xf]
        %v4098 = vld [vmem:[#allocation8 + $0x14] sm:$0xf]
        %v4099 = vld [vmem:[#allocation8 + $0x18] sm:$0xf]
        %v4100 = vld [vmem:[#allocation8 + $0x1c] sm:$0xf]
        %v4101 = vld [vmem:[#allocation8 + $0x20] sm:$0xf]
        %v4102 = vld [vmem:[#allocation8 + $0x24] sm:$0xf]
        %v4103 = vld [vmem:[#allocation8 + $0x28] sm:$0xf]
        %v4104 = vld [vmem:[#allocation8 + $0x2c] sm:$0xf]
        %v4105 = vld [vmem:[#allocation8 + $0x30] sm:$0xf]
        %v4106 = vld [vmem:[#allocation8 + $0x34] sm:$0xf]
        %v4107 = vld [vmem:[#allocation8 + $0x38] sm:$0xf]
        %v4108 = vld [vmem:[#allocation8 + $0x3c] sm:$0xf]
        %v4109 = vld [vmem:[#allocation8 + $0x40] sm:$0xf]
        %v4110 = vld [vmem:[#allocation8 + $0x44] sm:$0xf]
        %v4111 = vld [vmem:[#allocation8 + $0x48] sm:$0xf]
        %v4112 = vld [vmem:[#allocation8 + $0x4c] sm:$0xf]
        %v4113 = vld [vmem:[#allocation8 + $0x50] sm:$0xf]
        %v4114 = vld [vmem:[#allocation8 + $0x54] sm:$0xf]
        %v4115 = vld [vmem:[#allocation8 + $0x58] sm:$0xf]
        %v4116 = vld [vmem:[#allocation8 + $0x5c] sm:$0xf]
        %v4117 = vld [vmem:[#allocation8 + $0x60] sm:$0xf]
        %v4118 = vld [vmem:[#allocation8 + $0x64] sm:$0xf]
        %v4119 = vld [vmem:[#allocation8 + $0x68] sm:$0xf]
        %v4120 = vld [vmem:[#allocation8 + $0x6c] sm:$0xf]
        %v4121 = vld [vmem:[#allocation8 + $0x70] sm:$0xf]
        %v4122 = vld [vmem:[#allocation8 + $0x74] sm:$0xf]
        %v4123 = vld [vmem:[#allocation8 + $0x78] sm:$0xf]
        %v4124 = vld [vmem:[#allocation8 + $0x7c] sm:$0xf]
        %v4125 = vld [vmem:[#allocation8 + $0x80] sm:$0xf]
        %v4126 = vld [vmem:[#allocation8 + $0x84] sm:$0xf]
        %v4127 = vld [vmem:[#allocation8 + $0x88] sm:$0xf]
        %v4128 = vld [vmem:[#allocation8 + $0x8c] sm:$0xf]
        %v4129 = vld [vmem:[#allocation8 + $0x90] sm:$0xf]
        %v4130 = vld [vmem:[#allocation8 + $0x94] sm:$0xf]
        %v4131 = vld [vmem:[#allocation8 + $0x98] sm:$0xf]
        %v4132 = vld [vmem:[#allocation8 + $0x9c] sm:$0xf]
        %v4133 = vld [vmem:[#allocation8 + $0xa0] sm:$0xf]
        %v4134 = vld [vmem:[#allocation8 + $0xa4] sm:$0xf]
        %v4135 = vld [vmem:[#allocation8 + $0xa8] sm:$0xf]
        %v4136 = vld [vmem:[#allocation8 + $0xac] sm:$0xf]
        %v4137 = vld [vmem:[#allocation8 + $0xb0] sm:$0xf]
        %v4138 = vld [vmem:[#allocation8 + $0xb4] sm:$0xf]
        %v4139 = vld [vmem:[#allocation8 + $0xb8] sm:$0xf]
        %v4140 = vld [vmem:[#allocation8 + $0xbc] sm:$0xf]
        %v4141 = vld [vmem:[#allocation8 + $0xc0] sm:$0xf]
        %v4142 = vld [vmem:[#allocation8 + $0xc4] sm:$0xf]
        %v4143 = vld [vmem:[#allocation8 + $0xc8] sm:$0xf]
        %v4144 = vld [vmem:[#allocation8 + $0xcc] sm:$0xf]
        %v4145 = vld [vmem:[#allocation8 + $0xd0] sm:$0xf]
        %v4146 = vld [vmem:[#allocation8 + $0xd4] sm:$0xf]
        %v4147 = vld [vmem:[#allocation8 + $0xd8] sm:$0xf]
        %v4148 = vld [vmem:[#allocation8 + $0xdc] sm:$0xf]
        %v4149 = vld [vmem:[#allocation8 + $0xe0] sm:$0xf]
        %v4150 = vld [vmem:[#allocation8 + $0xe4] sm:$0xf]
        %v4151 = vld [vmem:[#allocation8 + $0xe8] sm:$0xf]
        %v4152 = vld [vmem:[#allocation8 + $0xec] sm:$0xf]
        %v4153 = vld [vmem:[#allocation8 + $0xf0] sm:$0xf]
        %v4154 = vld [vmem:[#allocation8 + $0xf4] sm:$0xf]
        %v4155 = vld [vmem:[#allocation8 + $0xf8] sm:$0xf]
        %v4156 = vld [vmem:[#allocation8 + $0xfc] sm:$0xf]
        %v4157 = vld [vmem:[%s12] sm:$0x1]
        %v4159 = vlaneseq
        %v4160 = vshrl.u32 %v4159, 7
        %v4161 = vsub.s32 0, %v4160
        %v4162 = vrot.slane %v4157, %v4161
        %v4228 = vunpack.c.l.b16 %v4093
        %v4229 = vunpack.c.l.b16 %v4094
        %v4230 = vunpack.c.l.b16 %v4095
        %v4231 = vunpack.c.l.b16 %v4096
        %v4232 = vunpack.c.l.b16 %v4097
        %v4233 = vunpack.c.l.b16 %v4098
        %v4234 = vunpack.c.l.b16 %v4099
        %v4235 = vunpack.c.l.b16 %v4100
        %v4236 = vunpack.c.l.b16 %v4101
        %v4237 = vunpack.c.l.b16 %v4102
        %v4238 = vunpack.c.l.b16 %v4103
        %v4239 = vunpack.c.l.b16 %v4104
        %v4240 = vunpack.c.l.b16 %v4105
        %v4241 = vunpack.c.l.b16 %v4106
        %v4242 = vunpack.c.l.b16 %v4107
        %v4243 = vunpack.c.l.b16 %v4108
        %v4244 = vunpack.c.l.b16 %v4109
        %v4245 = vunpack.c.l.b16 %v4110
        %v4246 = vunpack.c.l.b16 %v4111
        %v4247 = vunpack.c.l.b16 %v4112
        %v4248 = vunpack.c.l.b16 %v4113
        %v4249 = vunpack.c.l.b16 %v4114
        %v4250 = vunpack.c.l.b16 %v4115
        %v4251 = vunpack.c.l.b16 %v4116
        %v4252 = vunpack.c.l.b16 %v4117
        %v4253 = vunpack.c.l.b16 %v4118
        %v4254 = vunpack.c.l.b16 %v4119
        %v4255 = vunpack.c.l.b16 %v4120
        %v4256 = vunpack.c.l.b16 %v4121
        %v4257 = vunpack.c.l.b16 %v4122
        %v4258 = vunpack.c.l.b16 %v4123
        %v4259 = vunpack.c.l.b16 %v4124
        %v4260 = vunpack.c.l.b16 %v4125
        %v4261 = vunpack.c.l.b16 %v4126
        %v4262 = vunpack.c.l.b16 %v4127
        %v4263 = vunpack.c.l.b16 %v4128
        %v4264 = vunpack.c.l.b16 %v4129
        %v4265 = vunpack.c.l.b16 %v4130
        %v4266 = vunpack.c.l.b16 %v4131
        %v4267 = vunpack.c.l.b16 %v4132
        %v4268 = vunpack.c.l.b16 %v4133
        %v4269 = vunpack.c.l.b16 %v4134
        %v4270 = vunpack.c.l.b16 %v4135
        %v4271 = vunpack.c.l.b16 %v4136
        %v4272 = vunpack.c.l.b16 %v4137
        %v4273 = vunpack.c.l.b16 %v4138
        %v4274 = vunpack.c.l.b16 %v4139
        %v4275 = vunpack.c.l.b16 %v4140
        %v4276 = vunpack.c.l.b16 %v4141
        %v4277 = vunpack.c.l.b16 %v4142
        %v4278 = vunpack.c.l.b16 %v4143
        %v4279 = vunpack.c.l.b16 %v4144
        %v4280 = vunpack.c.l.b16 %v4145
        %v4281 = vunpack.c.l.b16 %v4146
        %v4282 = vunpack.c.l.b16 %v4147
        %v4283 = vunpack.c.l.b16 %v4148
        %v4284 = vunpack.c.l.b16 %v4149
        %v4285 = vunpack.c.l.b16 %v4150
        %v4286 = vunpack.c.l.b16 %v4151
        %v4287 = vunpack.c.l.b16 %v4152
        %v4288 = vunpack.c.l.b16 %v4153
        %v4289 = vunpack.c.l.b16 %v4154
        %v4290 = vunpack.c.l.b16 %v4155
        %v4291 = vunpack.c.l.b16 %v4156
        %v4292 = vpack.c.b16 %v4229, %v4228
        %v4293 = vpack.c.b16 %v4231, %v4230
        %v4294 = vpack.c.b16 %v4233, %v4232
        %v4295 = vpack.c.b16 %v4235, %v4234
        %v4296 = vpack.c.b16 %v4237, %v4236
        %v4297 = vpack.c.b16 %v4239, %v4238
        %v4298 = vpack.c.b16 %v4241, %v4240
        %v4299 = vpack.c.b16 %v4243, %v4242
        %v4300 = vpack.c.b16 %v4245, %v4244
        %v4301 = vpack.c.b16 %v4247, %v4246
        %v4302 = vpack.c.b16 %v4249, %v4248
        %v4303 = vpack.c.b16 %v4251, %v4250
        %v4304 = vpack.c.b16 %v4253, %v4252
        %v4305 = vpack.c.b16 %v4255, %v4254
        %v4306 = vpack.c.b16 %v4257, %v4256
        %v4307 = vpack.c.b16 %v4259, %v4258
        %v4308 = vpack.c.b16 %v4261, %v4260
        %v4309 = vpack.c.b16 %v4263, %v4262
        %v4310 = vpack.c.b16 %v4265, %v4264
        %v4311 = vpack.c.b16 %v4267, %v4266
        %v4312 = vpack.c.b16 %v4269, %v4268
        %v4313 = vpack.c.b16 %v4271, %v4270
        %v4314 = vpack.c.b16 %v4273, %v4272
        %v4315 = vpack.c.b16 %v4275, %v4274
        %v4316 = vpack.c.b16 %v4277, %v4276
        %v4317 = vpack.c.b16 %v4279, %v4278
        %v4318 = vpack.c.b16 %v4281, %v4280
        %v4319 = vpack.c.b16 %v4283, %v4282
        %v4320 = vpack.c.b16 %v4285, %v4284
        %v4321 = vpack.c.b16 %v4287, %v4286
        %v4322 = vpack.c.b16 %v4289, %v4288
        %v4323 = vpack.c.b16 %v4291, %v4290
        %4356 = vmatprep.subr.bf16.mxu0 0
        %4357 = vmatpush1.bf16.msra.mxu0 %v4292
        %4358 = vmatprep.subr.bf16.mxu0 0
        %4359 = vmatpush1.bf16.msra.mxu0 %v4293
        %4360 = vmatprep.subr.bf16.mxu0 0
        %4361 = vmatpush1.bf16.msra.mxu0 %v4294
        %4362 = vmatprep.subr.bf16.mxu0 0
        %4363 = vmatpush1.bf16.msra.mxu0 %v4295
        %4364 = vmatprep.subr.bf16.mxu0 0
        %4365 = vmatpush1.bf16.msra.mxu0 %v4296
        %4366 = vmatprep.subr.bf16.mxu0 0
        %4367 = vmatpush1.bf16.msra.mxu0 %v4297
        %4368 = vmatprep.subr.bf16.mxu0 0
        %4369 = vmatpush1.bf16.msra.mxu0 %v4298
        %4370 = vmatprep.subr.bf16.mxu0 0
        %4371 = vmatpush1.bf16.msra.mxu0 %v4299
        %4372 = vmatprep.subr.bf16.mxu0 0
        %4373 = vmatpush1.bf16.msra.mxu0 %v4300
        %4374 = vmatprep.subr.bf16.mxu0 0
        %4375 = vmatpush1.bf16.msra.mxu0 %v4301
        %4376 = vmatprep.subr.bf16.mxu0 0
        %4377 = vmatpush1.bf16.msra.mxu0 %v4302
        %4378 = vmatprep.subr.bf16.mxu0 0
        %4379 = vmatpush1.bf16.msra.mxu0 %v4303
        %4380 = vmatprep.subr.bf16.mxu0 0
        %4381 = vmatpush1.bf16.msra.mxu0 %v4304
        %4382 = vmatprep.subr.bf16.mxu0 0
        %4383 = vmatpush1.bf16.msra.mxu0 %v4305
        %4384 = vmatprep.subr.bf16.mxu0 0
        %4385 = vmatpush1.bf16.msra.mxu0 %v4306
        %4386 = vmatprep.subr.bf16.mxu0 0
        %4387 = vmatpush1.bf16.msra.mxu0 %v4307
        %4388 = vmatprep.mubr.bf16.mxu0 %v4078
        %4389 = vmatmul.mubr.bf16.gmra.mrb[0].mxu0 %v4077
        %v4390 = vpop.f32.mrb[0].mxu0
        %v4391 = vadd.f32 %v4162, %v4390
        %v4392 = vpop.f32.mrb[0].mxu0
        %v4393 = vpop.f32.mrb[0].mxu0
        %v4394 = vadd.f32 %v4162, %v4393
        %v4395 = vpop.f32.mrb[0].mxu0
        %4396 = vmatprep.mubr.bf16.mxu0 %v4082
        %4397 = vmatmul.mubr.bf16.gmra.mrb[0].mxu0 %v4081
        %v4398 = vpop.f32.mrb[0].mxu0
        %v4399 = vadd.f32 %v4162, %v4398
        %v4400 = vpop.f32.mrb[0].mxu0
        %v4401 = vpop.f32.mrb[0].mxu0
        %v4402 = vadd.f32 %v4162, %v4401
        %v4403 = vpop.f32.mrb[0].mxu0
        %4404 = vmatprep.mubr.bf16.mxu0 %v4086
        %4405 = vmatmul.mubr.bf16.gmra.mrb[0].mxu0 %v4085
        %v4406 = vpop.f32.mrb[0].mxu0
        %v4407 = vadd.f32 %v4162, %v4406
        %v4408 = vpop.f32.mrb[0].mxu0
        %v4409 = vpop.f32.mrb[0].mxu0
        %v4410 = vadd.f32 %v4162, %v4409
        %v4411 = vpop.f32.mrb[0].mxu0
        %4412 = vmatprep.mubr.bf16.mxu0 %v4090
        %4413 = vmatmul.mubr.bf16.gmra.mrb[0].mxu0 %v4089
        %v4414 = vpop.f32.mrb[0].mxu0
        %v4415 = vadd.f32 %v4162, %v4414
        %v4416 = vpop.f32.mrb[0].mxu0
        %v4417 = vpop.f32.mrb[0].mxu0
        %v4418 = vadd.f32 %v4162, %v4417
        %v4419 = vpop.f32.mrb[0].mxu0
        %4420 = vdwg.mxu0
        %4421 = vmatprep.subr.bf16.mxu0 0
        %4422 = vmatpush1.bf16.msra.mxu0 %v4308
        %4423 = vmatprep.subr.bf16.mxu0 0
        %4424 = vmatpush1.bf16.msra.mxu0 %v4309
        %4425 = vmatprep.subr.bf16.mxu0 0
        %4426 = vmatpush1.bf16.msra.mxu0 %v4310
        %4427 = vmatprep.subr.bf16.mxu0 0
        %4428 = vmatpush1.bf16.msra.mxu0 %v4311
        %4429 = vmatprep.subr.bf16.mxu0 0
        %4430 = vmatpush1.bf16.msra.mxu0 %v4312
        %4431 = vmatprep.subr.bf16.mxu0 0
        %4432 = vmatpush1.bf16.msra.mxu0 %v4313
        %4433 = vmatprep.subr.bf16.mxu0 0
        %4434 = vmatpush1.bf16.msra.mxu0 %v4314
        %4435 = vmatprep.subr.bf16.mxu0 0
        %4436 = vmatpush1.bf16.msra.mxu0 %v4315
        %4437 = vmatprep.subr.bf16.mxu0 0
        %4438 = vmatpush1.bf16.msra.mxu0 %v4316
        %4439 = vmatprep.subr.bf16.mxu0 0
        %4440 = vmatpush1.bf16.msra.mxu0 %v4317
        %4441 = vmatprep.subr.bf16.mxu0 0
        %4442 = vmatpush1.bf16.msra.mxu0 %v4318
        %4443 = vmatprep.subr.bf16.mxu0 0
        %4444 = vmatpush1.bf16.msra.mxu0 %v4319
        %4445 = vmatprep.subr.bf16.mxu0 0
        %4446 = vmatpush1.bf16.msra.mxu0 %v4320
        %4447 = vmatprep.subr.bf16.mxu0 0
        %4448 = vmatpush1.bf16.msra.mxu0 %v4321
        %4449 = vmatprep.subr.bf16.mxu0 0
        %4450 = vmatpush1.bf16.msra.mxu0 %v4322
        %4451 = vmatprep.subr.bf16.mxu0 0
        %4452 = vmatpush1.bf16.msra.mxu0 %v4323
        %4453 = vmatprep.mubr.bf16.mxu0 %v4080
        %4454 = vmatmul.mubr.bf16.gmra.mrb[0].mxu0 %v4079
        %v4455 = vpop.f32.mrb[0].mxu0
        %v4456 = vadd.f32 %v4391, %v4455
        %v4457 = vpop.f32.mrb[0].mxu0
        %v4458 = vpop.f32.mrb[0].mxu0
        %v4459 = vadd.f32 %v4394, %v4458
        %v4460 = vpop.f32.mrb[0].mxu0
        %4461 = vmatprep.mubr.bf16.mxu0 %v4084
        %4462 = vmatmul.mubr.bf16.gmra.mrb[0].mxu0 %v4083
        %v4463 = vpop.f32.mrb[0].mxu0
        %v4464 = vadd.f32 %v4399, %v4463
        %v4465 = vpop.f32.mrb[0].mxu0
        %v4466 = vpop.f32.mrb[0].mxu0
        %v4467 = vadd.f32 %v4402, %v4466
        %v4468 = vpop.f32.mrb[0].mxu0
        %4469 = vmatprep.mubr.bf16.mxu0 %v4088
        %4470 = vmatmul.mubr.bf16.gmra.mrb[0].mxu0 %v4087
        %v4471 = vpop.f32.mrb[0].mxu0
        %v4472 = vadd.f32 %v4407, %v4471
        %v4473 = vpop.f32.mrb[0].mxu0
        %v4474 = vpop.f32.mrb[0].mxu0
        %v4475 = vadd.f32 %v4410, %v4474
        %v4476 = vpop.f32.mrb[0].mxu0
        %4477 = vmatprep.mubr.bf16.mxu0 %v4092
        %4478 = vmatmul.mubr.bf16.gmra.mrb[0].mxu0 %v4091
        %v4479 = vpop.f32.mrb[0].mxu0
        %v4480 = vadd.f32 %v4415, %v4479
        %v4481 = vpop.f32.mrb[0].mxu0
        %v4482 = vpop.f32.mrb[0].mxu0
        %v4483 = vadd.f32 %v4418, %v4482
        %v4484 = vpop.f32.mrb[0].mxu0
        %4485 = vdwg.mxu0
        %v4486 = vadd.f32 %v3291, %v4456
        %v4487 = vadd.f32 %v3292, %v4459
        %v4488 = vadd.f32 %v3293, %v4464
        %v4489 = vadd.f32 %v3294, %v4467
        %v4490 = vadd.f32 %v3295, %v4472
        %v4491 = vadd.f32 %v3296, %v4475
        %v4492 = vadd.f32 %v3297, %v4480
        %v4493 = vadd.f32 %v3298, %v4483
        %4494 = vst [vmem:[%s492] sm:$0xff] %v4486
        %4495 = vst [vmem:[%s492 + $0x8] sm:$0xff] %v4487
        %4496 = vst [vmem:[%s492 + $0x10] sm:$0xff] %v4488
        %4497 = vst [vmem:[%s492 + $0x18] sm:$0xff] %v4489
        %4498 = vst [vmem:[%s492 + $0x20] sm:$0xff] %v4490
        %4499 = vst [vmem:[%s492 + $0x28] sm:$0xff] %v4491
        %4500 = vst [vmem:[%s492 + $0x30] sm:$0xff] %v4492
        %4501 = vst [vmem:[%s492 + $0x38] sm:$0xff] %v4493
        %s4502 = sand.u32 %s316, 1
        %s4503 = scalar_lea.sflag [#allocation4], %s4502
        %s4504 = sand.u32 %s316, 1
        %s4505 = smul.addr %s4504, 64
        %s4506 = scalar_lea.vmem [#allocation10], %s4505
        // Predicated region
        $region89: #{transformer_block.1} parent=71 // pred_check
          %p4507 = pneg %p326
        $region90: #{transformer_block.1} parent=71 // pred_check_branch
          %4509 = sbr.rel (%p4507) target = $region92
        $region91: #{transformer_block.1} parent=71 // pred_region
          %s4511 = ssub.s32 1024, 1024
          %4512 = vsyncadd %s4503, %s4511
          %s4513 = smul.addr %s30, 8
          %s4514 = smul.addr %s4513, 128
          %s4515 = scalar_lea.hbm %s13, %s4514
          %s4516 = sshll.u32 %s4506, 4
          %s4517 = int_to_ptr.vmem [resolvable:$true] %s4516
          %4522 = dma.vmem_to_hbm [thread:$0]  %s4517, 1024, %s4515, %s4503, 128, 128, 8
        $region92: #{transformer_block.1} parent=71 // pred_fallthru
          _
      $region72: #{transformer_block.1} parent=5 // pred_fallthru
        _
      %p4523 = scmp.le.s32.totalorder 2, %s25
      // Predicated region
      $region93: #{transformer_block.1} parent=5 // pred_check
        %p4524 = pneg %p4523
      $region94: #{transformer_block.1} parent=5 // pred_check_branch
        %4526 = sbr.rel (%p4524) target = $region96
      $region95: #{transformer_block.1} parent=5 // pred_region
        %s4527 = ssub.s32 %s25, 2
        // Predicated region
        $region97: #{transformer_block.1} parent=95 // pred_check
          %p4528 = pneg %p332
        $region98: #{transformer_block.1} parent=95 // pred_check_branch
          %4530 = sbr.rel (%p4528) target = $region100
        $region99: #{transformer_block.1} parent=95 // pred_region
          %s4531 = sand.u32 %s317, 1
          %s4532 = scalar_lea.sflag [#allocation4], %s4531
          %s4533 = sand.u32 %s317, 1
          %s4534 = smul.addr %s4533, 64
          %s4535 = scalar_lea.vmem [#allocation10], %s4534
          %4536 = dma.done %s4532, 1024
        $region100: #{transformer_block.1} parent=95 // pred_fallthru
          _
      $region96: #{transformer_block.1} parent=5 // pred_fallthru
        _
    $region6: #{transformer_block.1} parent=1 // loop_footer
      %s29 = sadd.s32 1, %s25
    $region7: #{transformer_block.1} parent=1 // loop_footer_branch
      %24 = sbr.rel target = $region3
    $region8: #{transformer_block.1} parent=1 // loop_exit
      _
    %4537 = vsyncpa [#allocation3], 1
    %s4538 = scalar_lea.sflag [#allocation3], 1
    %4539 = vsyncpa %s4538, 1
    %4540 = vsyncpa [#allocation6], 1
    %4541 = vsyncpa [#allocation9], 1
    %4542 = vsyncpa [#allocation4], 1
    %s4543 = scalar_lea.sflag [#allocation4], 1
    %4544 = vsyncpa %s4543, 1

</llo_original>
